<compile_context>
chip_gen: v7x
topology: tpu7x:2x2x1
jax: 0.10.0
libtpu: 0.0.40
codegen_flags: <defaults>
</compile_context>

<pallas_src>
import functools

import jax
import jax.numpy as jnp
import numpy as np
from jax import lax
from jax.experimental import pallas as pl
from jax.experimental.pallas import tpu as pltpu

NUM_ROUTING_ITERATIONS = 3
_EPS = 1e-12  # zero-norm capsules return 0 instead of torch's NaN/inf (deliberate)
_VMEM_LIMIT = 48 * 1024 * 1024  # explicit scoped-VMEM budget; safe on v5e/v6e/v7x


def _round_up(x, m):
    return (x + m - 1) // m * m


def _group_reduce_matrix(dp, group):
    """[dp, dp//group] 0/1 matrix: column g sums the g-th contiguous block of `group`
    columns; dot(x, gr) == per-capsule-group sum on the MXU."""
    g = np.arange(dp) // group
    return g[:, None] == np.arange(dp // group)[None, :]


def _group_ones(n, group):
    """[n, n] 0/1 matrix: 1 iff both columns fall in the same contiguous group of
    `group`; dot(x, gg) == per-group sum broadcast back to every group member."""
    g = np.arange(n) // group
    return g[:, None] == g[None, :]


# -----------------------------------------------------------------------------
# Routing branch ("digit capsules")
# -----------------------------------------------------------------------------
def _routing_kernel(x_ref, w_ref, gr_ref, ex_ref, out_ref, *, num_iterations):
    # x_ref : [R, Bt, Cin] f32  (route-node-major so the priors matmul is batched over R)
    # w_ref : [R, Cin, Dp] f32  (Dp = NCp*Cout, column d = n*Cout + o, zero-padded capsules)
    # gr_ref: [Dp, NCp]    f32  group-reduce (sum each capsule's Cout block)
    # ex_ref: [NCp, Dp]    f32  group-expand (broadcast a per-capsule scalar over its block)
    # out_ref: [Bt, Dp]    f32  squashed capsule outputs for this batch tile
    x = x_ref[...]
    w = w_ref[...]
    gr = gr_ref[...]
    ex = ex_ref[...]
    R, Bt, _ = x.shape
    Dp = w.shape[-1]
    NCp = gr.shape[-1]

    # priors[r,b,d] = sum_c x[r,b,c] * w[r,c,d]  -- MXU batched matmul (batch dim = r);
    # the [B,R,Cin,D] broadcast intermediate of the old VPU path is never materialised.
    priors = jnp.einsum("rbc,rcd->rbd", x, w,
                        preferred_element_type=jnp.float32)            # [R, Bt, Dp]

    def squash(s):                                                      # s: [Bt, Dp]
        sq_c = jnp.dot(s * s, gr, preferred_element_type=jnp.float32)  # [Bt, NCp] = ||s_n||^2
        sq = jnp.dot(sq_c, ex, preferred_element_type=jnp.float32)     # broadcast back to Dp
        scale = sq * pl.reciprocal(1.0 + sq, approx=True)              # EUP slot
        return s * scale * lax.rsqrt(sq + _EPS)

    # ---- iteration 0: logits are identically zero -> probs == 1/R; softmax skipped.
    v = squash(jnp.sum(priors, axis=0) * (1.0 / R))                     # [Bt, Dp]

    # Compact logits: one value per (route node, batch row, capsule) -- see invariant.
    logits = jnp.zeros((R, Bt, NCp), jnp.float32)
    for _ in range(1, num_iterations):
        # delta_logits[r,b,n] = sum_o priors[r,b,n*Cout+o] * v[b,n*Cout+o]  (MXU group-reduce)
        pv = (priors * v[None]).reshape(R * Bt, Dp)
        logits = logits + jnp.dot(
            pv, gr, preferred_element_type=jnp.float32).reshape(R, Bt, NCp)

        # softmax over route nodes (leading axis) on the compact logits
        m = jnp.max(logits, axis=0, keepdims=True)
        e = jnp.exp(logits - m)
        probs = e * pl.reciprocal(jnp.sum(e, axis=0, keepdims=True), approx=True)

        # expand per-capsule probs back to the Dp layout (MXU) and reduce over route nodes
        probs_exp = jnp.dot(probs.reshape(R * Bt, NCp), ex,
                            preferred_element_type=jnp.float32).reshape(R, Bt, Dp)
        v = squash(jnp.sum(probs_exp * priors, axis=0))

    out_ref[...] = v


@functools.partial(jax.jit, static_argnames=("num_iterations",))
def digit_capsules_forward(x, route_weights, num_iterations=NUM_ROUTING_ITERATIONS):
    # x: [B, R, Cin]; route_weights: [NC, R, Cin, Cout] -> [NC, B, 1, 1, Cout]
    NC, R, Cin, Cout = route_weights.shape
    B = x.shape[0]

    # lane-dense capsule padding: D = NC*Cout (160) -> Dp multiple of 128 and of Cout (256)
    Dp = _round_up(NC * Cout, int(np.lcm(Cout, 128)))
    NCp = Dp // Cout
    Bt = 8                                    # one sublane group of batch rows per grid step
    Bp = _round_up(B, Bt)

    # weights [R, Cin, Dp] with d = n*Cout + o; padded capsules (n >= NC) are zero.
    wr = jnp.transpose(route_weights, (1, 2, 0, 3)).astype(jnp.float32)   # [R, Cin, NC, Cout]
    wr = jnp.pad(wr, ((0, 0), (0, 0), (0, NCp - NC), (0, 0))).reshape(R, Cin, Dp)

    # inputs route-node-major so the in-kernel priors matmul is batched over R
    xr = jnp.pad(jnp.transpose(x, (1, 0, 2)).astype(jnp.float32),
                 ((0, 0), (0, Bp - B), (0, 0)))                            # [R, Bp, Cin]

    # host-precomputed 0/1 group reduce/expand matrices.  Kept f32 here because the
    # operands they multiply (s*s, priors*v) stay f32 for routing accuracy; bf16 would
    # add converts without cutting MXU passes.
    gr = jnp.asarray(_group_reduce_matrix(Dp, Cout), jnp.float32)          # [Dp, NCp]
    ex = jnp.asarray(_group_reduce_matrix(Dp, Cout).T, jnp.float32)        # [NCp, Dp]

    out = pl.pallas_call(
        functools.partial(_routing_kernel, num_iterations=num_iterations),
        out_shape=jax.ShapeDtypeStruct((Bp, Dp), jnp.float32),
        grid=(Bp // Bt,),
        in_specs=[
            pl.BlockSpec((R, Bt, Cin), lambda i: (0, i, 0)),   # batch tile
            pl.BlockSpec((R, Cin, Dp), lambda i: (0, 0, 0)),   # weights resident across grid
            pl.BlockSpec((Dp, NCp), lambda i: (0, 0)),
            pl.BlockSpec((NCp, Dp), lambda i: (0, 0)),
        ],
        out_specs=pl.BlockSpec((Bt, Dp), lambda i: (i, 0)),    # lane-dense (Dp % 128 == 0)
        compiler_params=pltpu.CompilerParams(
            dimension_semantics=("parallel",),                 # megacore sharding on v7x
            vmem_limit_bytes=_VMEM_LIMIT),
    )(xr, wr, gr, ex)

    # strip padding, back to torch's output layout [NC, B, 1, 1, Cout]
    out = out[:B, :NC * Cout].reshape(B, NC, Cout)
    return jnp.transpose(out, (1, 0, 2)).reshape(NC, B, 1, 1, Cout)


# -----------------------------------------------------------------------------
# Conv branch ("primary capsules") -- tiled matmul + fused bias + squash
# -----------------------------------------------------------------------------
def _primary_caps_kernel(p_ref, w_ref, b_ref, gg_ref, out_ref, acc_ref):
    # grid = (M tiles ["parallel"], K reduction ["arbitrary", last])
    # p_ref: [TM, TK] bf16 patches ; w_ref: [TK, Np] bf16 (column = cout*NC + n)
    # b_ref: [1, Np] f32 ; gg_ref: [Np, Np] bf16 (NC-capsule group-ones)
    # out_ref: [TM, Np] f32 ; acc_ref: [TM, Np] f32 accumulator scratch
    kk = pl.program_id(1)

    @pl.when(kk == 0)
    def _():
        acc_ref[...] = jnp.zeros_like(acc_ref)

    acc_ref[...] += jnp.dot(p_ref[...], w_ref[...],
                            preferred_element_type=jnp.float32)

    @pl.when(kk == pl.num_programs(1) - 1)
    def _():
        y = acc_ref[...] + b_ref[...]
        # per-(row, cout) squared norm over the NC capsules: single-pass bf16 MXU group-sum
        sq = jnp.dot((y * y).astype(jnp.bfloat16), gg_ref[...],
                     preferred_element_type=jnp.float32)
        scale = sq * pl.reciprocal(1.0 + sq, approx=True)
        out_ref[...] = y * scale * lax.rsqrt(sq + _EPS)


@functools.partial(jax.jit, static_argnames=("stride",))
def primary_capsules_forward(x, conv_w, conv_b, stride):
    # x NCHW: [B, Cin, H, W]; conv_w: [NC, Cout, Cin, k, k]; conv_b: [NC, Cout]
    NC, Cout, Cin, ksz, _ = conv_w.shape
    B, _, H, W = x.shape
    Ho = (H - ksz) // stride + 1
    Wo = (W - ksz) // stride + 1
    HW = Ho * Wo
    K = Cin * ksz * ksz
    M = B * HW
    N = Cout * NC

    # --- im2col (plain-JAX glue fused under jit); feature order (cin, ki, kj) = OIHW flatten.
    # TODO(synk): at production shapes (k=9) im2col inflates HBM traffic ~k^2; gather the
    # patches in-kernel (memory_space=pl.ANY + make_async_copy) or use lax.conv for the
    # matmul and keep only the fused bias+squash in Pallas (worst on v5e bandwidth).
    cols = []
    for i in range(ksz):
        for j in range(ksz):
            cols.append(x[:, :, i: i + stride * (Ho - 1) + 1: stride,
                              j: j + stride * (Wo - 1) + 1: stride])    # [B, Cin, Ho, Wo]
    P = jnp.stack(cols, axis=2).reshape(B, K, HW).transpose(0, 2, 1).reshape(M, K)

    # fuse all NC capsules into one matmul N dimension: column = cout*NC + n
    Wall = conv_w.reshape(NC, Cout, K).transpose(2, 1, 0).reshape(K, N)
    bias = conv_b.T.reshape(1, N)

    # tiling: 256-row M tiles (v6e/v7x MXU height; shrink for toy shapes), K-reduction
    # tiles <= 512, N kept whole and padded to a lane multiple for unmasked stores.
    TM = 256 if M >= 256 else _round_up(M, 8)
    TK = min(512, _round_up(K, 128))
    Mp, Kp, Np = _round_up(M, TM), _round_up(K, TK), _round_up(N, 128)

    P = jnp.pad(P, ((0, Mp - M), (0, Kp - K))).astype(jnp.bfloat16)      # bf16 MXU operands
    Wall = jnp.pad(Wall, ((0, Kp - K), (0, Np - N))).astype(jnp.bfloat16)
    bias = jnp.pad(bias, ((0, 0), (0, Np - N))).astype(jnp.float32)
    gg = jnp.asarray(_group_ones(Np, NC), jnp.bfloat16)                  # 0/1 exact in bf16

    out = pl.pallas_call(
        _primary_caps_kernel,
        out_shape=jax.ShapeDtypeStruct((Mp, Np), jnp.float32),
        grid=(Mp // TM, Kp // TK),                                       # reduction axis last
        in_specs=[
            pl.BlockSpec((TM, TK), lambda i, kk: (i, kk)),
            pl.BlockSpec((TK, Np), lambda i, kk: (kk, 0)),
            pl.BlockSpec((1, Np), lambda i, kk: (0, 0)),
            pl.BlockSpec((Np, Np), lambda i, kk: (0, 0)),
        ],
        out_specs=pl.BlockSpec((TM, Np), lambda i, kk: (i, 0)),
        scratch_shapes=[pltpu.VMEM((TM, Np), jnp.float32)],              # f32 accumulator
        compiler_params=pltpu.CompilerParams(
            dimension_semantics=("parallel", "arbitrary"),
            vmem_limit_bytes=_VMEM_LIMIT),
    )(P, Wall, bias, gg)

    out = out[:M, :N]                                                    # strip padding
    # [(b,ho,wo), (cout,n)] -> [B, Cout*Ho*Wo, NC]  (torch .view(B,-1) node order)
    # TODO(synk): if this feeds the routing layer, consume the [M, N] layout directly via
    # the routing kernel's index_map instead of materialising this lane-sparse transpose.
    return (out.reshape(B, Ho, Wo, Cout, NC)
               .transpose(0, 3, 1, 2, 4)
               .reshape(B, Cout * HW, NC))


# -----------------------------------------------------------------------------
# Pure-JAX references (correctness check)
# -----------------------------------------------------------------------------
def _squash_ref(t, axis=-1):
    sq = jnp.sum(t * t, axis=axis, keepdims=True)
    return (sq / (1.0 + sq)) * t / jnp.sqrt(sq)


def routing_ref(x, W, num_iter):
    priors = jnp.einsum("brc,nrco->nbro", x, W,
                        precision=lax.Precision.HIGHEST)[:, :, :, None, :]
    logits = jnp.zeros_like(priors)
    outputs = None
    for i in range(num_iter):
        probs = jax.nn.softmax(logits, axis=2)
        outputs = _squash_ref(jnp.sum(probs * priors, axis=2, keepdims=True))
        if i != num_iter - 1:
            logits = logits + jnp.sum(priors * outputs, axis=-1, keepdims=True)
    return outputs


def primary_ref(x, conv_w, conv_b, stride):
    NC = conv_w.shape[0]
    outs = []
    for n in range(NC):
        y = lax.conv_general_dilated(
            x, conv_w[n], window_strides=(stride, stride), padding="VALID",
            dimension_numbers=("NCHW", "OIHW", "NCHW"),
            precision=lax.Precision.HIGHEST,
        ) + conv_b[n][None, :, None, None]
        outs.append(y.reshape(x.shape[0], -1, 1))
    return _squash_ref(jnp.concatenate(outs, axis=-1))


# -----------------------------------------------------------------------------
if __name__ == "__main__":
    key = jax.random.PRNGKey(0)
    k1, k2, k3, k4, k5 = jax.random.split(key, 5)

    # --- routing branch (digit capsules) ---
    NC, R, Cin, Cout, B = 10, 32, 8, 16, 2
    x_route = jax.random.normal(k1, (B, R, Cin), jnp.float32)
    route_weights = jax.random.normal(k2, (NC, R, Cin, Cout), jnp.float32)
    out_route = jax.block_until_ready(digit_capsules_forward(x_route, route_weights))
    ref_route = routing_ref(x_route, route_weights, NUM_ROUTING_ITERATIONS)
    # f32 MXU matmuls + approx EUP reciprocals (softmax denom, 1/(1+|s|^2)) -> relaxed tol
    np.testing.assert_allclose(np.asarray(out_route), np.asarray(ref_route),
                               rtol=2e-2, atol=2e-2)

    # --- conv branch (primary capsules) ---
    NC2, Cin2, Cout2, ksz, stride = 8, 4, 8, 5, 2
    B2, H, W = 2, 16, 16
    x_conv = jax.random.normal(k3, (B2, Cin2, H, W), jnp.float32)
    conv_w = 0.1 * jax.random.normal(k4, (NC2, Cout2, Cin2, ksz, ksz), jnp.float32)
    conv_b = 0.1 * jax.random.normal(k5, (NC2, Cout2), jnp.float32)
    out_conv = jax.block_until_ready(
        primary_capsules_forward(x_conv, conv_w, conv_b, stride=stride))
    ref_conv = primary_ref(x_conv, conv_w, conv_b, stride)
    # bf16 MXU operands + bf16 group-sum norm + approx reciprocal vs. f32 reference
    np.testing.assert_allclose(np.asarray(out_conv), np.asarray(ref_conv),
                               rtol=4e-2, atol=4e-2)

    print("KERNEL_OK")
</pallas_src>

<mosaic_0001>
module attributes {stable_mosaic.version = 11 : i64} {
  func.func @_routing_kernel(%arg0: i32, %arg1: memref<32x8x8xf32, #tpu.memory_space<vmem>>, %arg2: memref<32x8x256xf32, #tpu.memory_space<vmem>>, %arg3: memref<256x16xf32, #tpu.memory_space<vmem>>, %arg4: memref<16x256xf32, #tpu.memory_space<vmem>>, %arg5: memref<8x256xf32, #tpu.memory_space<vmem>>) attributes {dimension_semantics = [#tpu.dimension_semantics<parallel>], iteration_bounds = array<i64: 1>, scalar_prefetch = 0 : i64, scratch_operands = 0 : i64, tpu.core_type = #tpu.core_type<tc>, window_params = [{transform_indices = @transform_0, window_bounds = array<i64: 32, 8, 8>}, {pipeline_mode = #tpu.pipeline_mode<synchronous>, transform_indices = @transform_1, window_bounds = array<i64: 32, 8, 256>}, {pipeline_mode = #tpu.pipeline_mode<synchronous>, transform_indices = @transform_2, window_bounds = array<i64: 256, 16>}, {pipeline_mode = #tpu.pipeline_mode<synchronous>, transform_indices = @transform_3, window_bounds = array<i64: 16, 256>}, {transform_indices = @transform_4, window_bounds = array<i64: 8, 256>}]} {
    %c0 = arith.constant 0 : index
    %c0_0 = arith.constant 0 : index
    %c0_1 = arith.constant 0 : index
    %0 = vector.load %arg1[%c0, %c0_0, %c0_1] : memref<32x8x8xf32, #tpu.memory_space<vmem>>, vector<32x8x8xf32>
    %c0_2 = arith.constant 0 : index
    %c0_3 = arith.constant 0 : index
    %c0_4 = arith.constant 0 : index
    %1 = vector.load %arg2[%c0_2, %c0_3, %c0_4] : memref<32x8x256xf32, #tpu.memory_space<vmem>>, vector<32x8x256xf32>
    %c0_5 = arith.constant 0 : index
    %c0_6 = arith.constant 0 : index
    %2 = vector.load %arg3[%c0_5, %c0_6] : memref<256x16xf32, #tpu.memory_space<vmem>>, vector<256x16xf32>
    %c0_7 = arith.constant 0 : index
    %c0_8 = arith.constant 0 : index
    %3 = vector.load %arg4[%c0_7, %c0_8] : memref<16x256xf32, #tpu.memory_space<vmem>>, vector<16x256xf32>
    "tpu.trace_start"() <{level = 10 : i32, message = "rbc,rcd->rbd"}> : () -> ()
    %cst = arith.constant dense<0.000000e+00> : vector<32x8x256xf32>
    %4 = tpu.matmul %0, %1, %cst {dimension_numbers = #tpu.dot_dimension_numbers<[2], [1], [1], [2], [0, 0, 0, 1, 1, 2], [0], [0]>} : vector<32x8x8xf32>, vector<32x8x256xf32>, vector<32x8x256xf32> -> vector<32x8x256xf32>
    "tpu.trace_stop"() : () -> ()
    %cst_9 = arith.constant dense<0.000000e+00> : vector<8x256xf32>
    %5 = vector.multi_reduction <add>, %4, %cst_9 [0] : vector<32x8x256xf32> to vector<8x256xf32>
    %cst_10 = arith.constant 3.125000e-02 : f32
    %6 = vector.broadcast %cst_10 : f32 to vector<8x256xf32>
    %7 = arith.mulf %5, %6 : vector<8x256xf32>
    %8 = arith.mulf %7, %7 : vector<8x256xf32>
    %cst_11 = arith.constant dense<0.000000e+00> : vector<8x16xf32>
    %9 = tpu.matmul %8, %2, %cst_11 {dimension_numbers = #tpu.dot_dimension_numbers<[1], [0], [0], [1], [0, 0, 1, 1], [], []>} : vector<8x256xf32>, vector<256x16xf32>, vector<8x16xf32> -> vector<8x16xf32>
    %cst_12 = arith.constant dense<0.000000e+00> : vector<8x256xf32>
    %10 = tpu.matmul %9, %3, %cst_12 {dimension_numbers = #tpu.dot_dimension_numbers<[1], [0], [0], [1], [0, 0, 1, 1], [], []>} : vector<8x16xf32>, vector<16x256xf32>, vector<8x256xf32> -> vector<8x256xf32>
    %cst_13 = arith.constant 1.000000e+00 : f32
    %11 = vector.broadcast %cst_13 : f32 to vector<8x256xf32>
    %12 = arith.addf %11, %10 : vector<8x256xf32>
    %13 = tpu.reciprocal %12 {approx = true} : vector<8x256xf32> -> vector<8x256xf32>
    %14 = arith.mulf %10, %13 : vector<8x256xf32>
    %15 = arith.mulf %7, %14 : vector<8x256xf32>
    %cst_14 = arith.constant 9.99999996E-13 : f32
    %16 = vector.broadcast %cst_14 : f32 to vector<8x256xf32>
    %17 = arith.addf %10, %16 : vector<8x256xf32>
    %18 = math.rsqrt %17 : vector<8x256xf32>
    %19 = arith.mulf %15, %18 : vector<8x256xf32>
    %cst_15 = arith.constant 0.000000e+00 : f32
    %20 = vector.broadcast %cst_15 : f32 to vector<32x8x16xf32>
    %21 = vector.shape_cast %19 : vector<8x256xf32> to vector<1x8x256xf32>
    %22 = vector.broadcast %21 : vector<1x8x256xf32> to vector<32x8x256xf32>
    %23 = arith.mulf %4, %22 : vector<32x8x256xf32>
    %24 = vector.shape_cast %23 : vector<32x8x256xf32> to vector<256x256xf32>
    %cst_16 = arith.constant dense<0.000000e+00> : vector<256x16xf32>
    %25 = tpu.matmul %24, %2, %cst_16 {dimension_numbers = #tpu.dot_dimension_numbers<[1], [0], [0], [1], [0, 0, 1, 1], [], []>} : vector<256x256xf32>, vector<256x16xf32>, vector<256x16xf32> -> vector<256x16xf32>
    %26 = vector.shape_cast %25 : vector<256x16xf32> to vector<32x8x16xf32>
    %27 = arith.addf %20, %26 : vector<32x8x16xf32>
    %cst_17 = arith.constant dense<0xFF800000> : vector<8x16xf32>
    %28 = vector.multi_reduction <maximumf>, %27, %cst_17 [0] : vector<32x8x16xf32> to vector<8x16xf32>
    %29 = vector.shape_cast %28 : vector<8x16xf32> to vector<1x8x16xf32>
    %30 = vector.broadcast %29 : vector<1x8x16xf32> to vector<32x8x16xf32>
    %31 = arith.subf %27, %30 : vector<32x8x16xf32>
    %32 = math.exp %31 : vector<32x8x16xf32>
    %cst_18 = arith.constant dense<0.000000e+00> : vector<8x16xf32>
    %33 = vector.multi_reduction <add>, %32, %cst_18 [0] : vector<32x8x16xf32> to vector<8x16xf32>
    %34 = vector.shape_cast %33 : vector<8x16xf32> to vector<1x8x16xf32>
    %35 = tpu.reciprocal %34 {approx = true} : vector<1x8x16xf32> -> vector<1x8x16xf32>
    %36 = vector.broadcast %35 : vector<1x8x16xf32> to vector<32x8x16xf32>
    %37 = arith.mulf %32, %36 : vector<32x8x16xf32>
    %38 = vector.shape_cast %37 : vector<32x8x16xf32> to vector<256x16xf32>
    %cst_19 = arith.constant dense<0.000000e+00> : vector<256x256xf32>
    %39 = tpu.matmul %38, %3, %cst_19 {dimension_numbers = #tpu.dot_dimension_numbers<[1], [0], [0], [1], [0, 0, 1, 1], [], []>} : vector<256x16xf32>, vector<16x256xf32>, vector<256x256xf32> -> vector<256x256xf32>
    %40 = vector.shape_cast %39 : vector<256x256xf32> to vector<32x8x256xf32>
    %41 = arith.mulf %40, %4 : vector<32x8x256xf32>
    %cst_20 = arith.constant dense<0.000000e+00> : vector<8x256xf32>
    %42 = vector.multi_reduction <add>, %41, %cst_20 [0] : vector<32x8x256xf32> to vector<8x256xf32>
    %43 = arith.mulf %42, %42 : vector<8x256xf32>
    %cst_21 = arith.constant dense<0.000000e+00> : vector<8x16xf32>
    %44 = tpu.matmul %43, %2, %cst_21 {dimension_numbers = #tpu.dot_dimension_numbers<[1], [0], [0], [1], [0, 0, 1, 1], [], []>} : vector<8x256xf32>, vector<256x16xf32>, vector<8x16xf32> -> vector<8x16xf32>
    %cst_22 = arith.constant dense<0.000000e+00> : vector<8x256xf32>
    %45 = tpu.matmul %44, %3, %cst_22 {dimension_numbers = #tpu.dot_dimension_numbers<[1], [0], [0], [1], [0, 0, 1, 1], [], []>} : vector<8x16xf32>, vector<16x256xf32>, vector<8x256xf32> -> vector<8x256xf32>
    %cst_23 = arith.constant 1.000000e+00 : f32
    %46 = vector.broadcast %cst_23 : f32 to vector<8x256xf32>
    %47 = arith.addf %46, %45 : vector<8x256xf32>
    %48 = tpu.reciprocal %47 {approx = true} : vector<8x256xf32> -> vector<8x256xf32>
    %49 = arith.mulf %45, %48 : vector<8x256xf32>
    %50 = arith.mulf %42, %49 : vector<8x256xf32>
    %cst_24 = arith.constant 9.99999996E-13 : f32
    %51 = vector.broadcast %cst_24 : f32 to vector<8x256xf32>
    %52 = arith.addf %45, %51 : vector<8x256xf32>
    %53 = math.rsqrt %52 : vector<8x256xf32>
    %54 = arith.mulf %50, %53 : vector<8x256xf32>
    %55 = vector.shape_cast %54 : vector<8x256xf32> to vector<1x8x256xf32>
    %56 = vector.broadcast %55 : vector<1x8x256xf32> to vector<32x8x256xf32>
    %57 = arith.mulf %4, %56 : vector<32x8x256xf32>
    %58 = vector.shape_cast %57 : vector<32x8x256xf32> to vector<256x256xf32>
    %cst_25 = arith.constant dense<0.000000e+00> : vector<256x16xf32>
    %59 = tpu.matmul %58, %2, %cst_25 {dimension_numbers = #tpu.dot_dimension_numbers<[1], [0], [0], [1], [0, 0, 1, 1], [], []>} : vector<256x256xf32>, vector<256x16xf32>, vector<256x16xf32> -> vector<256x16xf32>
    %60 = vector.shape_cast %59 : vector<256x16xf32> to vector<32x8x16xf32>
    %61 = arith.addf %27, %60 : vector<32x8x16xf32>
    %cst_26 = arith.constant dense<0xFF800000> : vector<8x16xf32>
    %62 = vector.multi_reduction <maximumf>, %61, %cst_26 [0] : vector<32x8x16xf32> to vector<8x16xf32>
    %63 = vector.shape_cast %62 : vector<8x16xf32> to vector<1x8x16xf32>
    %64 = vector.broadcast %63 : vector<1x8x16xf32> to vector<32x8x16xf32>
    %65 = arith.subf %61, %64 : vector<32x8x16xf32>
    %66 = math.exp %65 : vector<32x8x16xf32>
    %cst_27 = arith.constant dense<0.000000e+00> : vector<8x16xf32>
    %67 = vector.multi_reduction <add>, %66, %cst_27 [0] : vector<32x8x16xf32> to vector<8x16xf32>
    %68 = vector.shape_cast %67 : vector<8x16xf32> to vector<1x8x16xf32>
    %69 = tpu.reciprocal %68 {approx = true} : vector<1x8x16xf32> -> vector<1x8x16xf32>
    %70 = vector.broadcast %69 : vector<1x8x16xf32> to vector<32x8x16xf32>
    %71 = arith.mulf %66, %70 : vector<32x8x16xf32>
    %72 = vector.shape_cast %71 : vector<32x8x16xf32> to vector<256x16xf32>
    %cst_28 = arith.constant dense<0.000000e+00> : vector<256x256xf32>
    %73 = tpu.matmul %72, %3, %cst_28 {dimension_numbers = #tpu.dot_dimension_numbers<[1], [0], [0], [1], [0, 0, 1, 1], [], []>} : vector<256x16xf32>, vector<16x256xf32>, vector<256x256xf32> -> vector<256x256xf32>
    %74 = vector.shape_cast %73 : vector<256x256xf32> to vector<32x8x256xf32>
    %75 = arith.mulf %74, %4 : vector<32x8x256xf32>
    %cst_29 = arith.constant dense<0.000000e+00> : vector<8x256xf32>
    %76 = vector.multi_reduction <add>, %75, %cst_29 [0] : vector<32x8x256xf32> to vector<8x256xf32>
    %77 = arith.mulf %76, %76 : vector<8x256xf32>
    %cst_30 = arith.constant dense<0.000000e+00> : vector<8x16xf32>
    %78 = tpu.matmul %77, %2, %cst_30 {dimension_numbers = #tpu.dot_dimension_numbers<[1], [0], [0], [1], [0, 0, 1, 1], [], []>} : vector<8x256xf32>, vector<256x16xf32>, vector<8x16xf32> -> vector<8x16xf32>
    %cst_31 = arith.constant dense<0.000000e+00> : vector<8x256xf32>
    %79 = tpu.matmul %78, %3, %cst_31 {dimension_numbers = #tpu.dot_dimension_numbers<[1], [0], [0], [1], [0, 0, 1, 1], [], []>} : vector<8x16xf32>, vector<16x256xf32>, vector<8x256xf32> -> vector<8x256xf32>
    %cst_32 = arith.constant 1.000000e+00 : f32
    %80 = vector.broadcast %cst_32 : f32 to vector<8x256xf32>
    %81 = arith.addf %80, %79 : vector<8x256xf32>
    %82 = tpu.reciprocal %81 {approx = true} : vector<8x256xf32> -> vector<8x256xf32>
    %83 = arith.mulf %79, %82 : vector<8x256xf32>
    %84 = arith.mulf %76, %83 : vector<8x256xf32>
    %cst_33 = arith.constant 9.99999996E-13 : f32
    %85 = vector.broadcast %cst_33 : f32 to vector<8x256xf32>
    %86 = arith.addf %79, %85 : vector<8x256xf32>
    %87 = math.rsqrt %86 : vector<8x256xf32>
    %88 = arith.mulf %84, %87 : vector<8x256xf32>
    %c0_34 = arith.constant 0 : index
    %c0_35 = arith.constant 0 : index
    %89 = vector.load %arg5[%c0_34, %c0_35] : memref<8x256xf32, #tpu.memory_space<vmem>>, vector<8x256xf32>
    tpu.vector_store %arg5[%c0_34, %c0_35], %88 {strides = array<i32>} : memref<8x256xf32, #tpu.memory_space<vmem>>, vector<8x256xf32>,
    return
  }
  func.func @transform_0(%arg0: i32) -> (i32, i32, i32) {
    %c0_i32 = arith.constant 0 : i32
    %c0_i32_0 = arith.constant 0 : i32
    %c0_i32_1 = arith.constant 0 : i32
    return %c0_i32, %arg0, %c0_i32_0 : i32, i32, i32
  }
  func.func @transform_1(%arg0: i32) -> (i32, i32, i32) {
    %c0_i32 = arith.constant 0 : i32
    %c0_i32_0 = arith.constant 0 : i32
    %c0_i32_1 = arith.constant 0 : i32
    %c0_i32_2 = arith.constant 0 : i32
    return %c0_i32, %c0_i32_0, %c0_i32_1 : i32, i32, i32
  }
  func.func @transform_2(%arg0: i32) -> (i32, i32) {
    %c0_i32 = arith.constant 0 : i32
    %c0_i32_0 = arith.constant 0 : i32
    %c0_i32_1 = arith.constant 0 : i32
    return %c0_i32, %c0_i32_0 : i32, i32
  }
  func.func @transform_3(%arg0: i32) -> (i32, i32) {
    %c0_i32 = arith.constant 0 : i32
    %c0_i32_0 = arith.constant 0 : i32
    %c0_i32_1 = arith.constant 0 : i32
    return %c0_i32, %c0_i32_0 : i32, i32
  }
  func.func @transform_4(%arg0: i32) -> (i32, i32) {
    %c0_i32 = arith.constant 0 : i32
    %c0_i32_0 = arith.constant 0 : i32
    return %arg0, %c0_i32 : i32, i32
  }
}

</mosaic_0001>

<llo_original>
// kernel: digit_capsules_forward.1
$region0: #{digit_capsules_forward.1}
  #allocation0 [shape = 'u32[]', space=smem, size = 0x4, offset = 0x4, fixed_abs, tag = 'smem constant byte address 0x4 - core index']
  #allocation1 [shape = 'u32[144,128]{1,0:T(1,128)}', space=vmem, size = 0x12000, scoped, tag = 'internal scratch']
  %s0 = inlined_call_operand.vmem [shape: f32[32,8,8], index: 0, kind: input, shape index: {}]
  %s1 = inlined_call_operand.vmem [shape: f32[32,8,256], index: 1, kind: input, shape index: {}]
  %s2 = inlined_call_operand.vmem [shape: f32[256,16], index: 2, kind: input, shape index: {}]
  %s3 = inlined_call_operand.vmem [shape: f32[16,256], index: 3, kind: input, shape index: {}]
  %s4 = inlined_call_operand.vmem [shape: f32[8,256], index: 4, kind: output, shape index: {}]
  %s5 = sld [smem:[#allocation0]]
  $region26: #{digit_capsules_forward.1} parent=0
    _
  %s7 = ssub.s32 1, %s5
  %s8 = scalar_select 0, %s7, %s5
  // Predicated region
  $region2: #{digit_capsules_forward.1} parent=0 // pred_check
    _
  $region3: #{digit_capsules_forward.1} parent=0 // pred_check_branch
    %10 = sbr.rel (0) target = $region5
  $region4: #{digit_capsules_forward.1} parent=0 // pred_region
    _
  $region5: #{digit_capsules_forward.1} parent=0 // pred_fallthru
    _
  // Predicated region
  $region6: #{digit_capsules_forward.1} parent=0 // pred_check
    _
  $region7: #{digit_capsules_forward.1} parent=0 // pred_check_branch
    %12 = sbr.rel (0) target = $region9
  $region8: #{digit_capsules_forward.1} parent=0 // pred_region
    _
  $region9: #{digit_capsules_forward.1} parent=0 // pred_fallthru
    _
  // Predicated region
  $region10: #{digit_capsules_forward.1} parent=0 // pred_check
    _
  $region11: #{digit_capsules_forward.1} parent=0 // pred_check_branch
    %14 = sbr.rel (0) target = $region13
  $region12: #{digit_capsules_forward.1} parent=0 // pred_region
    _
  $region13: #{digit_capsules_forward.1} parent=0 // pred_fallthru
    _
  // Predicated region
  $region14: #{digit_capsules_forward.1} parent=0 // pred_check
    _
  $region15: #{digit_capsules_forward.1} parent=0 // pred_check_branch
    %16 = sbr.rel (0) target = $region17
  $region16: #{digit_capsules_forward.1} parent=0 // pred_region
    _
  $region17: #{digit_capsules_forward.1} parent=0 // pred_fallthru
    _
  %v17 = vld [vmem:[%s0] sm:$0xff]
  %v18 = vld [vmem:[%s0 + $0x8] sm:$0xff]
  %v19 = vld [vmem:[%s0 + $0x10] sm:$0xff]
  %v20 = vld [vmem:[%s0 + $0x18] sm:$0xff]
  %v21 = vld [vmem:[%s0 + $0x20] sm:$0xff]
  %v22 = vld [vmem:[%s0 + $0x28] sm:$0xff]
  %v23 = vld [vmem:[%s0 + $0x30] sm:$0xff]
  %v24 = vld [vmem:[%s0 + $0x38] sm:$0xff]
  %v25 = vld [vmem:[%s0 + $0x40] sm:$0xff]
  %v26 = vld [vmem:[%s0 + $0x48] sm:$0xff]
  %v27 = vld [vmem:[%s0 + $0x50] sm:$0xff]
  %v28 = vld [vmem:[%s0 + $0x58] sm:$0xff]
  %v29 = vld [vmem:[%s0 + $0x60] sm:$0xff]
  %v30 = vld [vmem:[%s0 + $0x68] sm:$0xff]
  %v31 = vld [vmem:[%s0 + $0x70] sm:$0xff]
  %v32 = vld [vmem:[%s0 + $0x78] sm:$0xff]
  %v33 = vld [vmem:[%s0 + $0x80] sm:$0xff]
  %v34 = vld [vmem:[%s0 + $0x88] sm:$0xff]
  %v35 = vld [vmem:[%s0 + $0x90] sm:$0xff]
  %v36 = vld [vmem:[%s0 + $0x98] sm:$0xff]
  %v37 = vld [vmem:[%s0 + $0xa0] sm:$0xff]
  %v38 = vld [vmem:[%s0 + $0xa8] sm:$0xff]
  %v39 = vld [vmem:[%s0 + $0xb0] sm:$0xff]
  %v40 = vld [vmem:[%s0 + $0xb8] sm:$0xff]
  %v41 = vld [vmem:[%s0 + $0xc0] sm:$0xff]
  %v42 = vld [vmem:[%s0 + $0xc8] sm:$0xff]
  %v43 = vld [vmem:[%s0 + $0xd0] sm:$0xff]
  %v44 = vld [vmem:[%s0 + $0xd8] sm:$0xff]
  %v45 = vld [vmem:[%s0 + $0xe0] sm:$0xff]
  %v46 = vld [vmem:[%s0 + $0xe8] sm:$0xff]
  %v47 = vld [vmem:[%s0 + $0xf0] sm:$0xff]
  %v48 = vld [vmem:[%s0 + $0xf8] sm:$0xff]
  %v49 = vld [vmem:[%s1] sm:$0xff]
  %v50 = vld [vmem:[%s1 + $0x8] sm:$0xff]
  %v51 = vld [vmem:[%s1 + $0x10] sm:$0xff]
  %v52 = vld [vmem:[%s1 + $0x18] sm:$0xff]
  %v53 = vld [vmem:[%s1 + $0x20] sm:$0xff]
  %v54 = vld [vmem:[%s1 + $0x28] sm:$0xff]
  %v55 = vld [vmem:[%s1 + $0x30] sm:$0xff]
  %v56 = vld [vmem:[%s1 + $0x38] sm:$0xff]
  %v57 = vld [vmem:[%s1 + $0x40] sm:$0xff]
  %v58 = vld [vmem:[%s1 + $0x48] sm:$0xff]
  %v59 = vld [vmem:[%s1 + $0x50] sm:$0xff]
  %v60 = vld [vmem:[%s1 + $0x58] sm:$0xff]
  %v61 = vld [vmem:[%s1 + $0x60] sm:$0xff]
  %v62 = vld [vmem:[%s1 + $0x68] sm:$0xff]
  %v63 = vld [vmem:[%s1 + $0x70] sm:$0xff]
  %v64 = vld [vmem:[%s1 + $0x78] sm:$0xff]
  %v65 = vld [vmem:[%s1 + $0x80] sm:$0xff]
  %v66 = vld [vmem:[%s1 + $0x88] sm:$0xff]
  %v67 = vld [vmem:[%s1 + $0x90] sm:$0xff]
  %v68 = vld [vmem:[%s1 + $0x98] sm:$0xff]
  %v69 = vld [vmem:[%s1 + $0xa0] sm:$0xff]
  %v70 = vld [vmem:[%s1 + $0xa8] sm:$0xff]
  %v71 = vld [vmem:[%s1 + $0xb0] sm:$0xff]
  %v72 = vld [vmem:[%s1 + $0xb8] sm:$0xff]
  %v73 = vld [vmem:[%s1 + $0xc0] sm:$0xff]
  %v74 = vld [vmem:[%s1 + $0xc8] sm:$0xff]
  %v75 = vld [vmem:[%s1 + $0xd0] sm:$0xff]
  %v76 = vld [vmem:[%s1 + $0xd8] sm:$0xff]
  %v77 = vld [vmem:[%s1 + $0xe0] sm:$0xff]
  %v78 = vld [vmem:[%s1 + $0xe8] sm:$0xff]
  %v79 = vld [vmem:[%s1 + $0xf0] sm:$0xff]
  %v80 = vld [vmem:[%s1 + $0xf8] sm:$0xff]
  %v81 = vld [vmem:[%s1 + $0x100] sm:$0xff]
  %v82 = vld [vmem:[%s1 + $0x108] sm:$0xff]
  %v83 = vld [vmem:[%s1 + $0x110] sm:$0xff]
  %v84 = vld [vmem:[%s1 + $0x118] sm:$0xff]
  %v85 = vld [vmem:[%s1 + $0x120] sm:$0xff]
  %v86 = vld [vmem:[%s1 + $0x128] sm:$0xff]
  %v87 = vld [vmem:[%s1 + $0x130] sm:$0xff]
  %v88 = vld [vmem:[%s1 + $0x138] sm:$0xff]
  %v89 = vld [vmem:[%s1 + $0x140] sm:$0xff]
  %v90 = vld [vmem:[%s1 + $0x148] sm:$0xff]
  %v91 = vld [vmem:[%s1 + $0x150] sm:$0xff]
  %v92 = vld [vmem:[%s1 + $0x158] sm:$0xff]
  %v93 = vld [vmem:[%s1 + $0x160] sm:$0xff]
  %v94 = vld [vmem:[%s1 + $0x168] sm:$0xff]
  %v95 = vld [vmem:[%s1 + $0x170] sm:$0xff]
  %v96 = vld [vmem:[%s1 + $0x178] sm:$0xff]
  %v97 = vld [vmem:[%s1 + $0x180] sm:$0xff]
  %v98 = vld [vmem:[%s1 + $0x188] sm:$0xff]
  %v99 = vld [vmem:[%s1 + $0x190] sm:$0xff]
  %v100 = vld [vmem:[%s1 + $0x198] sm:$0xff]
  %v101 = vld [vmem:[%s1 + $0x1a0] sm:$0xff]
  %v102 = vld [vmem:[%s1 + $0x1a8] sm:$0xff]
  %v103 = vld [vmem:[%s1 + $0x1b0] sm:$0xff]
  %v104 = vld [vmem:[%s1 + $0x1b8] sm:$0xff]
  %v105 = vld [vmem:[%s1 + $0x1c0] sm:$0xff]
  %v106 = vld [vmem:[%s1 + $0x1c8] sm:$0xff]
  %v107 = vld [vmem:[%s1 + $0x1d0] sm:$0xff]
  %v108 = vld [vmem:[%s1 + $0x1d8] sm:$0xff]
  %v109 = vld [vmem:[%s1 + $0x1e0] sm:$0xff]
  %v110 = vld [vmem:[%s1 + $0x1e8] sm:$0xff]
  %v111 = vld [vmem:[%s1 + $0x1f0] sm:$0xff]
  %v112 = vld [vmem:[%s1 + $0x1f8] sm:$0xff]
  %v113 = vld [vmem:[%s2] sm:$0xff]
  %v114 = vld [vmem:[%s2 + $0x8] sm:$0xff]
  %v115 = vld [vmem:[%s2 + $0x10] sm:$0xff]
  %v116 = vld [vmem:[%s2 + $0x18] sm:$0xff]
  %v117 = vld [vmem:[%s2 + $0x20] sm:$0xff]
  %v118 = vld [vmem:[%s2 + $0x28] sm:$0xff]
  %v119 = vld [vmem:[%s2 + $0x30] sm:$0xff]
  %v120 = vld [vmem:[%s2 + $0x38] sm:$0xff]
  %v121 = vld [vmem:[%s2 + $0x40] sm:$0xff]
  %v122 = vld [vmem:[%s2 + $0x48] sm:$0xff]
  %v123 = vld [vmem:[%s2 + $0x50] sm:$0xff]
  %v124 = vld [vmem:[%s2 + $0x58] sm:$0xff]
  %v125 = vld [vmem:[%s2 + $0x60] sm:$0xff]
  %v126 = vld [vmem:[%s2 + $0x68] sm:$0xff]
  %v127 = vld [vmem:[%s2 + $0x70] sm:$0xff]
  %v128 = vld [vmem:[%s2 + $0x78] sm:$0xff]
  %v129 = vld [vmem:[%s2 + $0x80] sm:$0xff]
  %v130 = vld [vmem:[%s2 + $0x88] sm:$0xff]
  %v131 = vld [vmem:[%s2 + $0x90] sm:$0xff]
  %v132 = vld [vmem:[%s2 + $0x98] sm:$0xff]
  %v133 = vld [vmem:[%s2 + $0xa0] sm:$0xff]
  %v134 = vld [vmem:[%s2 + $0xa8] sm:$0xff]
  %v135 = vld [vmem:[%s2 + $0xb0] sm:$0xff]
  %v136 = vld [vmem:[%s2 + $0xb8] sm:$0xff]
  %v137 = vld [vmem:[%s2 + $0xc0] sm:$0xff]
  %v138 = vld [vmem:[%s2 + $0xc8] sm:$0xff]
  %v139 = vld [vmem:[%s2 + $0xd0] sm:$0xff]
  %v140 = vld [vmem:[%s2 + $0xd8] sm:$0xff]
  %v141 = vld [vmem:[%s2 + $0xe0] sm:$0xff]
  %v142 = vld [vmem:[%s2 + $0xe8] sm:$0xff]
  %v143 = vld [vmem:[%s2 + $0xf0] sm:$0xff]
  %v144 = vld [vmem:[%s2 + $0xf8] sm:$0xff]
  %v145 = vld [vmem:[%s3] sm:$0xff]
  %v146 = vld [vmem:[%s3 + $0x8] sm:$0xff]
  %v147 = vld [vmem:[%s3 + $0x10] sm:$0xff]
  %v148 = vld [vmem:[%s3 + $0x18] sm:$0xff]
  %vm149 = vcmask 64512
  %v151 = vsel %vm149, %v17, 0
  %153 = vmatprep.subr.mxu0 %v50
  %154 = vmatpush1.msra.mxu0 %v49
  %155 = vmatprep.subr.mxu0 0.0
  %156 = vmatpush1.msra.mxu0 0.0
  %157 = vmatprep.subr.mxu0 0.0
  %158 = vmatpush1.msra.mxu0 0.0
  %159 = vmatprep.subr.mxu0 0.0
  %160 = vmatpush1.msra.mxu0 0.0
  %161 = vmatprep.subr.mxu0 0.0
  %162 = vmatpush1.msra.mxu0 0.0
  %163 = vmatprep.subr.mxu0 0.0
  %164 = vmatpush1.msra.mxu0 0.0
  %165 = vmatprep.subr.mxu0 0.0
  %166 = vmatpush1.msra.mxu0 0.0
  %167 = vmatprep.subr.mxu0 0.0
  %168 = vmatpush1.msra.mxu0 0.0
  %169 = vmatprep.subr.mxu0 0.0
  %170 = vmatpush1.msra.mxu0 0.0
  %171 = vmatprep.subr.mxu0 0.0
  %172 = vmatpush1.msra.mxu0 0.0
  %173 = vmatprep.subr.mxu0 0.0
  %174 = vmatpush1.msra.mxu0 0.0
  %175 = vmatprep.subr.mxu0 0.0
  %176 = vmatpush1.msra.mxu0 0.0
  %177 = vmatprep.subr.mxu0 0.0
  %178 = vmatpush1.msra.mxu0 0.0
  %179 = vmatprep.subr.mxu0 0.0
  %180 = vmatpush1.msra.mxu0 0.0
  %181 = vmatprep.subr.mxu0 0.0
  %182 = vmatpush1.msra.mxu0 0.0
  %183 = vmatprep.subr.mxu0 0.0
  %184 = vmatpush1.msra.mxu0 0.0
  %185 = vmatprep.subr.mxu0 0.0
  %186 = vmatpush1.msra.mxu0 0.0
  %187 = vmatprep.subr.mxu0 0.0
  %188 = vmatpush1.msra.mxu0 0.0
  %189 = vmatprep.subr.mxu0 0.0
  %190 = vmatpush1.msra.mxu0 0.0
  %191 = vmatprep.subr.mxu0 0.0
  %192 = vmatpush1.msra.mxu0 0.0
  %193 = vmatprep.subr.mxu0 0.0
  %194 = vmatpush1.msra.mxu0 0.0
  %195 = vmatprep.subr.mxu0 0.0
  %196 = vmatpush1.msra.mxu0 0.0
  %197 = vmatprep.subr.mxu0 0.0
  %198 = vmatpush1.msra.mxu0 0.0
  %199 = vmatprep.subr.mxu0 0.0
  %200 = vmatpush1.msra.mxu0 0.0
  %201 = vmatprep.subr.mxu0 0.0
  %202 = vmatpush1.msra.mxu0 0.0
  %203 = vmatprep.subr.mxu0 0.0
  %204 = vmatpush1.msra.mxu0 0.0
  %205 = vmatprep.subr.mxu0 0.0
  %206 = vmatpush1.msra.mxu0 0.0
  %207 = vmatprep.subr.mxu0 0.0
  %208 = vmatpush1.msra.mxu0 0.0
  %209 = vmatprep.subr.mxu0 0.0
  %210 = vmatpush1.msra.mxu0 0.0
  %211 = vmatprep.subr.mxu0 0.0
  %212 = vmatpush1.msra.mxu0 0.0
  %213 = vmatprep.subr.mxu0 0.0
  %214 = vmatpush1.msra.mxu0 0.0
  %215 = vmatprep.subr.mxu0 0.0
  %216 = vmatpush1.msra.mxu0 0.0
  %217 = vmatprep.mubr.f32.mxu0 0.0
  %218 = vmatmul.mubr.f32.gmra.mrb[0].mxu0 %v151
  %v219 = vpop.f32.mrb[0].mxu0
  %v220 = vadd.f32 0.0, %v219
  %v221 = vpop.f32.mrb[0].mxu0
  %v222 = vadd.f32 0.0, %v221
  %223 = vdwg.mxu0
  %v225 = vsel %vm149, %v18, 0
  %227 = vmatprep.subr.mxu0 %v52
  %228 = vmatpush1.msra.mxu0 %v51
  %229 = vmatprep.subr.mxu0 0.0
  %230 = vmatpush1.msra.mxu0 0.0
  %231 = vmatprep.subr.mxu0 0.0
  %232 = vmatpush1.msra.mxu0 0.0
  %233 = vmatprep.subr.mxu0 0.0
  %234 = vmatpush1.msra.mxu0 0.0
  %235 = vmatprep.subr.mxu0 0.0
  %236 = vmatpush1.msra.mxu0 0.0
  %237 = vmatprep.subr.mxu0 0.0
  %238 = vmatpush1.msra.mxu0 0.0
  %239 = vmatprep.subr.mxu0 0.0
  %240 = vmatpush1.msra.mxu0 0.0
  %241 = vmatprep.subr.mxu0 0.0
  %242 = vmatpush1.msra.mxu0 0.0
  %243 = vmatprep.subr.mxu0 0.0
  %244 = vmatpush1.msra.mxu0 0.0
  %245 = vmatprep.subr.mxu0 0.0
  %246 = vmatpush1.msra.mxu0 0.0
  %247 = vmatprep.subr.mxu0 0.0
  %248 = vmatpush1.msra.mxu0 0.0
  %249 = vmatprep.subr.mxu0 0.0
  %250 = vmatpush1.msra.mxu0 0.0
  %251 = vmatprep.subr.mxu0 0.0
  %252 = vmatpush1.msra.mxu0 0.0
  %253 = vmatprep.subr.mxu0 0.0
  %254 = vmatpush1.msra.mxu0 0.0
  %255 = vmatprep.subr.mxu0 0.0
  %256 = vmatpush1.msra.mxu0 0.0
  %257 = vmatprep.subr.mxu0 0.0
  %258 = vmatpush1.msra.mxu0 0.0
  %259 = vmatprep.subr.mxu0 0.0
  %260 = vmatpush1.msra.mxu0 0.0
  %261 = vmatprep.subr.mxu0 0.0
  %262 = vmatpush1.msra.mxu0 0.0
  %263 = vmatprep.subr.mxu0 0.0
  %264 = vmatpush1.msra.mxu0 0.0
  %265 = vmatprep.subr.mxu0 0.0
  %266 = vmatpush1.msra.mxu0 0.0
  %267 = vmatprep.subr.mxu0 0.0
  %268 = vmatpush1.msra.mxu0 0.0
  %269 = vmatprep.subr.mxu0 0.0
  %270 = vmatpush1.msra.mxu0 0.0
  %271 = vmatprep.subr.mxu0 0.0
  %272 = vmatpush1.msra.mxu0 0.0
  %273 = vmatprep.subr.mxu0 0.0
  %274 = vmatpush1.msra.mxu0 0.0
  %275 = vmatprep.subr.mxu0 0.0
  %276 = vmatpush1.msra.mxu0 0.0
  %277 = vmatprep.subr.mxu0 0.0
  %278 = vmatpush1.msra.mxu0 0.0
  %279 = vmatprep.subr.mxu0 0.0
  %280 = vmatpush1.msra.mxu0 0.0
  %281 = vmatprep.subr.mxu0 0.0
  %282 = vmatpush1.msra.mxu0 0.0
  %283 = vmatprep.subr.mxu0 0.0
  %284 = vmatpush1.msra.mxu0 0.0
  %285 = vmatprep.subr.mxu0 0.0
  %286 = vmatpush1.msra.mxu0 0.0
  %287 = vmatprep.subr.mxu0 0.0
  %288 = vmatpush1.msra.mxu0 0.0
  %289 = vmatprep.subr.mxu0 0.0
  %290 = vmatpush1.msra.mxu0 0.0
  %291 = vmatprep.mubr.f32.mxu0 0.0
  %292 = vmatmul.mubr.f32.gmra.mrb[0].mxu0 %v225
  %v293 = vpop.f32.mrb[0].mxu0
  %v294 = vadd.f32 0.0, %v293
  %v295 = vpop.f32.mrb[0].mxu0
  %v296 = vadd.f32 0.0, %v295
  %297 = vdwg.mxu0
  %v299 = vsel %vm149, %v19, 0
  %301 = vmatprep.subr.mxu0 %v54
  %302 = vmatpush1.msra.mxu0 %v53
  %303 = vmatprep.subr.mxu0 0.0
  %304 = vmatpush1.msra.mxu0 0.0
  %305 = vmatprep.subr.mxu0 0.0
  %306 = vmatpush1.msra.mxu0 0.0
  %307 = vmatprep.subr.mxu0 0.0
  %308 = vmatpush1.msra.mxu0 0.0
  %309 = vmatprep.subr.mxu0 0.0
  %310 = vmatpush1.msra.mxu0 0.0
  %311 = vmatprep.subr.mxu0 0.0
  %312 = vmatpush1.msra.mxu0 0.0
  %313 = vmatprep.subr.mxu0 0.0
  %314 = vmatpush1.msra.mxu0 0.0
  %315 = vmatprep.subr.mxu0 0.0
  %316 = vmatpush1.msra.mxu0 0.0
  %317 = vmatprep.subr.mxu0 0.0
  %318 = vmatpush1.msra.mxu0 0.0
  %319 = vmatprep.subr.mxu0 0.0
  %320 = vmatpush1.msra.mxu0 0.0
  %321 = vmatprep.subr.mxu0 0.0
  %322 = vmatpush1.msra.mxu0 0.0
  %323 = vmatprep.subr.mxu0 0.0
  %324 = vmatpush1.msra.mxu0 0.0
  %325 = vmatprep.subr.mxu0 0.0
  %326 = vmatpush1.msra.mxu0 0.0
  %327 = vmatprep.subr.mxu0 0.0
  %328 = vmatpush1.msra.mxu0 0.0
  %329 = vmatprep.subr.mxu0 0.0
  %330 = vmatpush1.msra.mxu0 0.0
  %331 = vmatprep.subr.mxu0 0.0
  %332 = vmatpush1.msra.mxu0 0.0
  %333 = vmatprep.subr.mxu0 0.0
  %334 = vmatpush1.msra.mxu0 0.0
  %335 = vmatprep.subr.mxu0 0.0
  %336 = vmatpush1.msra.mxu0 0.0
  %337 = vmatprep.subr.mxu0 0.0
  %338 = vmatpush1.msra.mxu0 0.0
  %339 = vmatprep.subr.mxu0 0.0
  %340 = vmatpush1.msra.mxu0 0.0
  %341 = vmatprep.subr.mxu0 0.0
  %342 = vmatpush1.msra.mxu0 0.0
  %343 = vmatprep.subr.mxu0 0.0
  %344 = vmatpush1.msra.mxu0 0.0
  %345 = vmatprep.subr.mxu0 0.0
  %346 = vmatpush1.msra.mxu0 0.0
  %347 = vmatprep.subr.mxu0 0.0
  %348 = vmatpush1.msra.mxu0 0.0
  %349 = vmatprep.subr.mxu0 0.0
  %350 = vmatpush1.msra.mxu0 0.0
  %351 = vmatprep.subr.mxu0 0.0
  %352 = vmatpush1.msra.mxu0 0.0
  %353 = vmatprep.subr.mxu0 0.0
  %354 = vmatpush1.msra.mxu0 0.0
  %355 = vmatprep.subr.mxu0 0.0
  %356 = vmatpush1.msra.mxu0 0.0
  %357 = vmatprep.subr.mxu0 0.0
  %358 = vmatpush1.msra.mxu0 0.0
  %359 = vmatprep.subr.mxu0 0.0
  %360 = vmatpush1.msra.mxu0 0.0
  %361 = vmatprep.subr.mxu0 0.0
  %362 = vmatpush1.msra.mxu0 0.0
  %363 = vmatprep.subr.mxu0 0.0
  %364 = vmatpush1.msra.mxu0 0.0
  %365 = vmatprep.mubr.f32.mxu0 0.0
  %366 = vmatmul.mubr.f32.gmra.mrb[0].mxu0 %v299
  %v367 = vpop.f32.mrb[0].mxu0
  %v368 = vadd.f32 0.0, %v367
  %v369 = vpop.f32.mrb[0].mxu0
  %v370 = vadd.f32 0.0, %v369
  %371 = vdwg.mxu0
  %v373 = vsel %vm149, %v20, 0
  %375 = vmatprep.subr.mxu0 %v56
  %376 = vmatpush1.msra.mxu0 %v55
  %377 = vmatprep.subr.mxu0 0.0
  %378 = vmatpush1.msra.mxu0 0.0
  %379 = vmatprep.subr.mxu0 0.0
  %380 = vmatpush1.msra.mxu0 0.0
  %381 = vmatprep.subr.mxu0 0.0
  %382 = vmatpush1.msra.mxu0 0.0
  %383 = vmatprep.subr.mxu0 0.0
  %384 = vmatpush1.msra.mxu0 0.0
  %385 = vmatprep.subr.mxu0 0.0
  %386 = vmatpush1.msra.mxu0 0.0
  %387 = vmatprep.subr.mxu0 0.0
  %388 = vmatpush1.msra.mxu0 0.0
  %389 = vmatprep.subr.mxu0 0.0
  %390 = vmatpush1.msra.mxu0 0.0
  %391 = vmatprep.subr.mxu0 0.0
  %392 = vmatpush1.msra.mxu0 0.0
  %393 = vmatprep.subr.mxu0 0.0
  %394 = vmatpush1.msra.mxu0 0.0
  %395 = vmatprep.subr.mxu0 0.0
  %396 = vmatpush1.msra.mxu0 0.0
  %397 = vmatprep.subr.mxu0 0.0
  %398 = vmatpush1.msra.mxu0 0.0
  %399 = vmatprep.subr.mxu0 0.0
  %400 = vmatpush1.msra.mxu0 0.0
  %401 = vmatprep.subr.mxu0 0.0
  %402 = vmatpush1.msra.mxu0 0.0
  %403 = vmatprep.subr.mxu0 0.0
  %404 = vmatpush1.msra.mxu0 0.0
  %405 = vmatprep.subr.mxu0 0.0
  %406 = vmatpush1.msra.mxu0 0.0
  %407 = vmatprep.subr.mxu0 0.0
  %408 = vmatpush1.msra.mxu0 0.0
  %409 = vmatprep.subr.mxu0 0.0
  %410 = vmatpush1.msra.mxu0 0.0
  %411 = vmatprep.subr.mxu0 0.0
  %412 = vmatpush1.msra.mxu0 0.0
  %413 = vmatprep.subr.mxu0 0.0
  %414 = vmatpush1.msra.mxu0 0.0
  %415 = vmatprep.subr.mxu0 0.0
  %416 = vmatpush1.msra.mxu0 0.0
  %417 = vmatprep.subr.mxu0 0.0
  %418 = vmatpush1.msra.mxu0 0.0
  %419 = vmatprep.subr.mxu0 0.0
  %420 = vmatpush1.msra.mxu0 0.0
  %421 = vmatprep.subr.mxu0 0.0
  %422 = vmatpush1.msra.mxu0 0.0
  %423 = vmatprep.subr.mxu0 0.0
  %424 = vmatpush1.msra.mxu0 0.0
  %425 = vmatprep.subr.mxu0 0.0
  %426 = vmatpush1.msra.mxu0 0.0
  %427 = vmatprep.subr.mxu0 0.0
  %428 = vmatpush1.msra.mxu0 0.0
  %429 = vmatprep.subr.mxu0 0.0
  %430 = vmatpush1.msra.mxu0 0.0
  %431 = vmatprep.subr.mxu0 0.0
  %432 = vmatpush1.msra.mxu0 0.0
  %433 = vmatprep.subr.mxu0 0.0
  %434 = vmatpush1.msra.mxu0 0.0
  %435 = vmatprep.subr.mxu0 0.0
  %436 = vmatpush1.msra.mxu0 0.0
  %437 = vmatprep.subr.mxu0 0.0
  %438 = vmatpush1.msra.mxu0 0.0
  %439 = vmatprep.mubr.f32.mxu0 0.0
  %440 = vmatmul.mubr.f32.gmra.mrb[0].mxu0 %v373
  %v441 = vpop.f32.mrb[0].mxu0
  %v442 = vadd.f32 0.0, %v441
  %v443 = vpop.f32.mrb[0].mxu0
  %v444 = vadd.f32 0.0, %v443
  %445 = vdwg.mxu0
  %v447 = vsel %vm149, %v21, 0
  %449 = vmatprep.subr.mxu0 %v58
  %450 = vmatpush1.msra.mxu0 %v57
  %451 = vmatprep.subr.mxu0 0.0
  %452 = vmatpush1.msra.mxu0 0.0
  %453 = vmatprep.subr.mxu0 0.0
  %454 = vmatpush1.msra.mxu0 0.0
  %455 = vmatprep.subr.mxu0 0.0
  %456 = vmatpush1.msra.mxu0 0.0
  %457 = vmatprep.subr.mxu0 0.0
  %458 = vmatpush1.msra.mxu0 0.0
  %459 = vmatprep.subr.mxu0 0.0
  %460 = vmatpush1.msra.mxu0 0.0
  %461 = vmatprep.subr.mxu0 0.0
  %462 = vmatpush1.msra.mxu0 0.0
  %463 = vmatprep.subr.mxu0 0.0
  %464 = vmatpush1.msra.mxu0 0.0
  %465 = vmatprep.subr.mxu0 0.0
  %466 = vmatpush1.msra.mxu0 0.0
  %467 = vmatprep.subr.mxu0 0.0
  %468 = vmatpush1.msra.mxu0 0.0
  %469 = vmatprep.subr.mxu0 0.0
  %470 = vmatpush1.msra.mxu0 0.0
  %471 = vmatprep.subr.mxu0 0.0
  %472 = vmatpush1.msra.mxu0 0.0
  %473 = vmatprep.subr.mxu0 0.0
  %474 = vmatpush1.msra.mxu0 0.0
  %475 = vmatprep.subr.mxu0 0.0
  %476 = vmatpush1.msra.mxu0 0.0
  %477 = vmatprep.subr.mxu0 0.0
  %478 = vmatpush1.msra.mxu0 0.0
  %479 = vmatprep.subr.mxu0 0.0
  %480 = vmatpush1.msra.mxu0 0.0
  %481 = vmatprep.subr.mxu0 0.0
  %482 = vmatpush1.msra.mxu0 0.0
  %483 = vmatprep.subr.mxu0 0.0
  %484 = vmatpush1.msra.mxu0 0.0
  %485 = vmatprep.subr.mxu0 0.0
  %486 = vmatpush1.msra.mxu0 0.0
  %487 = vmatprep.subr.mxu0 0.0
  %488 = vmatpush1.msra.mxu0 0.0
  %489 = vmatprep.subr.mxu0 0.0
  %490 = vmatpush1.msra.mxu0 0.0
  %491 = vmatprep.subr.mxu0 0.0
  %492 = vmatpush1.msra.mxu0 0.0
  %493 = vmatprep.subr.mxu0 0.0
  %494 = vmatpush1.msra.mxu0 0.0
  %495 = vmatprep.subr.mxu0 0.0
  %496 = vmatpush1.msra.mxu0 0.0
  %497 = vmatprep.subr.mxu0 0.0
  %498 = vmatpush1.msra.mxu0 0.0
  %499 = vmatprep.subr.mxu0 0.0
  %500 = vmatpush1.msra.mxu0 0.0
  %501 = vmatprep.subr.mxu0 0.0
  %502 = vmatpush1.msra.mxu0 0.0
  %503 = vmatprep.subr.mxu0 0.0
  %504 = vmatpush1.msra.mxu0 0.0
  %505 = vmatprep.subr.mxu0 0.0
  %506 = vmatpush1.msra.mxu0 0.0
  %507 = vmatprep.subr.mxu0 0.0
  %508 = vmatpush1.msra.mxu0 0.0
  %509 = vmatprep.subr.mxu0 0.0
  %510 = vmatpush1.msra.mxu0 0.0
  %511 = vmatprep.subr.mxu0 0.0
  %512 = vmatpush1.msra.mxu0 0.0
  %513 = vmatprep.mubr.f32.mxu0 0.0
  %514 = vmatmul.mubr.f32.gmra.mrb[0].mxu0 %v447
  %v515 = vpop.f32.mrb[0].mxu0
  %v516 = vadd.f32 0.0, %v515
  %v517 = vpop.f32.mrb[0].mxu0
  %v518 = vadd.f32 0.0, %v517
  %519 = vdwg.mxu0
  %v521 = vsel %vm149, %v22, 0
  %523 = vmatprep.subr.mxu0 %v60
  %524 = vmatpush1.msra.mxu0 %v59
  %525 = vmatprep.subr.mxu0 0.0
  %526 = vmatpush1.msra.mxu0 0.0
  %527 = vmatprep.subr.mxu0 0.0
  %528 = vmatpush1.msra.mxu0 0.0
  %529 = vmatprep.subr.mxu0 0.0
  %530 = vmatpush1.msra.mxu0 0.0
  %531 = vmatprep.subr.mxu0 0.0
  %532 = vmatpush1.msra.mxu0 0.0
  %533 = vmatprep.subr.mxu0 0.0
  %534 = vmatpush1.msra.mxu0 0.0
  %535 = vmatprep.subr.mxu0 0.0
  %536 = vmatpush1.msra.mxu0 0.0
  %537 = vmatprep.subr.mxu0 0.0
  %538 = vmatpush1.msra.mxu0 0.0
  %539 = vmatprep.subr.mxu0 0.0
  %540 = vmatpush1.msra.mxu0 0.0
  %541 = vmatprep.subr.mxu0 0.0
  %542 = vmatpush1.msra.mxu0 0.0
  %543 = vmatprep.subr.mxu0 0.0
  %544 = vmatpush1.msra.mxu0 0.0
  %545 = vmatprep.subr.mxu0 0.0
  %546 = vmatpush1.msra.mxu0 0.0
  %547 = vmatprep.subr.mxu0 0.0
  %548 = vmatpush1.msra.mxu0 0.0
  %549 = vmatprep.subr.mxu0 0.0
  %550 = vmatpush1.msra.mxu0 0.0
  %551 = vmatprep.subr.mxu0 0.0
  %552 = vmatpush1.msra.mxu0 0.0
  %553 = vmatprep.subr.mxu0 0.0
  %554 = vmatpush1.msra.mxu0 0.0
  %555 = vmatprep.subr.mxu0 0.0
  %556 = vmatpush1.msra.mxu0 0.0
  %557 = vmatprep.subr.mxu0 0.0
  %558 = vmatpush1.msra.mxu0 0.0
  %559 = vmatprep.subr.mxu0 0.0
  %560 = vmatpush1.msra.mxu0 0.0
  %561 = vmatprep.subr.mxu0 0.0
  %562 = vmatpush1.msra.mxu0 0.0
  %563 = vmatprep.subr.mxu0 0.0
  %564 = vmatpush1.msra.mxu0 0.0
  %565 = vmatprep.subr.mxu0 0.0
  %566 = vmatpush1.msra.mxu0 0.0
  %567 = vmatprep.subr.mxu0 0.0
  %568 = vmatpush1.msra.mxu0 0.0
  %569 = vmatprep.subr.mxu0 0.0
  %570 = vmatpush1.msra.mxu0 0.0
  %571 = vmatprep.subr.mxu0 0.0
  %572 = vmatpush1.msra.mxu0 0.0
  %573 = vmatprep.subr.mxu0 0.0
  %574 = vmatpush1.msra.mxu0 0.0
  %575 = vmatprep.subr.mxu0 0.0
  %576 = vmatpush1.msra.mxu0 0.0
  %577 = vmatprep.subr.mxu0 0.0
  %578 = vmatpush1.msra.mxu0 0.0
  %579 = vmatprep.subr.mxu0 0.0
  %580 = vmatpush1.msra.mxu0 0.0
  %581 = vmatprep.subr.mxu0 0.0
  %582 = vmatpush1.msra.mxu0 0.0
  %583 = vmatprep.subr.mxu0 0.0
  %584 = vmatpush1.msra.mxu0 0.0
  %585 = vmatprep.subr.mxu0 0.0
  %586 = vmatpush1.msra.mxu0 0.0
  %587 = vmatprep.mubr.f32.mxu0 0.0
  %588 = vmatmul.mubr.f32.gmra.mrb[0].mxu0 %v521
  %v589 = vpop.f32.mrb[0].mxu0
  %v590 = vadd.f32 0.0, %v589
  %v591 = vpop.f32.mrb[0].mxu0
  %v592 = vadd.f32 0.0, %v591
  %593 = vdwg.mxu0
  %v595 = vsel %vm149, %v23, 0
  %597 = vmatprep.subr.mxu0 %v62
  %598 = vmatpush1.msra.mxu0 %v61
  %599 = vmatprep.subr.mxu0 0.0
  %600 = vmatpush1.msra.mxu0 0.0
  %601 = vmatprep.subr.mxu0 0.0
  %602 = vmatpush1.msra.mxu0 0.0
  %603 = vmatprep.subr.mxu0 0.0
  %604 = vmatpush1.msra.mxu0 0.0
  %605 = vmatprep.subr.mxu0 0.0
  %606 = vmatpush1.msra.mxu0 0.0
  %607 = vmatprep.subr.mxu0 0.0
  %608 = vmatpush1.msra.mxu0 0.0
  %609 = vmatprep.subr.mxu0 0.0
  %610 = vmatpush1.msra.mxu0 0.0
  %611 = vmatprep.subr.mxu0 0.0
  %612 = vmatpush1.msra.mxu0 0.0
  %613 = vmatprep.subr.mxu0 0.0
  %614 = vmatpush1.msra.mxu0 0.0
  %615 = vmatprep.subr.mxu0 0.0
  %616 = vmatpush1.msra.mxu0 0.0
  %617 = vmatprep.subr.mxu0 0.0
  %618 = vmatpush1.msra.mxu0 0.0
  %619 = vmatprep.subr.mxu0 0.0
  %620 = vmatpush1.msra.mxu0 0.0
  %621 = vmatprep.subr.mxu0 0.0
  %622 = vmatpush1.msra.mxu0 0.0
  %623 = vmatprep.subr.mxu0 0.0
  %624 = vmatpush1.msra.mxu0 0.0
  %625 = vmatprep.subr.mxu0 0.0
  %626 = vmatpush1.msra.mxu0 0.0
  %627 = vmatprep.subr.mxu0 0.0
  %628 = vmatpush1.msra.mxu0 0.0
  %629 = vmatprep.subr.mxu0 0.0
  %630 = vmatpush1.msra.mxu0 0.0
  %631 = vmatprep.subr.mxu0 0.0
  %632 = vmatpush1.msra.mxu0 0.0
  %633 = vmatprep.subr.mxu0 0.0
  %634 = vmatpush1.msra.mxu0 0.0
  %635 = vmatprep.subr.mxu0 0.0
  %636 = vmatpush1.msra.mxu0 0.0
  %637 = vmatprep.subr.mxu0 0.0
  %638 = vmatpush1.msra.mxu0 0.0
  %639 = vmatprep.subr.mxu0 0.0
  %640 = vmatpush1.msra.mxu0 0.0
  %641 = vmatprep.subr.mxu0 0.0
  %642 = vmatpush1.msra.mxu0 0.0
  %643 = vmatprep.subr.mxu0 0.0
  %644 = vmatpush1.msra.mxu0 0.0
  %645 = vmatprep.subr.mxu0 0.0
  %646 = vmatpush1.msra.mxu0 0.0
  %647 = vmatprep.subr.mxu0 0.0
  %648 = vmatpush1.msra.mxu0 0.0
  %649 = vmatprep.subr.mxu0 0.0
  %650 = vmatpush1.msra.mxu0 0.0
  %651 = vmatprep.subr.mxu0 0.0
  %652 = vmatpush1.msra.mxu0 0.0
  %653 = vmatprep.subr.mxu0 0.0
  %654 = vmatpush1.msra.mxu0 0.0
  %655 = vmatprep.subr.mxu0 0.0
  %656 = vmatpush1.msra.mxu0 0.0
  %657 = vmatprep.subr.mxu0 0.0
  %658 = vmatpush1.msra.mxu0 0.0
  %659 = vmatprep.subr.mxu0 0.0
  %660 = vmatpush1.msra.mxu0 0.0
  %661 = vmatprep.mubr.f32.mxu0 0.0
  %662 = vmatmul.mubr.f32.gmra.mrb[0].mxu0 %v595
  %v663 = vpop.f32.mrb[0].mxu0
  %v664 = vadd.f32 0.0, %v663
  %v665 = vpop.f32.mrb[0].mxu0
  %v666 = vadd.f32 0.0, %v665
  %667 = vdwg.mxu0
  %v669 = vsel %vm149, %v24, 0
  %671 = vmatprep.subr.mxu0 %v64
  %672 = vmatpush1.msra.mxu0 %v63
  %673 = vmatprep.subr.mxu0 0.0
  %674 = vmatpush1.msra.mxu0 0.0
  %675 = vmatprep.subr.mxu0 0.0
  %676 = vmatpush1.msra.mxu0 0.0
  %677 = vmatprep.subr.mxu0 0.0
  %678 = vmatpush1.msra.mxu0 0.0
  %679 = vmatprep.subr.mxu0 0.0
  %680 = vmatpush1.msra.mxu0 0.0
  %681 = vmatprep.subr.mxu0 0.0
  %682 = vmatpush1.msra.mxu0 0.0
  %683 = vmatprep.subr.mxu0 0.0
  %684 = vmatpush1.msra.mxu0 0.0
  %685 = vmatprep.subr.mxu0 0.0
  %686 = vmatpush1.msra.mxu0 0.0
  %687 = vmatprep.subr.mxu0 0.0
  %688 = vmatpush1.msra.mxu0 0.0
  %689 = vmatprep.subr.mxu0 0.0
  %690 = vmatpush1.msra.mxu0 0.0
  %691 = vmatprep.subr.mxu0 0.0
  %692 = vmatpush1.msra.mxu0 0.0
  %693 = vmatprep.subr.mxu0 0.0
  %694 = vmatpush1.msra.mxu0 0.0
  %695 = vmatprep.subr.mxu0 0.0
  %696 = vmatpush1.msra.mxu0 0.0
  %697 = vmatprep.subr.mxu0 0.0
  %698 = vmatpush1.msra.mxu0 0.0
  %699 = vmatprep.subr.mxu0 0.0
  %700 = vmatpush1.msra.mxu0 0.0
  %701 = vmatprep.subr.mxu0 0.0
  %702 = vmatpush1.msra.mxu0 0.0
  %703 = vmatprep.subr.mxu0 0.0
  %704 = vmatpush1.msra.mxu0 0.0
  %705 = vmatprep.subr.mxu0 0.0
  %706 = vmatpush1.msra.mxu0 0.0
  %707 = vmatprep.subr.mxu0 0.0
  %708 = vmatpush1.msra.mxu0 0.0
  %709 = vmatprep.subr.mxu0 0.0
  %710 = vmatpush1.msra.mxu0 0.0
  %711 = vmatprep.subr.mxu0 0.0
  %712 = vmatpush1.msra.mxu0 0.0
  %713 = vmatprep.subr.mxu0 0.0
  %714 = vmatpush1.msra.mxu0 0.0
  %715 = vmatprep.subr.mxu0 0.0
  %716 = vmatpush1.msra.mxu0 0.0
  %717 = vmatprep.subr.mxu0 0.0
  %718 = vmatpush1.msra.mxu0 0.0
  %719 = vmatprep.subr.mxu0 0.0
  %720 = vmatpush1.msra.mxu0 0.0
  %721 = vmatprep.subr.mxu0 0.0
  %722 = vmatpush1.msra.mxu0 0.0
  %723 = vmatprep.subr.mxu0 0.0
  %724 = vmatpush1.msra.mxu0 0.0
  %725 = vmatprep.subr.mxu0 0.0
  %726 = vmatpush1.msra.mxu0 0.0
  %727 = vmatprep.subr.mxu0 0.0
  %728 = vmatpush1.msra.mxu0 0.0
  %729 = vmatprep.subr.mxu0 0.0
  %730 = vmatpush1.msra.mxu0 0.0
  %731 = vmatprep.subr.mxu0 0.0
  %732 = vmatpush1.msra.mxu0 0.0
  %733 = vmatprep.subr.mxu0 0.0
  %734 = vmatpush1.msra.mxu0 0.0
  %735 = vmatprep.mubr.f32.mxu0 0.0
  %736 = vmatmul.mubr.f32.gmra.mrb[0].mxu0 %v669
  %v737 = vpop.f32.mrb[0].mxu0
  %v738 = vadd.f32 0.0, %v737
  %v739 = vpop.f32.mrb[0].mxu0
  %v740 = vadd.f32 0.0, %v739
  %741 = vdwg.mxu0
  %v743 = vsel %vm149, %v25, 0
  %745 = vmatprep.subr.mxu0 %v66
  %746 = vmatpush1.msra.mxu0 %v65
  %747 = vmatprep.subr.mxu0 0.0
  %748 = vmatpush1.msra.mxu0 0.0
  %749 = vmatprep.subr.mxu0 0.0
  %750 = vmatpush1.msra.mxu0 0.0
  %751 = vmatprep.subr.mxu0 0.0
  %752 = vmatpush1.msra.mxu0 0.0
  %753 = vmatprep.subr.mxu0 0.0
  %754 = vmatpush1.msra.mxu0 0.0
  %755 = vmatprep.subr.mxu0 0.0
  %756 = vmatpush1.msra.mxu0 0.0
  %757 = vmatprep.subr.mxu0 0.0
  %758 = vmatpush1.msra.mxu0 0.0
  %759 = vmatprep.subr.mxu0 0.0
  %760 = vmatpush1.msra.mxu0 0.0
  %761 = vmatprep.subr.mxu0 0.0
  %762 = vmatpush1.msra.mxu0 0.0
  %763 = vmatprep.subr.mxu0 0.0
  %764 = vmatpush1.msra.mxu0 0.0
  %765 = vmatprep.subr.mxu0 0.0
  %766 = vmatpush1.msra.mxu0 0.0
  %767 = vmatprep.subr.mxu0 0.0
  %768 = vmatpush1.msra.mxu0 0.0
  %769 = vmatprep.subr.mxu0 0.0
  %770 = vmatpush1.msra.mxu0 0.0
  %771 = vmatprep.subr.mxu0 0.0
  %772 = vmatpush1.msra.mxu0 0.0
  %773 = vmatprep.subr.mxu0 0.0
  %774 = vmatpush1.msra.mxu0 0.0
  %775 = vmatprep.subr.mxu0 0.0
  %776 = vmatpush1.msra.mxu0 0.0
  %777 = vmatprep.subr.mxu0 0.0
  %778 = vmatpush1.msra.mxu0 0.0
  %779 = vmatprep.subr.mxu0 0.0
  %780 = vmatpush1.msra.mxu0 0.0
  %781 = vmatprep.subr.mxu0 0.0
  %782 = vmatpush1.msra.mxu0 0.0
  %783 = vmatprep.subr.mxu0 0.0
  %784 = vmatpush1.msra.mxu0 0.0
  %785 = vmatprep.subr.mxu0 0.0
  %786 = vmatpush1.msra.mxu0 0.0
  %787 = vmatprep.subr.mxu0 0.0
  %788 = vmatpush1.msra.mxu0 0.0
  %789 = vmatprep.subr.mxu0 0.0
  %790 = vmatpush1.msra.mxu0 0.0
  %791 = vmatprep.subr.mxu0 0.0
  %792 = vmatpush1.msra.mxu0 0.0
  %793 = vmatprep.subr.mxu0 0.0
  %794 = vmatpush1.msra.mxu0 0.0
  %795 = vmatprep.subr.mxu0 0.0
  %796 = vmatpush1.msra.mxu0 0.0
  %797 = vmatprep.subr.mxu0 0.0
  %798 = vmatpush1.msra.mxu0 0.0
  %799 = vmatprep.subr.mxu0 0.0
  %800 = vmatpush1.msra.mxu0 0.0
  %801 = vmatprep.subr.mxu0 0.0
  %802 = vmatpush1.msra.mxu0 0.0
  %803 = vmatprep.subr.mxu0 0.0
  %804 = vmatpush1.msra.mxu0 0.0
  %805 = vmatprep.subr.mxu0 0.0
  %806 = vmatpush1.msra.mxu0 0.0
  %807 = vmatprep.subr.mxu0 0.0
  %808 = vmatpush1.msra.mxu0 0.0
  %809 = vmatprep.mubr.f32.mxu0 0.0
  %810 = vmatmul.mubr.f32.gmra.mrb[0].mxu0 %v743
  %v811 = vpop.f32.mrb[0].mxu0
  %v812 = vadd.f32 0.0, %v811
  %v813 = vpop.f32.mrb[0].mxu0
  %v814 = vadd.f32 0.0, %v813
  %815 = vdwg.mxu0
  %v817 = vsel %vm149, %v26, 0
  %819 = vmatprep.subr.mxu0 %v68
  %820 = vmatpush1.msra.mxu0 %v67
  %821 = vmatprep.subr.mxu0 0.0
  %822 = vmatpush1.msra.mxu0 0.0
  %823 = vmatprep.subr.mxu0 0.0
  %824 = vmatpush1.msra.mxu0 0.0
  %825 = vmatprep.subr.mxu0 0.0
  %826 = vmatpush1.msra.mxu0 0.0
  %827 = vmatprep.subr.mxu0 0.0
  %828 = vmatpush1.msra.mxu0 0.0
  %829 = vmatprep.subr.mxu0 0.0
  %830 = vmatpush1.msra.mxu0 0.0
  %831 = vmatprep.subr.mxu0 0.0
  %832 = vmatpush1.msra.mxu0 0.0
  %833 = vmatprep.subr.mxu0 0.0
  %834 = vmatpush1.msra.mxu0 0.0
  %835 = vmatprep.subr.mxu0 0.0
  %836 = vmatpush1.msra.mxu0 0.0
  %837 = vmatprep.subr.mxu0 0.0
  %838 = vmatpush1.msra.mxu0 0.0
  %839 = vmatprep.subr.mxu0 0.0
  %840 = vmatpush1.msra.mxu0 0.0
  %841 = vmatprep.subr.mxu0 0.0
  %842 = vmatpush1.msra.mxu0 0.0
  %843 = vmatprep.subr.mxu0 0.0
  %844 = vmatpush1.msra.mxu0 0.0
  %845 = vmatprep.subr.mxu0 0.0
  %846 = vmatpush1.msra.mxu0 0.0
  %847 = vmatprep.subr.mxu0 0.0
  %848 = vmatpush1.msra.mxu0 0.0
  %849 = vmatprep.subr.mxu0 0.0
  %850 = vmatpush1.msra.mxu0 0.0
  %851 = vmatprep.subr.mxu0 0.0
  %852 = vmatpush1.msra.mxu0 0.0
  %853 = vmatprep.subr.mxu0 0.0
  %854 = vmatpush1.msra.mxu0 0.0
  %855 = vmatprep.subr.mxu0 0.0
  %856 = vmatpush1.msra.mxu0 0.0
  %857 = vmatprep.subr.mxu0 0.0
  %858 = vmatpush1.msra.mxu0 0.0
  %859 = vmatprep.subr.mxu0 0.0
  %860 = vmatpush1.msra.mxu0 0.0
  %861 = vmatprep.subr.mxu0 0.0
  %862 = vmatpush1.msra.mxu0 0.0
  %863 = vmatprep.subr.mxu0 0.0
  %864 = vmatpush1.msra.mxu0 0.0
  %865 = vmatprep.subr.mxu0 0.0
  %866 = vmatpush1.msra.mxu0 0.0
  %867 = vmatprep.subr.mxu0 0.0
  %868 = vmatpush1.msra.mxu0 0.0
  %869 = vmatprep.subr.mxu0 0.0
  %870 = vmatpush1.msra.mxu0 0.0
  %871 = vmatprep.subr.mxu0 0.0
  %872 = vmatpush1.msra.mxu0 0.0
  %873 = vmatprep.subr.mxu0 0.0
  %874 = vmatpush1.msra.mxu0 0.0
  %875 = vmatprep.subr.mxu0 0.0
  %876 = vmatpush1.msra.mxu0 0.0
  %877 = vmatprep.subr.mxu0 0.0
  %878 = vmatpush1.msra.mxu0 0.0
  %879 = vmatprep.subr.mxu0 0.0
  %880 = vmatpush1.msra.mxu0 0.0
  %881 = vmatprep.subr.mxu0 0.0
  %882 = vmatpush1.msra.mxu0 0.0
  %883 = vmatprep.mubr.f32.mxu0 0.0
  %884 = vmatmul.mubr.f32.gmra.mrb[0].mxu0 %v817
  %v885 = vpop.f32.mrb[0].mxu0
  %v886 = vadd.f32 0.0, %v885
  %v887 = vpop.f32.mrb[0].mxu0
  %v888 = vadd.f32 0.0, %v887
  %889 = vdwg.mxu0
  %v891 = vsel %vm149, %v27, 0
  %893 = vmatprep.subr.mxu0 %v70
  %894 = vmatpush1.msra.mxu0 %v69
  %895 = vmatprep.subr.mxu0 0.0
  %896 = vmatpush1.msra.mxu0 0.0
  %897 = vmatprep.subr.mxu0 0.0
  %898 = vmatpush1.msra.mxu0 0.0
  %899 = vmatprep.subr.mxu0 0.0
  %900 = vmatpush1.msra.mxu0 0.0
  %901 = vmatprep.subr.mxu0 0.0
  %902 = vmatpush1.msra.mxu0 0.0
  %903 = vmatprep.subr.mxu0 0.0
  %904 = vmatpush1.msra.mxu0 0.0
  %905 = vmatprep.subr.mxu0 0.0
  %906 = vmatpush1.msra.mxu0 0.0
  %907 = vmatprep.subr.mxu0 0.0
  %908 = vmatpush1.msra.mxu0 0.0
  %909 = vmatprep.subr.mxu0 0.0
  %910 = vmatpush1.msra.mxu0 0.0
  %911 = vmatprep.subr.mxu0 0.0
  %912 = vmatpush1.msra.mxu0 0.0
  %913 = vmatprep.subr.mxu0 0.0
  %914 = vmatpush1.msra.mxu0 0.0
  %915 = vmatprep.subr.mxu0 0.0
  %916 = vmatpush1.msra.mxu0 0.0
  %917 = vmatprep.subr.mxu0 0.0
  %918 = vmatpush1.msra.mxu0 0.0
  %919 = vmatprep.subr.mxu0 0.0
  %920 = vmatpush1.msra.mxu0 0.0
  %921 = vmatprep.subr.mxu0 0.0
  %922 = vmatpush1.msra.mxu0 0.0
  %923 = vmatprep.subr.mxu0 0.0
  %924 = vmatpush1.msra.mxu0 0.0
  %925 = vmatprep.subr.mxu0 0.0
  %926 = vmatpush1.msra.mxu0 0.0
  %927 = vmatprep.subr.mxu0 0.0
  %928 = vmatpush1.msra.mxu0 0.0
  %929 = vmatprep.subr.mxu0 0.0
  %930 = vmatpush1.msra.mxu0 0.0
  %931 = vmatprep.subr.mxu0 0.0
  %932 = vmatpush1.msra.mxu0 0.0
  %933 = vmatprep.subr.mxu0 0.0
  %934 = vmatpush1.msra.mxu0 0.0
  %935 = vmatprep.subr.mxu0 0.0
  %936 = vmatpush1.msra.mxu0 0.0
  %937 = vmatprep.subr.mxu0 0.0
  %938 = vmatpush1.msra.mxu0 0.0
  %939 = vmatprep.subr.mxu0 0.0
  %940 = vmatpush1.msra.mxu0 0.0
  %941 = vmatprep.subr.mxu0 0.0
  %942 = vmatpush1.msra.mxu0 0.0
  %943 = vmatprep.subr.mxu0 0.0
  %944 = vmatpush1.msra.mxu0 0.0
  %945 = vmatprep.subr.mxu0 0.0
  %946 = vmatpush1.msra.mxu0 0.0
  %947 = vmatprep.subr.mxu0 0.0
  %948 = vmatpush1.msra.mxu0 0.0
  %949 = vmatprep.subr.mxu0 0.0
  %950 = vmatpush1.msra.mxu0 0.0
  %951 = vmatprep.subr.mxu0 0.0
  %952 = vmatpush1.msra.mxu0 0.0
  %953 = vmatprep.subr.mxu0 0.0
  %954 = vmatpush1.msra.mxu0 0.0
  %955 = vmatprep.subr.mxu0 0.0
  %956 = vmatpush1.msra.mxu0 0.0
  %957 = vmatprep.mubr.f32.mxu0 0.0
  %958 = vmatmul.mubr.f32.gmra.mrb[0].mxu0 %v891
  %v959 = vpop.f32.mrb[0].mxu0
  %v960 = vadd.f32 0.0, %v959
  %v961 = vpop.f32.mrb[0].mxu0
  %v962 = vadd.f32 0.0, %v961
  %963 = vdwg.mxu0
  %v965 = vsel %vm149, %v28, 0
  %967 = vmatprep.subr.mxu0 %v72
  %968 = vmatpush1.msra.mxu0 %v71
  %969 = vmatprep.subr.mxu0 0.0
  %970 = vmatpush1.msra.mxu0 0.0
  %971 = vmatprep.subr.mxu0 0.0
  %972 = vmatpush1.msra.mxu0 0.0
  %973 = vmatprep.subr.mxu0 0.0
  %974 = vmatpush1.msra.mxu0 0.0
  %975 = vmatprep.subr.mxu0 0.0
  %976 = vmatpush1.msra.mxu0 0.0
  %977 = vmatprep.subr.mxu0 0.0
  %978 = vmatpush1.msra.mxu0 0.0
  %979 = vmatprep.subr.mxu0 0.0
  %980 = vmatpush1.msra.mxu0 0.0
  %981 = vmatprep.subr.mxu0 0.0
  %982 = vmatpush1.msra.mxu0 0.0
  %983 = vmatprep.subr.mxu0 0.0
  %984 = vmatpush1.msra.mxu0 0.0
  %985 = vmatprep.subr.mxu0 0.0
  %986 = vmatpush1.msra.mxu0 0.0
  %987 = vmatprep.subr.mxu0 0.0
  %988 = vmatpush1.msra.mxu0 0.0
  %989 = vmatprep.subr.mxu0 0.0
  %990 = vmatpush1.msra.mxu0 0.0
  %991 = vmatprep.subr.mxu0 0.0
  %992 = vmatpush1.msra.mxu0 0.0
  %993 = vmatprep.subr.mxu0 0.0
  %994 = vmatpush1.msra.mxu0 0.0
  %995 = vmatprep.subr.mxu0 0.0
  %996 = vmatpush1.msra.mxu0 0.0
  %997 = vmatprep.subr.mxu0 0.0
  %998 = vmatpush1.msra.mxu0 0.0
  %999 = vmatprep.subr.mxu0 0.0
  %1000 = vmatpush1.msra.mxu0 0.0
  %1001 = vmatprep.subr.mxu0 0.0
  %1002 = vmatpush1.msra.mxu0 0.0
  %1003 = vmatprep.subr.mxu0 0.0
  %1004 = vmatpush1.msra.mxu0 0.0
  %1005 = vmatprep.subr.mxu0 0.0
  %1006 = vmatpush1.msra.mxu0 0.0
  %1007 = vmatprep.subr.mxu0 0.0
  %1008 = vmatpush1.msra.mxu0 0.0
  %1009 = vmatprep.subr.mxu0 0.0
  %1010 = vmatpush1.msra.mxu0 0.0
  %1011 = vmatprep.subr.mxu0 0.0
  %1012 = vmatpush1.msra.mxu0 0.0
  %1013 = vmatprep.subr.mxu0 0.0
  %1014 = vmatpush1.msra.mxu0 0.0
  %1015 = vmatprep.subr.mxu0 0.0
  %1016 = vmatpush1.msra.mxu0 0.0
  %1017 = vmatprep.subr.mxu0 0.0
  %1018 = vmatpush1.msra.mxu0 0.0
  %1019 = vmatprep.subr.mxu0 0.0
  %1020 = vmatpush1.msra.mxu0 0.0
  %1021 = vmatprep.subr.mxu0 0.0
  %1022 = vmatpush1.msra.mxu0 0.0
  %1023 = vmatprep.subr.mxu0 0.0
  %1024 = vmatpush1.msra.mxu0 0.0
  %1025 = vmatprep.subr.mxu0 0.0
  %1026 = vmatpush1.msra.mxu0 0.0
  %1027 = vmatprep.subr.mxu0 0.0
  %1028 = vmatpush1.msra.mxu0 0.0
  %1029 = vmatprep.subr.mxu0 0.0
  %1030 = vmatpush1.msra.mxu0 0.0
  %1031 = vmatprep.mubr.f32.mxu0 0.0
  %1032 = vmatmul.mubr.f32.gmra.mrb[0].mxu0 %v965
  %v1033 = vpop.f32.mrb[0].mxu0
  %v1034 = vadd.f32 0.0, %v1033
  %v1035 = vpop.f32.mrb[0].mxu0
  %v1036 = vadd.f32 0.0, %v1035
  %1037 = vdwg.mxu0
  %v1039 = vsel %vm149, %v29, 0
  %1041 = vmatprep.subr.mxu0 %v74
  %1042 = vmatpush1.msra.mxu0 %v73
  %1043 = vmatprep.subr.mxu0 0.0
  %1044 = vmatpush1.msra.mxu0 0.0
  %1045 = vmatprep.subr.mxu0 0.0
  %1046 = vmatpush1.msra.mxu0 0.0
  %1047 = vmatprep.subr.mxu0 0.0
  %1048 = vmatpush1.msra.mxu0 0.0
  %1049 = vmatprep.subr.mxu0 0.0
  %1050 = vmatpush1.msra.mxu0 0.0
  %1051 = vmatprep.subr.mxu0 0.0
  %1052 = vmatpush1.msra.mxu0 0.0
  %1053 = vmatprep.subr.mxu0 0.0
  %1054 = vmatpush1.msra.mxu0 0.0
  %1055 = vmatprep.subr.mxu0 0.0
  %1056 = vmatpush1.msra.mxu0 0.0
  %1057 = vmatprep.subr.mxu0 0.0
  %1058 = vmatpush1.msra.mxu0 0.0
  %1059 = vmatprep.subr.mxu0 0.0
  %1060 = vmatpush1.msra.mxu0 0.0
  %1061 = vmatprep.subr.mxu0 0.0
  %1062 = vmatpush1.msra.mxu0 0.0
  %1063 = vmatprep.subr.mxu0 0.0
  %1064 = vmatpush1.msra.mxu0 0.0
  %1065 = vmatprep.subr.mxu0 0.0
  %1066 = vmatpush1.msra.mxu0 0.0
  %1067 = vmatprep.subr.mxu0 0.0
  %1068 = vmatpush1.msra.mxu0 0.0
  %1069 = vmatprep.subr.mxu0 0.0
  %1070 = vmatpush1.msra.mxu0 0.0
  %1071 = vmatprep.subr.mxu0 0.0
  %1072 = vmatpush1.msra.mxu0 0.0
  %1073 = vmatprep.subr.mxu0 0.0
  %1074 = vmatpush1.msra.mxu0 0.0
  %1075 = vmatprep.subr.mxu0 0.0
  %1076 = vmatpush1.msra.mxu0 0.0
  %1077 = vmatprep.subr.mxu0 0.0
  %1078 = vmatpush1.msra.mxu0 0.0
  %1079 = vmatprep.subr.mxu0 0.0
  %1080 = vmatpush1.msra.mxu0 0.0
  %1081 = vmatprep.subr.mxu0 0.0
  %1082 = vmatpush1.msra.mxu0 0.0
  %1083 = vmatprep.subr.mxu0 0.0
  %1084 = vmatpush1.msra.mxu0 0.0
  %1085 = vmatprep.subr.mxu0 0.0
  %1086 = vmatpush1.msra.mxu0 0.0
  %1087 = vmatprep.subr.mxu0 0.0
  %1088 = vmatpush1.msra.mxu0 0.0
  %1089 = vmatprep.subr.mxu0 0.0
  %1090 = vmatpush1.msra.mxu0 0.0
  %1091 = vmatprep.subr.mxu0 0.0
  %1092 = vmatpush1.msra.mxu0 0.0
  %1093 = vmatprep.subr.mxu0 0.0
  %1094 = vmatpush1.msra.mxu0 0.0
  %1095 = vmatprep.subr.mxu0 0.0
  %1096 = vmatpush1.msra.mxu0 0.0
  %1097 = vmatprep.subr.mxu0 0.0
  %1098 = vmatpush1.msra.mxu0 0.0
  %1099 = vmatprep.subr.mxu0 0.0
  %1100 = vmatpush1.msra.mxu0 0.0
  %1101 = vmatprep.subr.mxu0 0.0
  %1102 = vmatpush1.msra.mxu0 0.0
  %1103 = vmatprep.subr.mxu0 0.0
  %1104 = vmatpush1.msra.mxu0 0.0
  %1105 = vmatprep.mubr.f32.mxu0 0.0
  %1106 = vmatmul.mubr.f32.gmra.mrb[0].mxu0 %v1039
  %v1107 = vpop.f32.mrb[0].mxu0
  %v1108 = vadd.f32 0.0, %v1107
  %v1109 = vpop.f32.mrb[0].mxu0
  %v1110 = vadd.f32 0.0, %v1109
  %1111 = vdwg.mxu0
  %v1113 = vsel %vm149, %v30, 0
  %1115 = vmatprep.subr.mxu0 %v76
  %1116 = vmatpush1.msra.mxu0 %v75
  %1117 = vmatprep.subr.mxu0 0.0
  %1118 = vmatpush1.msra.mxu0 0.0
  %1119 = vmatprep.subr.mxu0 0.0
  %1120 = vmatpush1.msra.mxu0 0.0
  %1121 = vmatprep.subr.mxu0 0.0
  %1122 = vmatpush1.msra.mxu0 0.0
  %1123 = vmatprep.subr.mxu0 0.0
  %1124 = vmatpush1.msra.mxu0 0.0
  %1125 = vmatprep.subr.mxu0 0.0
  %1126 = vmatpush1.msra.mxu0 0.0
  %1127 = vmatprep.subr.mxu0 0.0
  %1128 = vmatpush1.msra.mxu0 0.0
  %1129 = vmatprep.subr.mxu0 0.0
  %1130 = vmatpush1.msra.mxu0 0.0
  %1131 = vmatprep.subr.mxu0 0.0
  %1132 = vmatpush1.msra.mxu0 0.0
  %1133 = vmatprep.subr.mxu0 0.0
  %1134 = vmatpush1.msra.mxu0 0.0
  %1135 = vmatprep.subr.mxu0 0.0
  %1136 = vmatpush1.msra.mxu0 0.0
  %1137 = vmatprep.subr.mxu0 0.0
  %1138 = vmatpush1.msra.mxu0 0.0
  %1139 = vmatprep.subr.mxu0 0.0
  %1140 = vmatpush1.msra.mxu0 0.0
  %1141 = vmatprep.subr.mxu0 0.0
  %1142 = vmatpush1.msra.mxu0 0.0
  %1143 = vmatprep.subr.mxu0 0.0
  %1144 = vmatpush1.msra.mxu0 0.0
  %1145 = vmatprep.subr.mxu0 0.0
  %1146 = vmatpush1.msra.mxu0 0.0
  %1147 = vmatprep.subr.mxu0 0.0
  %1148 = vmatpush1.msra.mxu0 0.0
  %1149 = vmatprep.subr.mxu0 0.0
  %1150 = vmatpush1.msra.mxu0 0.0
  %1151 = vmatprep.subr.mxu0 0.0
  %1152 = vmatpush1.msra.mxu0 0.0
  %1153 = vmatprep.subr.mxu0 0.0
  %1154 = vmatpush1.msra.mxu0 0.0
  %1155 = vmatprep.subr.mxu0 0.0
  %1156 = vmatpush1.msra.mxu0 0.0
  %1157 = vmatprep.subr.mxu0 0.0
  %1158 = vmatpush1.msra.mxu0 0.0
  %1159 = vmatprep.subr.mxu0 0.0
  %1160 = vmatpush1.msra.mxu0 0.0
  %1161 = vmatprep.subr.mxu0 0.0
  %1162 = vmatpush1.msra.mxu0 0.0
  %1163 = vmatprep.subr.mxu0 0.0
  %1164 = vmatpush1.msra.mxu0 0.0
  %1165 = vmatprep.subr.mxu0 0.0
  %1166 = vmatpush1.msra.mxu0 0.0
  %1167 = vmatprep.subr.mxu0 0.0
  %1168 = vmatpush1.msra.mxu0 0.0
  %1169 = vmatprep.subr.mxu0 0.0
  %1170 = vmatpush1.msra.mxu0 0.0
  %1171 = vmatprep.subr.mxu0 0.0
  %1172 = vmatpush1.msra.mxu0 0.0
  %1173 = vmatprep.subr.mxu0 0.0
  %1174 = vmatpush1.msra.mxu0 0.0
  %1175 = vmatprep.subr.mxu0 0.0
  %1176 = vmatpush1.msra.mxu0 0.0
  %1177 = vmatprep.subr.mxu0 0.0
  %1178 = vmatpush1.msra.mxu0 0.0
  %1179 = vmatprep.mubr.f32.mxu0 0.0
  %1180 = vmatmul.mubr.f32.gmra.mrb[0].mxu0 %v1113
  %v1181 = vpop.f32.mrb[0].mxu0
  %v1182 = vadd.f32 0.0, %v1181
  %v1183 = vpop.f32.mrb[0].mxu0
  %v1184 = vadd.f32 0.0, %v1183
  %1185 = vdwg.mxu0
  %v1187 = vsel %vm149, %v31, 0
  %1189 = vmatprep.subr.mxu0 %v78
  %1190 = vmatpush1.msra.mxu0 %v77
  %1191 = vmatprep.subr.mxu0 0.0
  %1192 = vmatpush1.msra.mxu0 0.0
  %1193 = vmatprep.subr.mxu0 0.0
  %1194 = vmatpush1.msra.mxu0 0.0
  %1195 = vmatprep.subr.mxu0 0.0
  %1196 = vmatpush1.msra.mxu0 0.0
  %1197 = vmatprep.subr.mxu0 0.0
  %1198 = vmatpush1.msra.mxu0 0.0
  %1199 = vmatprep.subr.mxu0 0.0
  %1200 = vmatpush1.msra.mxu0 0.0
  %1201 = vmatprep.subr.mxu0 0.0
  %1202 = vmatpush1.msra.mxu0 0.0
  %1203 = vmatprep.subr.mxu0 0.0
  %1204 = vmatpush1.msra.mxu0 0.0
  %1205 = vmatprep.subr.mxu0 0.0
  %1206 = vmatpush1.msra.mxu0 0.0
  %1207 = vmatprep.subr.mxu0 0.0
  %1208 = vmatpush1.msra.mxu0 0.0
  %1209 = vmatprep.subr.mxu0 0.0
  %1210 = vmatpush1.msra.mxu0 0.0
  %1211 = vmatprep.subr.mxu0 0.0
  %1212 = vmatpush1.msra.mxu0 0.0
  %1213 = vmatprep.subr.mxu0 0.0
  %1214 = vmatpush1.msra.mxu0 0.0
  %1215 = vmatprep.subr.mxu0 0.0
  %1216 = vmatpush1.msra.mxu0 0.0
  %1217 = vmatprep.subr.mxu0 0.0
  %1218 = vmatpush1.msra.mxu0 0.0
  %1219 = vmatprep.subr.mxu0 0.0
  %1220 = vmatpush1.msra.mxu0 0.0
  %1221 = vmatprep.subr.mxu0 0.0
  %1222 = vmatpush1.msra.mxu0 0.0
  %1223 = vmatprep.subr.mxu0 0.0
  %1224 = vmatpush1.msra.mxu0 0.0
  %1225 = vmatprep.subr.mxu0 0.0
  %1226 = vmatpush1.msra.mxu0 0.0
  %1227 = vmatprep.subr.mxu0 0.0
  %1228 = vmatpush1.msra.mxu0 0.0
  %1229 = vmatprep.subr.mxu0 0.0
  %1230 = vmatpush1.msra.mxu0 0.0
  %1231 = vmatprep.subr.mxu0 0.0
  %1232 = vmatpush1.msra.mxu0 0.0
  %1233 = vmatprep.subr.mxu0 0.0
  %1234 = vmatpush1.msra.mxu0 0.0
  %1235 = vmatprep.subr.mxu0 0.0
  %1236 = vmatpush1.msra.mxu0 0.0
  %1237 = vmatprep.subr.mxu0 0.0
  %1238 = vmatpush1.msra.mxu0 0.0
  %1239 = vmatprep.subr.mxu0 0.0
  %1240 = vmatpush1.msra.mxu0 0.0
  %1241 = vmatprep.subr.mxu0 0.0
  %1242 = vmatpush1.msra.mxu0 0.0
  %1243 = vmatprep.subr.mxu0 0.0
  %1244 = vmatpush1.msra.mxu0 0.0
  %1245 = vmatprep.subr.mxu0 0.0
  %1246 = vmatpush1.msra.mxu0 0.0
  %1247 = vmatprep.subr.mxu0 0.0
  %1248 = vmatpush1.msra.mxu0 0.0
  %1249 = vmatprep.subr.mxu0 0.0
  %1250 = vmatpush1.msra.mxu0 0.0
  %1251 = vmatprep.subr.mxu0 0.0
  %1252 = vmatpush1.msra.mxu0 0.0
  %1253 = vmatprep.mubr.f32.mxu0 0.0
  %1254 = vmatmul.mubr.f32.gmra.mrb[0].mxu0 %v1187
  %v1255 = vpop.f32.mrb[0].mxu0
  %v1256 = vadd.f32 0.0, %v1255
  %v1257 = vpop.f32.mrb[0].mxu0
  %v1258 = vadd.f32 0.0, %v1257
  %1259 = vdwg.mxu0
  %v1261 = vsel %vm149, %v32, 0
  %1263 = vmatprep.subr.mxu0 %v80
  %1264 = vmatpush1.msra.mxu0 %v79
  %1265 = vmatprep.subr.mxu0 0.0
  %1266 = vmatpush1.msra.mxu0 0.0
  %1267 = vmatprep.subr.mxu0 0.0
  %1268 = vmatpush1.msra.mxu0 0.0
  %1269 = vmatprep.subr.mxu0 0.0
  %1270 = vmatpush1.msra.mxu0 0.0
  %1271 = vmatprep.subr.mxu0 0.0
  %1272 = vmatpush1.msra.mxu0 0.0
  %1273 = vmatprep.subr.mxu0 0.0
  %1274 = vmatpush1.msra.mxu0 0.0
  %1275 = vmatprep.subr.mxu0 0.0
  %1276 = vmatpush1.msra.mxu0 0.0
  %1277 = vmatprep.subr.mxu0 0.0
  %1278 = vmatpush1.msra.mxu0 0.0
  %1279 = vmatprep.subr.mxu0 0.0
  %1280 = vmatpush1.msra.mxu0 0.0
  %1281 = vmatprep.subr.mxu0 0.0
  %1282 = vmatpush1.msra.mxu0 0.0
  %1283 = vmatprep.subr.mxu0 0.0
  %1284 = vmatpush1.msra.mxu0 0.0
  %1285 = vmatprep.subr.mxu0 0.0
  %1286 = vmatpush1.msra.mxu0 0.0
  %1287 = vmatprep.subr.mxu0 0.0
  %1288 = vmatpush1.msra.mxu0 0.0
  %1289 = vmatprep.subr.mxu0 0.0
  %1290 = vmatpush1.msra.mxu0 0.0
  %1291 = vmatprep.subr.mxu0 0.0
  %1292 = vmatpush1.msra.mxu0 0.0
  %1293 = vmatprep.subr.mxu0 0.0
  %1294 = vmatpush1.msra.mxu0 0.0
  %1295 = vmatprep.subr.mxu0 0.0
  %1296 = vmatpush1.msra.mxu0 0.0
  %1297 = vmatprep.subr.mxu0 0.0
  %1298 = vmatpush1.msra.mxu0 0.0
  %1299 = vmatprep.subr.mxu0 0.0
  %1300 = vmatpush1.msra.mxu0 0.0
  %1301 = vmatprep.subr.mxu0 0.0
  %1302 = vmatpush1.msra.mxu0 0.0
  %1303 = vmatprep.subr.mxu0 0.0
  %1304 = vmatpush1.msra.mxu0 0.0
  %1305 = vmatprep.subr.mxu0 0.0
  %1306 = vmatpush1.msra.mxu0 0.0
  %1307 = vmatprep.subr.mxu0 0.0
  %1308 = vmatpush1.msra.mxu0 0.0
  %1309 = vmatprep.subr.mxu0 0.0
  %1310 = vmatpush1.msra.mxu0 0.0
  %1311 = vmatprep.subr.mxu0 0.0
  %1312 = vmatpush1.msra.mxu0 0.0
  %1313 = vmatprep.subr.mxu0 0.0
  %1314 = vmatpush1.msra.mxu0 0.0
  %1315 = vmatprep.subr.mxu0 0.0
  %1316 = vmatpush1.msra.mxu0 0.0
  %1317 = vmatprep.subr.mxu0 0.0
  %1318 = vmatpush1.msra.mxu0 0.0
  %1319 = vmatprep.subr.mxu0 0.0
  %1320 = vmatpush1.msra.mxu0 0.0
  %1321 = vmatprep.subr.mxu0 0.0
  %1322 = vmatpush1.msra.mxu0 0.0
  %1323 = vmatprep.subr.mxu0 0.0
  %1324 = vmatpush1.msra.mxu0 0.0
  %1325 = vmatprep.subr.mxu0 0.0
  %1326 = vmatpush1.msra.mxu0 0.0
  %1327 = vmatprep.mubr.f32.mxu0 0.0
  %1328 = vmatmul.mubr.f32.gmra.mrb[0].mxu0 %v1261
  %v1329 = vpop.f32.mrb[0].mxu0
  %v1330 = vadd.f32 0.0, %v1329
  %v1331 = vpop.f32.mrb[0].mxu0
  %v1332 = vadd.f32 0.0, %v1331
  %1333 = vdwg.mxu0
  %v1335 = vsel %vm149, %v33, 0
  %1337 = vmatprep.subr.mxu0 %v82
  %1338 = vmatpush1.msra.mxu0 %v81
  %1339 = vmatprep.subr.mxu0 0.0
  %1340 = vmatpush1.msra.mxu0 0.0
  %1341 = vmatprep.subr.mxu0 0.0
  %1342 = vmatpush1.msra.mxu0 0.0
  %1343 = vmatprep.subr.mxu0 0.0
  %1344 = vmatpush1.msra.mxu0 0.0
  %1345 = vmatprep.subr.mxu0 0.0
  %1346 = vmatpush1.msra.mxu0 0.0
  %1347 = vmatprep.subr.mxu0 0.0
  %1348 = vmatpush1.msra.mxu0 0.0
  %1349 = vmatprep.subr.mxu0 0.0
  %1350 = vmatpush1.msra.mxu0 0.0
  %1351 = vmatprep.subr.mxu0 0.0
  %1352 = vmatpush1.msra.mxu0 0.0
  %1353 = vmatprep.subr.mxu0 0.0
  %1354 = vmatpush1.msra.mxu0 0.0
  %1355 = vmatprep.subr.mxu0 0.0
  %1356 = vmatpush1.msra.mxu0 0.0
  %1357 = vmatprep.subr.mxu0 0.0
  %1358 = vmatpush1.msra.mxu0 0.0
  %1359 = vmatprep.subr.mxu0 0.0
  %1360 = vmatpush1.msra.mxu0 0.0
  %1361 = vmatprep.subr.mxu0 0.0
  %1362 = vmatpush1.msra.mxu0 0.0
  %1363 = vmatprep.subr.mxu0 0.0
  %1364 = vmatpush1.msra.mxu0 0.0
  %1365 = vmatprep.subr.mxu0 0.0
  %1366 = vmatpush1.msra.mxu0 0.0
  %1367 = vmatprep.subr.mxu0 0.0
  %1368 = vmatpush1.msra.mxu0 0.0
  %1369 = vmatprep.subr.mxu0 0.0
  %1370 = vmatpush1.msra.mxu0 0.0
  %1371 = vmatprep.subr.mxu0 0.0
  %1372 = vmatpush1.msra.mxu0 0.0
  %1373 = vmatprep.subr.mxu0 0.0
  %1374 = vmatpush1.msra.mxu0 0.0
  %1375 = vmatprep.subr.mxu0 0.0
  %1376 = vmatpush1.msra.mxu0 0.0
  %1377 = vmatprep.subr.mxu0 0.0
  %1378 = vmatpush1.msra.mxu0 0.0
  %1379 = vmatprep.subr.mxu0 0.0
  %1380 = vmatpush1.msra.mxu0 0.0
  %1381 = vmatprep.subr.mxu0 0.0
  %1382 = vmatpush1.msra.mxu0 0.0
  %1383 = vmatprep.subr.mxu0 0.0
  %1384 = vmatpush1.msra.mxu0 0.0
  %1385 = vmatprep.subr.mxu0 0.0
  %1386 = vmatpush1.msra.mxu0 0.0
  %1387 = vmatprep.subr.mxu0 0.0
  %1388 = vmatpush1.msra.mxu0 0.0
  %1389 = vmatprep.subr.mxu0 0.0
  %1390 = vmatpush1.msra.mxu0 0.0
  %1391 = vmatprep.subr.mxu0 0.0
  %1392 = vmatpush1.msra.mxu0 0.0
  %1393 = vmatprep.subr.mxu0 0.0
  %1394 = vmatpush1.msra.mxu0 0.0
  %1395 = vmatprep.subr.mxu0 0.0
  %1396 = vmatpush1.msra.mxu0 0.0
  %1397 = vmatprep.subr.mxu0 0.0
  %1398 = vmatpush1.msra.mxu0 0.0
  %1399 = vmatprep.subr.mxu0 0.0
  %1400 = vmatpush1.msra.mxu0 0.0
  %1401 = vmatprep.mubr.f32.mxu0 0.0
  %1402 = vmatmul.mubr.f32.gmra.mrb[0].mxu0 %v1335
  %v1403 = vpop.f32.mrb[0].mxu0
  %v1404 = vadd.f32 0.0, %v1403
  %v1405 = vpop.f32.mrb[0].mxu0
  %v1406 = vadd.f32 0.0, %v1405
  %1407 = vdwg.mxu0
  %v1409 = vsel %vm149, %v34, 0
  %1411 = vmatprep.subr.mxu0 %v84
  %1412 = vmatpush1.msra.mxu0 %v83
  %1413 = vmatprep.subr.mxu0 0.0
  %1414 = vmatpush1.msra.mxu0 0.0
  %1415 = vmatprep.subr.mxu0 0.0
  %1416 = vmatpush1.msra.mxu0 0.0
  %1417 = vmatprep.subr.mxu0 0.0
  %1418 = vmatpush1.msra.mxu0 0.0
  %1419 = vmatprep.subr.mxu0 0.0
  %1420 = vmatpush1.msra.mxu0 0.0
  %1421 = vmatprep.subr.mxu0 0.0
  %1422 = vmatpush1.msra.mxu0 0.0
  %1423 = vmatprep.subr.mxu0 0.0
  %1424 = vmatpush1.msra.mxu0 0.0
  %1425 = vmatprep.subr.mxu0 0.0
  %1426 = vmatpush1.msra.mxu0 0.0
  %1427 = vmatprep.subr.mxu0 0.0
  %1428 = vmatpush1.msra.mxu0 0.0
  %1429 = vmatprep.subr.mxu0 0.0
  %1430 = vmatpush1.msra.mxu0 0.0
  %1431 = vmatprep.subr.mxu0 0.0
  %1432 = vmatpush1.msra.mxu0 0.0
  %1433 = vmatprep.subr.mxu0 0.0
  %1434 = vmatpush1.msra.mxu0 0.0
  %1435 = vmatprep.subr.mxu0 0.0
  %1436 = vmatpush1.msra.mxu0 0.0
  %1437 = vmatprep.subr.mxu0 0.0
  %1438 = vmatpush1.msra.mxu0 0.0
  %1439 = vmatprep.subr.mxu0 0.0
  %1440 = vmatpush1.msra.mxu0 0.0
  %1441 = vmatprep.subr.mxu0 0.0
  %1442 = vmatpush1.msra.mxu0 0.0
  %1443 = vmatprep.subr.mxu0 0.0
  %1444 = vmatpush1.msra.mxu0 0.0
  %1445 = vmatprep.subr.mxu0 0.0
  %1446 = vmatpush1.msra.mxu0 0.0
  %1447 = vmatprep.subr.mxu0 0.0
  %1448 = vmatpush1.msra.mxu0 0.0
  %1449 = vmatprep.subr.mxu0 0.0
  %1450 = vmatpush1.msra.mxu0 0.0
  %1451 = vmatprep.subr.mxu0 0.0
  %1452 = vmatpush1.msra.mxu0 0.0
  %1453 = vmatprep.subr.mxu0 0.0
  %1454 = vmatpush1.msra.mxu0 0.0
  %1455 = vmatprep.subr.mxu0 0.0
  %1456 = vmatpush1.msra.mxu0 0.0
  %1457 = vmatprep.subr.mxu0 0.0
  %1458 = vmatpush1.msra.mxu0 0.0
  %1459 = vmatprep.subr.mxu0 0.0
  %1460 = vmatpush1.msra.mxu0 0.0
  %1461 = vmatprep.subr.mxu0 0.0
  %1462 = vmatpush1.msra.mxu0 0.0
  %1463 = vmatprep.subr.mxu0 0.0
  %1464 = vmatpush1.msra.mxu0 0.0
  %1465 = vmatprep.subr.mxu0 0.0
  %1466 = vmatpush1.msra.mxu0 0.0
  %1467 = vmatprep.subr.mxu0 0.0
  %1468 = vmatpush1.msra.mxu0 0.0
  %1469 = vmatprep.subr.mxu0 0.0
  %1470 = vmatpush1.msra.mxu0 0.0
  %1471 = vmatprep.subr.mxu0 0.0
  %1472 = vmatpush1.msra.mxu0 0.0
  %1473 = vmatprep.subr.mxu0 0.0
  %1474 = vmatpush1.msra.mxu0 0.0
  %1475 = vmatprep.mubr.f32.mxu0 0.0
  %1476 = vmatmul.mubr.f32.gmra.mrb[0].mxu0 %v1409
  %v1477 = vpop.f32.mrb[0].mxu0
  %v1478 = vadd.f32 0.0, %v1477
  %v1479 = vpop.f32.mrb[0].mxu0
  %v1480 = vadd.f32 0.0, %v1479
  %1481 = vdwg.mxu0
  %v1483 = vsel %vm149, %v35, 0
  %1485 = vmatprep.subr.mxu0 %v86
  %1486 = vmatpush1.msra.mxu0 %v85
  %1487 = vmatprep.subr.mxu0 0.0
  %1488 = vmatpush1.msra.mxu0 0.0
  %1489 = vmatprep.subr.mxu0 0.0
  %1490 = vmatpush1.msra.mxu0 0.0
  %1491 = vmatprep.subr.mxu0 0.0
  %1492 = vmatpush1.msra.mxu0 0.0
  %1493 = vmatprep.subr.mxu0 0.0
  %1494 = vmatpush1.msra.mxu0 0.0
  %1495 = vmatprep.subr.mxu0 0.0
  %1496 = vmatpush1.msra.mxu0 0.0
  %1497 = vmatprep.subr.mxu0 0.0
  %1498 = vmatpush1.msra.mxu0 0.0
  %1499 = vmatprep.subr.mxu0 0.0
  %1500 = vmatpush1.msra.mxu0 0.0
  %1501 = vmatprep.subr.mxu0 0.0
  %1502 = vmatpush1.msra.mxu0 0.0
  %1503 = vmatprep.subr.mxu0 0.0
  %1504 = vmatpush1.msra.mxu0 0.0
  %1505 = vmatprep.subr.mxu0 0.0
  %1506 = vmatpush1.msra.mxu0 0.0
  %1507 = vmatprep.subr.mxu0 0.0
  %1508 = vmatpush1.msra.mxu0 0.0
  %1509 = vmatprep.subr.mxu0 0.0
  %1510 = vmatpush1.msra.mxu0 0.0
  %1511 = vmatprep.subr.mxu0 0.0
  %1512 = vmatpush1.msra.mxu0 0.0
  %1513 = vmatprep.subr.mxu0 0.0
  %1514 = vmatpush1.msra.mxu0 0.0
  %1515 = vmatprep.subr.mxu0 0.0
  %1516 = vmatpush1.msra.mxu0 0.0
  %1517 = vmatprep.subr.mxu0 0.0
  %1518 = vmatpush1.msra.mxu0 0.0
  %1519 = vmatprep.subr.mxu0 0.0
  %1520 = vmatpush1.msra.mxu0 0.0
  %1521 = vmatprep.subr.mxu0 0.0
  %1522 = vmatpush1.msra.mxu0 0.0
  %1523 = vmatprep.subr.mxu0 0.0
  %1524 = vmatpush1.msra.mxu0 0.0
  %1525 = vmatprep.subr.mxu0 0.0
  %1526 = vmatpush1.msra.mxu0 0.0
  %1527 = vmatprep.subr.mxu0 0.0
  %1528 = vmatpush1.msra.mxu0 0.0
  %1529 = vmatprep.subr.mxu0 0.0
  %1530 = vmatpush1.msra.mxu0 0.0
  %1531 = vmatprep.subr.mxu0 0.0
  %1532 = vmatpush1.msra.mxu0 0.0
  %1533 = vmatprep.subr.mxu0 0.0
  %1534 = vmatpush1.msra.mxu0 0.0
  %1535 = vmatprep.subr.mxu0 0.0
  %1536 = vmatpush1.msra.mxu0 0.0
  %1537 = vmatprep.subr.mxu0 0.0
  %1538 = vmatpush1.msra.mxu0 0.0
  %1539 = vmatprep.subr.mxu0 0.0
  %1540 = vmatpush1.msra.mxu0 0.0
  %1541 = vmatprep.subr.mxu0 0.0
  %1542 = vmatpush1.msra.mxu0 0.0
  %1543 = vmatprep.subr.mxu0 0.0
  %1544 = vmatpush1.msra.mxu0 0.0
  %1545 = vmatprep.subr.mxu0 0.0
  %1546 = vmatpush1.msra.mxu0 0.0
  %1547 = vmatprep.subr.mxu0 0.0
  %1548 = vmatpush1.msra.mxu0 0.0
  %1549 = vmatprep.mubr.f32.mxu0 0.0
  %1550 = vmatmul.mubr.f32.gmra.mrb[0].mxu0 %v1483
  %v1551 = vpop.f32.mrb[0].mxu0
  %v1552 = vadd.f32 0.0, %v1551
  %v1553 = vpop.f32.mrb[0].mxu0
  %v1554 = vadd.f32 0.0, %v1553
  %1555 = vdwg.mxu0
  %v1557 = vsel %vm149, %v36, 0
  %1559 = vmatprep.subr.mxu0 %v88
  %1560 = vmatpush1.msra.mxu0 %v87
  %1561 = vmatprep.subr.mxu0 0.0
  %1562 = vmatpush1.msra.mxu0 0.0
  %1563 = vmatprep.subr.mxu0 0.0
  %1564 = vmatpush1.msra.mxu0 0.0
  %1565 = vmatprep.subr.mxu0 0.0
  %1566 = vmatpush1.msra.mxu0 0.0
  %1567 = vmatprep.subr.mxu0 0.0
  %1568 = vmatpush1.msra.mxu0 0.0
  %1569 = vmatprep.subr.mxu0 0.0
  %1570 = vmatpush1.msra.mxu0 0.0
  %1571 = vmatprep.subr.mxu0 0.0
  %1572 = vmatpush1.msra.mxu0 0.0
  %1573 = vmatprep.subr.mxu0 0.0
  %1574 = vmatpush1.msra.mxu0 0.0
  %1575 = vmatprep.subr.mxu0 0.0
  %1576 = vmatpush1.msra.mxu0 0.0
  %1577 = vmatprep.subr.mxu0 0.0
  %1578 = vmatpush1.msra.mxu0 0.0
  %1579 = vmatprep.subr.mxu0 0.0
  %1580 = vmatpush1.msra.mxu0 0.0
  %1581 = vmatprep.subr.mxu0 0.0
  %1582 = vmatpush1.msra.mxu0 0.0
  %1583 = vmatprep.subr.mxu0 0.0
  %1584 = vmatpush1.msra.mxu0 0.0
  %1585 = vmatprep.subr.mxu0 0.0
  %1586 = vmatpush1.msra.mxu0 0.0
  %1587 = vmatprep.subr.mxu0 0.0
  %1588 = vmatpush1.msra.mxu0 0.0
  %1589 = vmatprep.subr.mxu0 0.0
  %1590 = vmatpush1.msra.mxu0 0.0
  %1591 = vmatprep.subr.mxu0 0.0
  %1592 = vmatpush1.msra.mxu0 0.0
  %1593 = vmatprep.subr.mxu0 0.0
  %1594 = vmatpush1.msra.mxu0 0.0
  %1595 = vmatprep.subr.mxu0 0.0
  %1596 = vmatpush1.msra.mxu0 0.0
  %1597 = vmatprep.subr.mxu0 0.0
  %1598 = vmatpush1.msra.mxu0 0.0
  %1599 = vmatprep.subr.mxu0 0.0
  %1600 = vmatpush1.msra.mxu0 0.0
  %1601 = vmatprep.subr.mxu0 0.0
  %1602 = vmatpush1.msra.mxu0 0.0
  %1603 = vmatprep.subr.mxu0 0.0
  %1604 = vmatpush1.msra.mxu0 0.0
  %1605 = vmatprep.subr.mxu0 0.0
  %1606 = vmatpush1.msra.mxu0 0.0
  %1607 = vmatprep.subr.mxu0 0.0
  %1608 = vmatpush1.msra.mxu0 0.0
  %1609 = vmatprep.subr.mxu0 0.0
  %1610 = vmatpush1.msra.mxu0 0.0
  %1611 = vmatprep.subr.mxu0 0.0
  %1612 = vmatpush1.msra.mxu0 0.0
  %1613 = vmatprep.subr.mxu0 0.0
  %1614 = vmatpush1.msra.mxu0 0.0
  %1615 = vmatprep.subr.mxu0 0.0
  %1616 = vmatpush1.msra.mxu0 0.0
  %1617 = vmatprep.subr.mxu0 0.0
  %1618 = vmatpush1.msra.mxu0 0.0
  %1619 = vmatprep.subr.mxu0 0.0
  %1620 = vmatpush1.msra.mxu0 0.0
  %1621 = vmatprep.subr.mxu0 0.0
  %1622 = vmatpush1.msra.mxu0 0.0
  %1623 = vmatprep.mubr.f32.mxu0 0.0
  %1624 = vmatmul.mubr.f32.gmra.mrb[0].mxu0 %v1557
  %v1625 = vpop.f32.mrb[0].mxu0
  %v1626 = vadd.f32 0.0, %v1625
  %v1627 = vpop.f32.mrb[0].mxu0
  %v1628 = vadd.f32 0.0, %v1627
  %1629 = vdwg.mxu0
  %v1631 = vsel %vm149, %v37, 0
  %1633 = vmatprep.subr.mxu0 %v90
  %1634 = vmatpush1.msra.mxu0 %v89
  %1635 = vmatprep.subr.mxu0 0.0
  %1636 = vmatpush1.msra.mxu0 0.0
  %1637 = vmatprep.subr.mxu0 0.0
  %1638 = vmatpush1.msra.mxu0 0.0
  %1639 = vmatprep.subr.mxu0 0.0
  %1640 = vmatpush1.msra.mxu0 0.0
  %1641 = vmatprep.subr.mxu0 0.0
  %1642 = vmatpush1.msra.mxu0 0.0
  %1643 = vmatprep.subr.mxu0 0.0
  %1644 = vmatpush1.msra.mxu0 0.0
  %1645 = vmatprep.subr.mxu0 0.0
  %1646 = vmatpush1.msra.mxu0 0.0
  %1647 = vmatprep.subr.mxu0 0.0
  %1648 = vmatpush1.msra.mxu0 0.0
  %1649 = vmatprep.subr.mxu0 0.0
  %1650 = vmatpush1.msra.mxu0 0.0
  %1651 = vmatprep.subr.mxu0 0.0
  %1652 = vmatpush1.msra.mxu0 0.0
  %1653 = vmatprep.subr.mxu0 0.0
  %1654 = vmatpush1.msra.mxu0 0.0
  %1655 = vmatprep.subr.mxu0 0.0
  %1656 = vmatpush1.msra.mxu0 0.0
  %1657 = vmatprep.subr.mxu0 0.0
  %1658 = vmatpush1.msra.mxu0 0.0
  %1659 = vmatprep.subr.mxu0 0.0
  %1660 = vmatpush1.msra.mxu0 0.0
  %1661 = vmatprep.subr.mxu0 0.0
  %1662 = vmatpush1.msra.mxu0 0.0
  %1663 = vmatprep.subr.mxu0 0.0
  %1664 = vmatpush1.msra.mxu0 0.0
  %1665 = vmatprep.subr.mxu0 0.0
  %1666 = vmatpush1.msra.mxu0 0.0
  %1667 = vmatprep.subr.mxu0 0.0
  %1668 = vmatpush1.msra.mxu0 0.0
  %1669 = vmatprep.subr.mxu0 0.0
  %1670 = vmatpush1.msra.mxu0 0.0
  %1671 = vmatprep.subr.mxu0 0.0
  %1672 = vmatpush1.msra.mxu0 0.0
  %1673 = vmatprep.subr.mxu0 0.0
  %1674 = vmatpush1.msra.mxu0 0.0
  %1675 = vmatprep.subr.mxu0 0.0
  %1676 = vmatpush1.msra.mxu0 0.0
  %1677 = vmatprep.subr.mxu0 0.0
  %1678 = vmatpush1.msra.mxu0 0.0
  %1679 = vmatprep.subr.mxu0 0.0
  %1680 = vmatpush1.msra.mxu0 0.0
  %1681 = vmatprep.subr.mxu0 0.0
  %1682 = vmatpush1.msra.mxu0 0.0
  %1683 = vmatprep.subr.mxu0 0.0
  %1684 = vmatpush1.msra.mxu0 0.0
  %1685 = vmatprep.subr.mxu0 0.0
  %1686 = vmatpush1.msra.mxu0 0.0
  %1687 = vmatprep.subr.mxu0 0.0
  %1688 = vmatpush1.msra.mxu0 0.0
  %1689 = vmatprep.subr.mxu0 0.0
  %1690 = vmatpush1.msra.mxu0 0.0
  %1691 = vmatprep.subr.mxu0 0.0
  %1692 = vmatpush1.msra.mxu0 0.0
  %1693 = vmatprep.subr.mxu0 0.0
  %1694 = vmatpush1.msra.mxu0 0.0
  %1695 = vmatprep.subr.mxu0 0.0
  %1696 = vmatpush1.msra.mxu0 0.0
  %1697 = vmatprep.mubr.f32.mxu0 0.0
  %1698 = vmatmul.mubr.f32.gmra.mrb[0].mxu0 %v1631
  %v1699 = vpop.f32.mrb[0].mxu0
  %v1700 = vadd.f32 0.0, %v1699
  %v1701 = vpop.f32.mrb[0].mxu0
  %v1702 = vadd.f32 0.0, %v1701
  %1703 = vdwg.mxu0
  %v1705 = vsel %vm149, %v38, 0
  %1707 = vmatprep.subr.mxu0 %v92
  %1708 = vmatpush1.msra.mxu0 %v91
  %1709 = vmatprep.subr.mxu0 0.0
  %1710 = vmatpush1.msra.mxu0 0.0
  %1711 = vmatprep.subr.mxu0 0.0
  %1712 = vmatpush1.msra.mxu0 0.0
  %1713 = vmatprep.subr.mxu0 0.0
  %1714 = vmatpush1.msra.mxu0 0.0
  %1715 = vmatprep.subr.mxu0 0.0
  %1716 = vmatpush1.msra.mxu0 0.0
  %1717 = vmatprep.subr.mxu0 0.0
  %1718 = vmatpush1.msra.mxu0 0.0
  %1719 = vmatprep.subr.mxu0 0.0
  %1720 = vmatpush1.msra.mxu0 0.0
  %1721 = vmatprep.subr.mxu0 0.0
  %1722 = vmatpush1.msra.mxu0 0.0
  %1723 = vmatprep.subr.mxu0 0.0
  %1724 = vmatpush1.msra.mxu0 0.0
  %1725 = vmatprep.subr.mxu0 0.0
  %1726 = vmatpush1.msra.mxu0 0.0
  %1727 = vmatprep.subr.mxu0 0.0
  %1728 = vmatpush1.msra.mxu0 0.0
  %1729 = vmatprep.subr.mxu0 0.0
  %1730 = vmatpush1.msra.mxu0 0.0
  %1731 = vmatprep.subr.mxu0 0.0
  %1732 = vmatpush1.msra.mxu0 0.0
  %1733 = vmatprep.subr.mxu0 0.0
  %1734 = vmatpush1.msra.mxu0 0.0
  %1735 = vmatprep.subr.mxu0 0.0
  %1736 = vmatpush1.msra.mxu0 0.0
  %1737 = vmatprep.subr.mxu0 0.0
  %1738 = vmatpush1.msra.mxu0 0.0
  %1739 = vmatprep.subr.mxu0 0.0
  %1740 = vmatpush1.msra.mxu0 0.0
  %1741 = vmatprep.subr.mxu0 0.0
  %1742 = vmatpush1.msra.mxu0 0.0
  %1743 = vmatprep.subr.mxu0 0.0
  %1744 = vmatpush1.msra.mxu0 0.0
  %1745 = vmatprep.subr.mxu0 0.0
  %1746 = vmatpush1.msra.mxu0 0.0
  %1747 = vmatprep.subr.mxu0 0.0
  %1748 = vmatpush1.msra.mxu0 0.0
  %1749 = vmatprep.subr.mxu0 0.0
  %1750 = vmatpush1.msra.mxu0 0.0
  %1751 = vmatprep.subr.mxu0 0.0
  %1752 = vmatpush1.msra.mxu0 0.0
  %1753 = vmatprep.subr.mxu0 0.0
  %1754 = vmatpush1.msra.mxu0 0.0
  %1755 = vmatprep.subr.mxu0 0.0
  %1756 = vmatpush1.msra.mxu0 0.0
  %1757 = vmatprep.subr.mxu0 0.0
  %1758 = vmatpush1.msra.mxu0 0.0
  %1759 = vmatprep.subr.mxu0 0.0
  %1760 = vmatpush1.msra.mxu0 0.0
  %1761 = vmatprep.subr.mxu0 0.0
  %1762 = vmatpush1.msra.mxu0 0.0
  %1763 = vmatprep.subr.mxu0 0.0
  %1764 = vmatpush1.msra.mxu0 0.0
  %1765 = vmatprep.subr.mxu0 0.0
  %1766 = vmatpush1.msra.mxu0 0.0
  %1767 = vmatprep.subr.mxu0 0.0
  %1768 = vmatpush1.msra.mxu0 0.0
  %1769 = vmatprep.subr.mxu0 0.0
  %1770 = vmatpush1.msra.mxu0 0.0
  %1771 = vmatprep.mubr.f32.mxu0 0.0
  %1772 = vmatmul.mubr.f32.gmra.mrb[0].mxu0 %v1705
  %v1773 = vpop.f32.mrb[0].mxu0
  %v1774 = vadd.f32 0.0, %v1773
  %v1775 = vpop.f32.mrb[0].mxu0
  %v1776 = vadd.f32 0.0, %v1775
  %1777 = vdwg.mxu0
  %v1779 = vsel %vm149, %v39, 0
  %1781 = vmatprep.subr.mxu0 %v94
  %1782 = vmatpush1.msra.mxu0 %v93
  %1783 = vmatprep.subr.mxu0 0.0
  %1784 = vmatpush1.msra.mxu0 0.0
  %1785 = vmatprep.subr.mxu0 0.0
  %1786 = vmatpush1.msra.mxu0 0.0
  %1787 = vmatprep.subr.mxu0 0.0
  %1788 = vmatpush1.msra.mxu0 0.0
  %1789 = vmatprep.subr.mxu0 0.0
  %1790 = vmatpush1.msra.mxu0 0.0
  %1791 = vmatprep.subr.mxu0 0.0
  %1792 = vmatpush1.msra.mxu0 0.0
  %1793 = vmatprep.subr.mxu0 0.0
  %1794 = vmatpush1.msra.mxu0 0.0
  %1795 = vmatprep.subr.mxu0 0.0
  %1796 = vmatpush1.msra.mxu0 0.0
  %1797 = vmatprep.subr.mxu0 0.0
  %1798 = vmatpush1.msra.mxu0 0.0
  %1799 = vmatprep.subr.mxu0 0.0
  %1800 = vmatpush1.msra.mxu0 0.0
  %1801 = vmatprep.subr.mxu0 0.0
  %1802 = vmatpush1.msra.mxu0 0.0
  %1803 = vmatprep.subr.mxu0 0.0
  %1804 = vmatpush1.msra.mxu0 0.0
  %1805 = vmatprep.subr.mxu0 0.0
  %1806 = vmatpush1.msra.mxu0 0.0
  %1807 = vmatprep.subr.mxu0 0.0
  %1808 = vmatpush1.msra.mxu0 0.0
  %1809 = vmatprep.subr.mxu0 0.0
  %1810 = vmatpush1.msra.mxu0 0.0
  %1811 = vmatprep.subr.mxu0 0.0
  %1812 = vmatpush1.msra.mxu0 0.0
  %1813 = vmatprep.subr.mxu0 0.0
  %1814 = vmatpush1.msra.mxu0 0.0
  %1815 = vmatprep.subr.mxu0 0.0
  %1816 = vmatpush1.msra.mxu0 0.0
  %1817 = vmatprep.subr.mxu0 0.0
  %1818 = vmatpush1.msra.mxu0 0.0
  %1819 = vmatprep.subr.mxu0 0.0
  %1820 = vmatpush1.msra.mxu0 0.0
  %1821 = vmatprep.subr.mxu0 0.0
  %1822 = vmatpush1.msra.mxu0 0.0
  %1823 = vmatprep.subr.mxu0 0.0
  %1824 = vmatpush1.msra.mxu0 0.0
  %1825 = vmatprep.subr.mxu0 0.0
  %1826 = vmatpush1.msra.mxu0 0.0
  %1827 = vmatprep.subr.mxu0 0.0
  %1828 = vmatpush1.msra.mxu0 0.0
  %1829 = vmatprep.subr.mxu0 0.0
  %1830 = vmatpush1.msra.mxu0 0.0
  %1831 = vmatprep.subr.mxu0 0.0
  %1832 = vmatpush1.msra.mxu0 0.0
  %1833 = vmatprep.subr.mxu0 0.0
  %1834 = vmatpush1.msra.mxu0 0.0
  %1835 = vmatprep.subr.mxu0 0.0
  %1836 = vmatpush1.msra.mxu0 0.0
  %1837 = vmatprep.subr.mxu0 0.0
  %1838 = vmatpush1.msra.mxu0 0.0
  %1839 = vmatprep.subr.mxu0 0.0
  %1840 = vmatpush1.msra.mxu0 0.0
  %1841 = vmatprep.subr.mxu0 0.0
  %1842 = vmatpush1.msra.mxu0 0.0
  %1843 = vmatprep.subr.mxu0 0.0
  %1844 = vmatpush1.msra.mxu0 0.0
  %1845 = vmatprep.mubr.f32.mxu0 0.0
  %1846 = vmatmul.mubr.f32.gmra.mrb[0].mxu0 %v1779
  %v1847 = vpop.f32.mrb[0].mxu0
  %v1848 = vadd.f32 0.0, %v1847
  %v1849 = vpop.f32.mrb[0].mxu0
  %v1850 = vadd.f32 0.0, %v1849
  %1851 = vdwg.mxu0
  %v1853 = vsel %vm149, %v40, 0
  %1855 = vmatprep.subr.mxu0 %v96
  %1856 = vmatpush1.msra.mxu0 %v95
  %1857 = vmatprep.subr.mxu0 0.0
  %1858 = vmatpush1.msra.mxu0 0.0
  %1859 = vmatprep.subr.mxu0 0.0
  %1860 = vmatpush1.msra.mxu0 0.0
  %1861 = vmatprep.subr.mxu0 0.0
  %1862 = vmatpush1.msra.mxu0 0.0
  %1863 = vmatprep.subr.mxu0 0.0
  %1864 = vmatpush1.msra.mxu0 0.0
  %1865 = vmatprep.subr.mxu0 0.0
  %1866 = vmatpush1.msra.mxu0 0.0
  %1867 = vmatprep.subr.mxu0 0.0
  %1868 = vmatpush1.msra.mxu0 0.0
  %1869 = vmatprep.subr.mxu0 0.0
  %1870 = vmatpush1.msra.mxu0 0.0
  %1871 = vmatprep.subr.mxu0 0.0
  %1872 = vmatpush1.msra.mxu0 0.0
  %1873 = vmatprep.subr.mxu0 0.0
  %1874 = vmatpush1.msra.mxu0 0.0
  %1875 = vmatprep.subr.mxu0 0.0
  %1876 = vmatpush1.msra.mxu0 0.0
  %1877 = vmatprep.subr.mxu0 0.0
  %1878 = vmatpush1.msra.mxu0 0.0
  %1879 = vmatprep.subr.mxu0 0.0
  %1880 = vmatpush1.msra.mxu0 0.0
  %1881 = vmatprep.subr.mxu0 0.0
  %1882 = vmatpush1.msra.mxu0 0.0
  %1883 = vmatprep.subr.mxu0 0.0
  %1884 = vmatpush1.msra.mxu0 0.0
  %1885 = vmatprep.subr.mxu0 0.0
  %1886 = vmatpush1.msra.mxu0 0.0
  %1887 = vmatprep.subr.mxu0 0.0
  %1888 = vmatpush1.msra.mxu0 0.0
  %1889 = vmatprep.subr.mxu0 0.0
  %1890 = vmatpush1.msra.mxu0 0.0
  %1891 = vmatprep.subr.mxu0 0.0
  %1892 = vmatpush1.msra.mxu0 0.0
  %1893 = vmatprep.subr.mxu0 0.0
  %1894 = vmatpush1.msra.mxu0 0.0
  %1895 = vmatprep.subr.mxu0 0.0
  %1896 = vmatpush1.msra.mxu0 0.0
  %1897 = vmatprep.subr.mxu0 0.0
  %1898 = vmatpush1.msra.mxu0 0.0
  %1899 = vmatprep.subr.mxu0 0.0
  %1900 = vmatpush1.msra.mxu0 0.0
  %1901 = vmatprep.subr.mxu0 0.0
  %1902 = vmatpush1.msra.mxu0 0.0
  %1903 = vmatprep.subr.mxu0 0.0
  %1904 = vmatpush1.msra.mxu0 0.0
  %1905 = vmatprep.subr.mxu0 0.0
  %1906 = vmatpush1.msra.mxu0 0.0
  %1907 = vmatprep.subr.mxu0 0.0
  %1908 = vmatpush1.msra.mxu0 0.0
  %1909 = vmatprep.subr.mxu0 0.0
  %1910 = vmatpush1.msra.mxu0 0.0
  %1911 = vmatprep.subr.mxu0 0.0
  %1912 = vmatpush1.msra.mxu0 0.0
  %1913 = vmatprep.subr.mxu0 0.0
  %1914 = vmatpush1.msra.mxu0 0.0
  %1915 = vmatprep.subr.mxu0 0.0
  %1916 = vmatpush1.msra.mxu0 0.0
  %1917 = vmatprep.subr.mxu0 0.0
  %1918 = vmatpush1.msra.mxu0 0.0
  %1919 = vmatprep.mubr.f32.mxu0 0.0
  %1920 = vmatmul.mubr.f32.gmra.mrb[0].mxu0 %v1853
  %v1921 = vpop.f32.mrb[0].mxu0
  %v1922 = vadd.f32 0.0, %v1921
  %v1923 = vpop.f32.mrb[0].mxu0
  %v1924 = vadd.f32 0.0, %v1923
  %1925 = vdwg.mxu0
  %v1927 = vsel %vm149, %v41, 0
  %1929 = vmatprep.subr.mxu0 %v98
  %1930 = vmatpush1.msra.mxu0 %v97
  %1931 = vmatprep.subr.mxu0 0.0
  %1932 = vmatpush1.msra.mxu0 0.0
  %1933 = vmatprep.subr.mxu0 0.0
  %1934 = vmatpush1.msra.mxu0 0.0
  %1935 = vmatprep.subr.mxu0 0.0
  %1936 = vmatpush1.msra.mxu0 0.0
  %1937 = vmatprep.subr.mxu0 0.0
  %1938 = vmatpush1.msra.mxu0 0.0
  %1939 = vmatprep.subr.mxu0 0.0
  %1940 = vmatpush1.msra.mxu0 0.0
  %1941 = vmatprep.subr.mxu0 0.0
  %1942 = vmatpush1.msra.mxu0 0.0
  %1943 = vmatprep.subr.mxu0 0.0
  %1944 = vmatpush1.msra.mxu0 0.0
  %1945 = vmatprep.subr.mxu0 0.0
  %1946 = vmatpush1.msra.mxu0 0.0
  %1947 = vmatprep.subr.mxu0 0.0
  %1948 = vmatpush1.msra.mxu0 0.0
  %1949 = vmatprep.subr.mxu0 0.0
  %1950 = vmatpush1.msra.mxu0 0.0
  %1951 = vmatprep.subr.mxu0 0.0
  %1952 = vmatpush1.msra.mxu0 0.0
  %1953 = vmatprep.subr.mxu0 0.0
  %1954 = vmatpush1.msra.mxu0 0.0
  %1955 = vmatprep.subr.mxu0 0.0
  %1956 = vmatpush1.msra.mxu0 0.0
  %1957 = vmatprep.subr.mxu0 0.0
  %1958 = vmatpush1.msra.mxu0 0.0
  %1959 = vmatprep.subr.mxu0 0.0
  %1960 = vmatpush1.msra.mxu0 0.0
  %1961 = vmatprep.subr.mxu0 0.0
  %1962 = vmatpush1.msra.mxu0 0.0
  %1963 = vmatprep.subr.mxu0 0.0
  %1964 = vmatpush1.msra.mxu0 0.0
  %1965 = vmatprep.subr.mxu0 0.0
  %1966 = vmatpush1.msra.mxu0 0.0
  %1967 = vmatprep.subr.mxu0 0.0
  %1968 = vmatpush1.msra.mxu0 0.0
  %1969 = vmatprep.subr.mxu0 0.0
  %1970 = vmatpush1.msra.mxu0 0.0
  %1971 = vmatprep.subr.mxu0 0.0
  %1972 = vmatpush1.msra.mxu0 0.0
  %1973 = vmatprep.subr.mxu0 0.0
  %1974 = vmatpush1.msra.mxu0 0.0
  %1975 = vmatprep.subr.mxu0 0.0
  %1976 = vmatpush1.msra.mxu0 0.0
  %1977 = vmatprep.subr.mxu0 0.0
  %1978 = vmatpush1.msra.mxu0 0.0
  %1979 = vmatprep.subr.mxu0 0.0
  %1980 = vmatpush1.msra.mxu0 0.0
  %1981 = vmatprep.subr.mxu0 0.0
  %1982 = vmatpush1.msra.mxu0 0.0
  %1983 = vmatprep.subr.mxu0 0.0
  %1984 = vmatpush1.msra.mxu0 0.0
  %1985 = vmatprep.subr.mxu0 0.0
  %1986 = vmatpush1.msra.mxu0 0.0
  %1987 = vmatprep.subr.mxu0 0.0
  %1988 = vmatpush1.msra.mxu0 0.0
  %1989 = vmatprep.subr.mxu0 0.0
  %1990 = vmatpush1.msra.mxu0 0.0
  %1991 = vmatprep.subr.mxu0 0.0
  %1992 = vmatpush1.msra.mxu0 0.0
  %1993 = vmatprep.mubr.f32.mxu0 0.0
  %1994 = vmatmul.mubr.f32.gmra.mrb[0].mxu0 %v1927
  %v1995 = vpop.f32.mrb[0].mxu0
  %v1996 = vadd.f32 0.0, %v1995
  %v1997 = vpop.f32.mrb[0].mxu0
  %v1998 = vadd.f32 0.0, %v1997
  %1999 = vdwg.mxu0
  %v2001 = vsel %vm149, %v42, 0
  %2003 = vmatprep.subr.mxu0 %v100
  %2004 = vmatpush1.msra.mxu0 %v99
  %2005 = vmatprep.subr.mxu0 0.0
  %2006 = vmatpush1.msra.mxu0 0.0
  %2007 = vmatprep.subr.mxu0 0.0
  %2008 = vmatpush1.msra.mxu0 0.0
  %2009 = vmatprep.subr.mxu0 0.0
  %2010 = vmatpush1.msra.mxu0 0.0
  %2011 = vmatprep.subr.mxu0 0.0
  %2012 = vmatpush1.msra.mxu0 0.0
  %2013 = vmatprep.subr.mxu0 0.0
  %2014 = vmatpush1.msra.mxu0 0.0
  %2015 = vmatprep.subr.mxu0 0.0
  %2016 = vmatpush1.msra.mxu0 0.0
  %2017 = vmatprep.subr.mxu0 0.0
  %2018 = vmatpush1.msra.mxu0 0.0
  %2019 = vmatprep.subr.mxu0 0.0
  %2020 = vmatpush1.msra.mxu0 0.0
  %2021 = vmatprep.subr.mxu0 0.0
  %2022 = vmatpush1.msra.mxu0 0.0
  %2023 = vmatprep.subr.mxu0 0.0
  %2024 = vmatpush1.msra.mxu0 0.0
  %2025 = vmatprep.subr.mxu0 0.0
  %2026 = vmatpush1.msra.mxu0 0.0
  %2027 = vmatprep.subr.mxu0 0.0
  %2028 = vmatpush1.msra.mxu0 0.0
  %2029 = vmatprep.subr.mxu0 0.0
  %2030 = vmatpush1.msra.mxu0 0.0
  %2031 = vmatprep.subr.mxu0 0.0
  %2032 = vmatpush1.msra.mxu0 0.0
  %2033 = vmatprep.subr.mxu0 0.0
  %2034 = vmatpush1.msra.mxu0 0.0
  %2035 = vmatprep.subr.mxu0 0.0
  %2036 = vmatpush1.msra.mxu0 0.0
  %2037 = vmatprep.subr.mxu0 0.0
  %2038 = vmatpush1.msra.mxu0 0.0
  %2039 = vmatprep.subr.mxu0 0.0
  %2040 = vmatpush1.msra.mxu0 0.0
  %2041 = vmatprep.subr.mxu0 0.0
  %2042 = vmatpush1.msra.mxu0 0.0
  %2043 = vmatprep.subr.mxu0 0.0
  %2044 = vmatpush1.msra.mxu0 0.0
  %2045 = vmatprep.subr.mxu0 0.0
  %2046 = vmatpush1.msra.mxu0 0.0
  %2047 = vmatprep.subr.mxu0 0.0
  %2048 = vmatpush1.msra.mxu0 0.0
  %2049 = vmatprep.subr.mxu0 0.0
  %2050 = vmatpush1.msra.mxu0 0.0
  %2051 = vmatprep.subr.mxu0 0.0
  %2052 = vmatpush1.msra.mxu0 0.0
  %2053 = vmatprep.subr.mxu0 0.0
  %2054 = vmatpush1.msra.mxu0 0.0
  %2055 = vmatprep.subr.mxu0 0.0
  %2056 = vmatpush1.msra.mxu0 0.0
  %2057 = vmatprep.subr.mxu0 0.0
  %2058 = vmatpush1.msra.mxu0 0.0
  %2059 = vmatprep.subr.mxu0 0.0
  %2060 = vmatpush1.msra.mxu0 0.0
  %2061 = vmatprep.subr.mxu0 0.0
  %2062 = vmatpush1.msra.mxu0 0.0
  %2063 = vmatprep.subr.mxu0 0.0
  %2064 = vmatpush1.msra.mxu0 0.0
  %2065 = vmatprep.subr.mxu0 0.0
  %2066 = vmatpush1.msra.mxu0 0.0
  %2067 = vmatprep.mubr.f32.mxu0 0.0
  %2068 = vmatmul.mubr.f32.gmra.mrb[0].mxu0 %v2001
  %v2069 = vpop.f32.mrb[0].mxu0
  %v2070 = vadd.f32 0.0, %v2069
  %v2071 = vpop.f32.mrb[0].mxu0
  %v2072 = vadd.f32 0.0, %v2071
  %2073 = vdwg.mxu0
  %v2075 = vsel %vm149, %v43, 0
  %2077 = vmatprep.subr.mxu0 %v102
  %2078 = vmatpush1.msra.mxu0 %v101
  %2079 = vmatprep.subr.mxu0 0.0
  %2080 = vmatpush1.msra.mxu0 0.0
  %2081 = vmatprep.subr.mxu0 0.0
  %2082 = vmatpush1.msra.mxu0 0.0
  %2083 = vmatprep.subr.mxu0 0.0
  %2084 = vmatpush1.msra.mxu0 0.0
  %2085 = vmatprep.subr.mxu0 0.0
  %2086 = vmatpush1.msra.mxu0 0.0
  %2087 = vmatprep.subr.mxu0 0.0
  %2088 = vmatpush1.msra.mxu0 0.0
  %2089 = vmatprep.subr.mxu0 0.0
  %2090 = vmatpush1.msra.mxu0 0.0
  %2091 = vmatprep.subr.mxu0 0.0
  %2092 = vmatpush1.msra.mxu0 0.0
  %2093 = vmatprep.subr.mxu0 0.0
  %2094 = vmatpush1.msra.mxu0 0.0
  %2095 = vmatprep.subr.mxu0 0.0
  %2096 = vmatpush1.msra.mxu0 0.0
  %2097 = vmatprep.subr.mxu0 0.0
  %2098 = vmatpush1.msra.mxu0 0.0
  %2099 = vmatprep.subr.mxu0 0.0
  %2100 = vmatpush1.msra.mxu0 0.0
  %2101 = vmatprep.subr.mxu0 0.0
  %2102 = vmatpush1.msra.mxu0 0.0
  %2103 = vmatprep.subr.mxu0 0.0
  %2104 = vmatpush1.msra.mxu0 0.0
  %2105 = vmatprep.subr.mxu0 0.0
  %2106 = vmatpush1.msra.mxu0 0.0
  %2107 = vmatprep.subr.mxu0 0.0
  %2108 = vmatpush1.msra.mxu0 0.0
  %2109 = vmatprep.subr.mxu0 0.0
  %2110 = vmatpush1.msra.mxu0 0.0
  %2111 = vmatprep.subr.mxu0 0.0
  %2112 = vmatpush1.msra.mxu0 0.0
  %2113 = vmatprep.subr.mxu0 0.0
  %2114 = vmatpush1.msra.mxu0 0.0
  %2115 = vmatprep.subr.mxu0 0.0
  %2116 = vmatpush1.msra.mxu0 0.0
  %2117 = vmatprep.subr.mxu0 0.0
  %2118 = vmatpush1.msra.mxu0 0.0
  %2119 = vmatprep.subr.mxu0 0.0
  %2120 = vmatpush1.msra.mxu0 0.0
  %2121 = vmatprep.subr.mxu0 0.0
  %2122 = vmatpush1.msra.mxu0 0.0
  %2123 = vmatprep.subr.mxu0 0.0
  %2124 = vmatpush1.msra.mxu0 0.0
  %2125 = vmatprep.subr.mxu0 0.0
  %2126 = vmatpush1.msra.mxu0 0.0
  %2127 = vmatprep.subr.mxu0 0.0
  %2128 = vmatpush1.msra.mxu0 0.0
  %2129 = vmatprep.subr.mxu0 0.0
  %2130 = vmatpush1.msra.mxu0 0.0
  %2131 = vmatprep.subr.mxu0 0.0
  %2132 = vmatpush1.msra.mxu0 0.0
  %2133 = vmatprep.subr.mxu0 0.0
  %2134 = vmatpush1.msra.mxu0 0.0
  %2135 = vmatprep.subr.mxu0 0.0
  %2136 = vmatpush1.msra.mxu0 0.0
  %2137 = vmatprep.subr.mxu0 0.0
  %2138 = vmatpush1.msra.mxu0 0.0
  %2139 = vmatprep.subr.mxu0 0.0
  %2140 = vmatpush1.msra.mxu0 0.0
  %2141 = vmatprep.mubr.f32.mxu0 0.0
  %2142 = vmatmul.mubr.f32.gmra.mrb[0].mxu0 %v2075
  %v2143 = vpop.f32.mrb[0].mxu0
  %v2144 = vadd.f32 0.0, %v2143
  %v2145 = vpop.f32.mrb[0].mxu0
  %v2146 = vadd.f32 0.0, %v2145
  %2147 = vdwg.mxu0
  %v2149 = vsel %vm149, %v44, 0
  %2151 = vmatprep.subr.mxu0 %v104
  %2152 = vmatpush1.msra.mxu0 %v103
  %2153 = vmatprep.subr.mxu0 0.0
  %2154 = vmatpush1.msra.mxu0 0.0
  %2155 = vmatprep.subr.mxu0 0.0
  %2156 = vmatpush1.msra.mxu0 0.0
  %2157 = vmatprep.subr.mxu0 0.0
  %2158 = vmatpush1.msra.mxu0 0.0
  %2159 = vmatprep.subr.mxu0 0.0
  %2160 = vmatpush1.msra.mxu0 0.0
  %2161 = vmatprep.subr.mxu0 0.0
  %2162 = vmatpush1.msra.mxu0 0.0
  %2163 = vmatprep.subr.mxu0 0.0
  %2164 = vmatpush1.msra.mxu0 0.0
  %2165 = vmatprep.subr.mxu0 0.0
  %2166 = vmatpush1.msra.mxu0 0.0
  %2167 = vmatprep.subr.mxu0 0.0
  %2168 = vmatpush1.msra.mxu0 0.0
  %2169 = vmatprep.subr.mxu0 0.0
  %2170 = vmatpush1.msra.mxu0 0.0
  %2171 = vmatprep.subr.mxu0 0.0
  %2172 = vmatpush1.msra.mxu0 0.0
  %2173 = vmatprep.subr.mxu0 0.0
  %2174 = vmatpush1.msra.mxu0 0.0
  %2175 = vmatprep.subr.mxu0 0.0
  %2176 = vmatpush1.msra.mxu0 0.0
  %2177 = vmatprep.subr.mxu0 0.0
  %2178 = vmatpush1.msra.mxu0 0.0
  %2179 = vmatprep.subr.mxu0 0.0
  %2180 = vmatpush1.msra.mxu0 0.0
  %2181 = vmatprep.subr.mxu0 0.0
  %2182 = vmatpush1.msra.mxu0 0.0
  %2183 = vmatprep.subr.mxu0 0.0
  %2184 = vmatpush1.msra.mxu0 0.0
  %2185 = vmatprep.subr.mxu0 0.0
  %2186 = vmatpush1.msra.mxu0 0.0
  %2187 = vmatprep.subr.mxu0 0.0
  %2188 = vmatpush1.msra.mxu0 0.0
  %2189 = vmatprep.subr.mxu0 0.0
  %2190 = vmatpush1.msra.mxu0 0.0
  %2191 = vmatprep.subr.mxu0 0.0
  %2192 = vmatpush1.msra.mxu0 0.0
  %2193 = vmatprep.subr.mxu0 0.0
  %2194 = vmatpush1.msra.mxu0 0.0
  %2195 = vmatprep.subr.mxu0 0.0
  %2196 = vmatpush1.msra.mxu0 0.0
  %2197 = vmatprep.subr.mxu0 0.0
  %2198 = vmatpush1.msra.mxu0 0.0
  %2199 = vmatprep.subr.mxu0 0.0
  %2200 = vmatpush1.msra.mxu0 0.0
  %2201 = vmatprep.subr.mxu0 0.0
  %2202 = vmatpush1.msra.mxu0 0.0
  %2203 = vmatprep.subr.mxu0 0.0
  %2204 = vmatpush1.msra.mxu0 0.0
  %2205 = vmatprep.subr.mxu0 0.0
  %2206 = vmatpush1.msra.mxu0 0.0
  %2207 = vmatprep.subr.mxu0 0.0
  %2208 = vmatpush1.msra.mxu0 0.0
  %2209 = vmatprep.subr.mxu0 0.0
  %2210 = vmatpush1.msra.mxu0 0.0
  %2211 = vmatprep.subr.mxu0 0.0
  %2212 = vmatpush1.msra.mxu0 0.0
  %2213 = vmatprep.subr.mxu0 0.0
  %2214 = vmatpush1.msra.mxu0 0.0
  %2215 = vmatprep.mubr.f32.mxu0 0.0
  %2216 = vmatmul.mubr.f32.gmra.mrb[0].mxu0 %v2149
  %v2217 = vpop.f32.mrb[0].mxu0
  %v2218 = vadd.f32 0.0, %v2217
  %v2219 = vpop.f32.mrb[0].mxu0
  %v2220 = vadd.f32 0.0, %v2219
  %2221 = vdwg.mxu0
  %v2223 = vsel %vm149, %v45, 0
  %2225 = vmatprep.subr.mxu0 %v106
  %2226 = vmatpush1.msra.mxu0 %v105
  %2227 = vmatprep.subr.mxu0 0.0
  %2228 = vmatpush1.msra.mxu0 0.0
  %2229 = vmatprep.subr.mxu0 0.0
  %2230 = vmatpush1.msra.mxu0 0.0
  %2231 = vmatprep.subr.mxu0 0.0
  %2232 = vmatpush1.msra.mxu0 0.0
  %2233 = vmatprep.subr.mxu0 0.0
  %2234 = vmatpush1.msra.mxu0 0.0
  %2235 = vmatprep.subr.mxu0 0.0
  %2236 = vmatpush1.msra.mxu0 0.0
  %2237 = vmatprep.subr.mxu0 0.0
  %2238 = vmatpush1.msra.mxu0 0.0
  %2239 = vmatprep.subr.mxu0 0.0
  %2240 = vmatpush1.msra.mxu0 0.0
  %2241 = vmatprep.subr.mxu0 0.0
  %2242 = vmatpush1.msra.mxu0 0.0
  %2243 = vmatprep.subr.mxu0 0.0
  %2244 = vmatpush1.msra.mxu0 0.0
  %2245 = vmatprep.subr.mxu0 0.0
  %2246 = vmatpush1.msra.mxu0 0.0
  %2247 = vmatprep.subr.mxu0 0.0
  %2248 = vmatpush1.msra.mxu0 0.0
  %2249 = vmatprep.subr.mxu0 0.0
  %2250 = vmatpush1.msra.mxu0 0.0
  %2251 = vmatprep.subr.mxu0 0.0
  %2252 = vmatpush1.msra.mxu0 0.0
  %2253 = vmatprep.subr.mxu0 0.0
  %2254 = vmatpush1.msra.mxu0 0.0
  %2255 = vmatprep.subr.mxu0 0.0
  %2256 = vmatpush1.msra.mxu0 0.0
  %2257 = vmatprep.subr.mxu0 0.0
  %2258 = vmatpush1.msra.mxu0 0.0
  %2259 = vmatprep.subr.mxu0 0.0
  %2260 = vmatpush1.msra.mxu0 0.0
  %2261 = vmatprep.subr.mxu0 0.0
  %2262 = vmatpush1.msra.mxu0 0.0
  %2263 = vmatprep.subr.mxu0 0.0
  %2264 = vmatpush1.msra.mxu0 0.0
  %2265 = vmatprep.subr.mxu0 0.0
  %2266 = vmatpush1.msra.mxu0 0.0
  %2267 = vmatprep.subr.mxu0 0.0
  %2268 = vmatpush1.msra.mxu0 0.0
  %2269 = vmatprep.subr.mxu0 0.0
  %2270 = vmatpush1.msra.mxu0 0.0
  %2271 = vmatprep.subr.mxu0 0.0
  %2272 = vmatpush1.msra.mxu0 0.0
  %2273 = vmatprep.subr.mxu0 0.0
  %2274 = vmatpush1.msra.mxu0 0.0
  %2275 = vmatprep.subr.mxu0 0.0
  %2276 = vmatpush1.msra.mxu0 0.0
  %2277 = vmatprep.subr.mxu0 0.0
  %2278 = vmatpush1.msra.mxu0 0.0
  %2279 = vmatprep.subr.mxu0 0.0
  %2280 = vmatpush1.msra.mxu0 0.0
  %2281 = vmatprep.subr.mxu0 0.0
  %2282 = vmatpush1.msra.mxu0 0.0
  %2283 = vmatprep.subr.mxu0 0.0
  %2284 = vmatpush1.msra.mxu0 0.0
  %2285 = vmatprep.subr.mxu0 0.0
  %2286 = vmatpush1.msra.mxu0 0.0
  %2287 = vmatprep.subr.mxu0 0.0
  %2288 = vmatpush1.msra.mxu0 0.0
  %2289 = vmatprep.mubr.f32.mxu0 0.0
  %2290 = vmatmul.mubr.f32.gmra.mrb[0].mxu0 %v2223
  %v2291 = vpop.f32.mrb[0].mxu0
  %v2292 = vadd.f32 0.0, %v2291
  %v2293 = vpop.f32.mrb[0].mxu0
  %v2294 = vadd.f32 0.0, %v2293
  %2295 = vdwg.mxu0
  %v2297 = vsel %vm149, %v46, 0
  %2299 = vmatprep.subr.mxu0 %v108
  %2300 = vmatpush1.msra.mxu0 %v107
  %2301 = vmatprep.subr.mxu0 0.0
  %2302 = vmatpush1.msra.mxu0 0.0
  %2303 = vmatprep.subr.mxu0 0.0
  %2304 = vmatpush1.msra.mxu0 0.0
  %2305 = vmatprep.subr.mxu0 0.0
  %2306 = vmatpush1.msra.mxu0 0.0
  %2307 = vmatprep.subr.mxu0 0.0
  %2308 = vmatpush1.msra.mxu0 0.0
  %2309 = vmatprep.subr.mxu0 0.0
  %2310 = vmatpush1.msra.mxu0 0.0
  %2311 = vmatprep.subr.mxu0 0.0
  %2312 = vmatpush1.msra.mxu0 0.0
  %2313 = vmatprep.subr.mxu0 0.0
  %2314 = vmatpush1.msra.mxu0 0.0
  %2315 = vmatprep.subr.mxu0 0.0
  %2316 = vmatpush1.msra.mxu0 0.0
  %2317 = vmatprep.subr.mxu0 0.0
  %2318 = vmatpush1.msra.mxu0 0.0
  %2319 = vmatprep.subr.mxu0 0.0
  %2320 = vmatpush1.msra.mxu0 0.0
  %2321 = vmatprep.subr.mxu0 0.0
  %2322 = vmatpush1.msra.mxu0 0.0
  %2323 = vmatprep.subr.mxu0 0.0
  %2324 = vmatpush1.msra.mxu0 0.0
  %2325 = vmatprep.subr.mxu0 0.0
  %2326 = vmatpush1.msra.mxu0 0.0
  %2327 = vmatprep.subr.mxu0 0.0
  %2328 = vmatpush1.msra.mxu0 0.0
  %2329 = vmatprep.subr.mxu0 0.0
  %2330 = vmatpush1.msra.mxu0 0.0
  %2331 = vmatprep.subr.mxu0 0.0
  %2332 = vmatpush1.msra.mxu0 0.0
  %2333 = vmatprep.subr.mxu0 0.0
  %2334 = vmatpush1.msra.mxu0 0.0
  %2335 = vmatprep.subr.mxu0 0.0
  %2336 = vmatpush1.msra.mxu0 0.0
  %2337 = vmatprep.subr.mxu0 0.0
  %2338 = vmatpush1.msra.mxu0 0.0
  %2339 = vmatprep.subr.mxu0 0.0
  %2340 = vmatpush1.msra.mxu0 0.0
  %2341 = vmatprep.subr.mxu0 0.0
  %2342 = vmatpush1.msra.mxu0 0.0
  %2343 = vmatprep.subr.mxu0 0.0
  %2344 = vmatpush1.msra.mxu0 0.0
  %2345 = vmatprep.subr.mxu0 0.0
  %2346 = vmatpush1.msra.mxu0 0.0
  %2347 = vmatprep.subr.mxu0 0.0
  %2348 = vmatpush1.msra.mxu0 0.0
  %2349 = vmatprep.subr.mxu0 0.0
  %2350 = vmatpush1.msra.mxu0 0.0
  %2351 = vmatprep.subr.mxu0 0.0
  %2352 = vmatpush1.msra.mxu0 0.0
  %2353 = vmatprep.subr.mxu0 0.0
  %2354 = vmatpush1.msra.mxu0 0.0
  %2355 = vmatprep.subr.mxu0 0.0
  %2356 = vmatpush1.msra.mxu0 0.0
  %2357 = vmatprep.subr.mxu0 0.0
  %2358 = vmatpush1.msra.mxu0 0.0
  %2359 = vmatprep.subr.mxu0 0.0
  %2360 = vmatpush1.msra.mxu0 0.0
  %2361 = vmatprep.subr.mxu0 0.0
  %2362 = vmatpush1.msra.mxu0 0.0
  %2363 = vmatprep.mubr.f32.mxu0 0.0
  %2364 = vmatmul.mubr.f32.gmra.mrb[0].mxu0 %v2297
  %v2365 = vpop.f32.mrb[0].mxu0
  %v2366 = vadd.f32 0.0, %v2365
  %v2367 = vpop.f32.mrb[0].mxu0
  %v2368 = vadd.f32 0.0, %v2367
  %2369 = vdwg.mxu0
  %v2371 = vsel %vm149, %v47, 0
  %2373 = vmatprep.subr.mxu0 %v110
  %2374 = vmatpush1.msra.mxu0 %v109
  %2375 = vmatprep.subr.mxu0 0.0
  %2376 = vmatpush1.msra.mxu0 0.0
  %2377 = vmatprep.subr.mxu0 0.0
  %2378 = vmatpush1.msra.mxu0 0.0
  %2379 = vmatprep.subr.mxu0 0.0
  %2380 = vmatpush1.msra.mxu0 0.0
  %2381 = vmatprep.subr.mxu0 0.0
  %2382 = vmatpush1.msra.mxu0 0.0
  %2383 = vmatprep.subr.mxu0 0.0
  %2384 = vmatpush1.msra.mxu0 0.0
  %2385 = vmatprep.subr.mxu0 0.0
  %2386 = vmatpush1.msra.mxu0 0.0
  %2387 = vmatprep.subr.mxu0 0.0
  %2388 = vmatpush1.msra.mxu0 0.0
  %2389 = vmatprep.subr.mxu0 0.0
  %2390 = vmatpush1.msra.mxu0 0.0
  %2391 = vmatprep.subr.mxu0 0.0
  %2392 = vmatpush1.msra.mxu0 0.0
  %2393 = vmatprep.subr.mxu0 0.0
  %2394 = vmatpush1.msra.mxu0 0.0
  %2395 = vmatprep.subr.mxu0 0.0
  %2396 = vmatpush1.msra.mxu0 0.0
  %2397 = vmatprep.subr.mxu0 0.0
  %2398 = vmatpush1.msra.mxu0 0.0
  %2399 = vmatprep.subr.mxu0 0.0
  %2400 = vmatpush1.msra.mxu0 0.0
  %2401 = vmatprep.subr.mxu0 0.0
  %2402 = vmatpush1.msra.mxu0 0.0
  %2403 = vmatprep.subr.mxu0 0.0
  %2404 = vmatpush1.msra.mxu0 0.0
  %2405 = vmatprep.subr.mxu0 0.0
  %2406 = vmatpush1.msra.mxu0 0.0
  %2407 = vmatprep.subr.mxu0 0.0
  %2408 = vmatpush1.msra.mxu0 0.0
  %2409 = vmatprep.subr.mxu0 0.0
  %2410 = vmatpush1.msra.mxu0 0.0
  %2411 = vmatprep.subr.mxu0 0.0
  %2412 = vmatpush1.msra.mxu0 0.0
  %2413 = vmatprep.subr.mxu0 0.0
  %2414 = vmatpush1.msra.mxu0 0.0
  %2415 = vmatprep.subr.mxu0 0.0
  %2416 = vmatpush1.msra.mxu0 0.0
  %2417 = vmatprep.subr.mxu0 0.0
  %2418 = vmatpush1.msra.mxu0 0.0
  %2419 = vmatprep.subr.mxu0 0.0
  %2420 = vmatpush1.msra.mxu0 0.0
  %2421 = vmatprep.subr.mxu0 0.0
  %2422 = vmatpush1.msra.mxu0 0.0
  %2423 = vmatprep.subr.mxu0 0.0
  %2424 = vmatpush1.msra.mxu0 0.0
  %2425 = vmatprep.subr.mxu0 0.0
  %2426 = vmatpush1.msra.mxu0 0.0
  %2427 = vmatprep.subr.mxu0 0.0
  %2428 = vmatpush1.msra.mxu0 0.0
  %2429 = vmatprep.subr.mxu0 0.0
  %2430 = vmatpush1.msra.mxu0 0.0
  %2431 = vmatprep.subr.mxu0 0.0
  %2432 = vmatpush1.msra.mxu0 0.0
  %2433 = vmatprep.subr.mxu0 0.0
  %2434 = vmatpush1.msra.mxu0 0.0
  %2435 = vmatprep.subr.mxu0 0.0
  %2436 = vmatpush1.msra.mxu0 0.0
  %2437 = vmatprep.mubr.f32.mxu0 0.0
  %2438 = vmatmul.mubr.f32.gmra.mrb[0].mxu0 %v2371
  %v2439 = vpop.f32.mrb[0].mxu0
  %v2440 = vadd.f32 0.0, %v2439
  %v2441 = vpop.f32.mrb[0].mxu0
  %v2442 = vadd.f32 0.0, %v2441
  %2443 = vdwg.mxu0
  %v2445 = vsel %vm149, %v48, 0
  %2447 = vmatprep.subr.mxu0 %v112
  %2448 = vmatpush1.msra.mxu0 %v111
  %2449 = vmatprep.subr.mxu0 0.0
  %2450 = vmatpush1.msra.mxu0 0.0
  %2451 = vmatprep.subr.mxu0 0.0
  %2452 = vmatpush1.msra.mxu0 0.0
  %2453 = vmatprep.subr.mxu0 0.0
  %2454 = vmatpush1.msra.mxu0 0.0
  %2455 = vmatprep.subr.mxu0 0.0
  %2456 = vmatpush1.msra.mxu0 0.0
  %2457 = vmatprep.subr.mxu0 0.0
  %2458 = vmatpush1.msra.mxu0 0.0
  %2459 = vmatprep.subr.mxu0 0.0
  %2460 = vmatpush1.msra.mxu0 0.0
  %2461 = vmatprep.subr.mxu0 0.0
  %2462 = vmatpush1.msra.mxu0 0.0
  %2463 = vmatprep.subr.mxu0 0.0
  %2464 = vmatpush1.msra.mxu0 0.0
  %2465 = vmatprep.subr.mxu0 0.0
  %2466 = vmatpush1.msra.mxu0 0.0
  %2467 = vmatprep.subr.mxu0 0.0
  %2468 = vmatpush1.msra.mxu0 0.0
  %2469 = vmatprep.subr.mxu0 0.0
  %2470 = vmatpush1.msra.mxu0 0.0
  %2471 = vmatprep.subr.mxu0 0.0
  %2472 = vmatpush1.msra.mxu0 0.0
  %2473 = vmatprep.subr.mxu0 0.0
  %2474 = vmatpush1.msra.mxu0 0.0
  %2475 = vmatprep.subr.mxu0 0.0
  %2476 = vmatpush1.msra.mxu0 0.0
  %2477 = vmatprep.subr.mxu0 0.0
  %2478 = vmatpush1.msra.mxu0 0.0
  %2479 = vmatprep.subr.mxu0 0.0
  %2480 = vmatpush1.msra.mxu0 0.0
  %2481 = vmatprep.subr.mxu0 0.0
  %2482 = vmatpush1.msra.mxu0 0.0
  %2483 = vmatprep.subr.mxu0 0.0
  %2484 = vmatpush1.msra.mxu0 0.0
  %2485 = vmatprep.subr.mxu0 0.0
  %2486 = vmatpush1.msra.mxu0 0.0
  %2487 = vmatprep.subr.mxu0 0.0
  %2488 = vmatpush1.msra.mxu0 0.0
  %2489 = vmatprep.subr.mxu0 0.0
  %2490 = vmatpush1.msra.mxu0 0.0
  %2491 = vmatprep.subr.mxu0 0.0
  %2492 = vmatpush1.msra.mxu0 0.0
  %2493 = vmatprep.subr.mxu0 0.0
  %2494 = vmatpush1.msra.mxu0 0.0
  %2495 = vmatprep.subr.mxu0 0.0
  %2496 = vmatpush1.msra.mxu0 0.0
  %2497 = vmatprep.subr.mxu0 0.0
  %2498 = vmatpush1.msra.mxu0 0.0
  %2499 = vmatprep.subr.mxu0 0.0
  %2500 = vmatpush1.msra.mxu0 0.0
  %2501 = vmatprep.subr.mxu0 0.0
  %2502 = vmatpush1.msra.mxu0 0.0
  %2503 = vmatprep.subr.mxu0 0.0
  %2504 = vmatpush1.msra.mxu0 0.0
  %2505 = vmatprep.subr.mxu0 0.0
  %2506 = vmatpush1.msra.mxu0 0.0
  %2507 = vmatprep.subr.mxu0 0.0
  %2508 = vmatpush1.msra.mxu0 0.0
  %2509 = vmatprep.subr.mxu0 0.0
  %2510 = vmatpush1.msra.mxu0 0.0
  %2511 = vmatprep.mubr.f32.mxu0 0.0
  %2512 = vmatmul.mubr.f32.gmra.mrb[0].mxu0 %v2445
  %v2513 = vpop.f32.mrb[0].mxu0
  %v2514 = vadd.f32 0.0, %v2513
  %v2515 = vpop.f32.mrb[0].mxu0
  %v2516 = vadd.f32 0.0, %v2515
  %2517 = vdwg.mxu0
  %v2518 = vadd.f32 %v220, %v294
  %v2519 = vadd.f32 %v2518, %v368
  %v2520 = vadd.f32 %v2519, %v442
  %v2521 = vadd.f32 %v2520, %v516
  %v2522 = vadd.f32 %v2521, %v590
  %v2523 = vadd.f32 %v2522, %v664
  %v2524 = vadd.f32 %v2523, %v738
  %v2525 = vadd.f32 %v2524, %v812
  %v2526 = vadd.f32 %v2525, %v886
  %v2527 = vadd.f32 %v2526, %v960
  %v2528 = vadd.f32 %v2527, %v1034
  %v2529 = vadd.f32 %v2528, %v1108
  %v2530 = vadd.f32 %v2529, %v1182
  %v2531 = vadd.f32 %v2530, %v1256
  %v2532 = vadd.f32 %v2531, %v1330
  %v2533 = vadd.f32 %v2532, %v1404
  %v2534 = vadd.f32 %v2533, %v1478
  %v2535 = vadd.f32 %v2534, %v1552
  %v2536 = vadd.f32 %v2535, %v1626
  %v2537 = vadd.f32 %v2536, %v1700
  %v2538 = vadd.f32 %v2537, %v1774
  %v2539 = vadd.f32 %v2538, %v1848
  %v2540 = vadd.f32 %v2539, %v1922
  %v2541 = vadd.f32 %v2540, %v1996
  %v2542 = vadd.f32 %v2541, %v2070
  %v2543 = vadd.f32 %v2542, %v2144
  %v2544 = vadd.f32 %v2543, %v2218
  %v2545 = vadd.f32 %v2544, %v2292
  %v2546 = vadd.f32 %v2545, %v2366
  %v2547 = vadd.f32 %v2546, %v2440
  %v2548 = vadd.f32 %v2547, %v2514
  %v2549 = vadd.f32 %v222, %v296
  %v2550 = vadd.f32 %v2549, %v370
  %v2551 = vadd.f32 %v2550, %v444
  %v2552 = vadd.f32 %v2551, %v518
  %v2553 = vadd.f32 %v2552, %v592
  %v2554 = vadd.f32 %v2553, %v666
  %v2555 = vadd.f32 %v2554, %v740
  %v2556 = vadd.f32 %v2555, %v814
  %v2557 = vadd.f32 %v2556, %v888
  %v2558 = vadd.f32 %v2557, %v962
  %v2559 = vadd.f32 %v2558, %v1036
  %v2560 = vadd.f32 %v2559, %v1110
  %v2561 = vadd.f32 %v2560, %v1184
  %v2562 = vadd.f32 %v2561, %v1258
  %v2563 = vadd.f32 %v2562, %v1332
  %v2564 = vadd.f32 %v2563, %v1406
  %v2565 = vadd.f32 %v2564, %v1480
  %v2566 = vadd.f32 %v2565, %v1554
  %v2567 = vadd.f32 %v2566, %v1628
  %v2568 = vadd.f32 %v2567, %v1702
  %v2569 = vadd.f32 %v2568, %v1776
  %v2570 = vadd.f32 %v2569, %v1850
  %v2571 = vadd.f32 %v2570, %v1924
  %v2572 = vadd.f32 %v2571, %v1998
  %v2573 = vadd.f32 %v2572, %v2072
  %v2574 = vadd.f32 %v2573, %v2146
  %v2575 = vadd.f32 %v2574, %v2220
  %v2576 = vadd.f32 %v2575, %v2294
  %v2577 = vadd.f32 %v2576, %v2368
  %v2578 = vadd.f32 %v2577, %v2442
  %v2579 = vadd.f32 %v2578, %v2516
  %v2580 = vmul.f32 %v2548, 0.03125
  %v2581 = vmul.f32 %v2579, 0.03125
  %v2582 = vmul.f32 %v2580, %v2580
  %v2583 = vmul.f32 %v2581, %v2581
  %2584 = vmatprep.subr.mxu0 0.0
  %2585 = vmatpush1.msra.mxu0 %v113
  %2586 = vmatprep.subr.mxu0 0.0
  %2587 = vmatpush1.msra.mxu0 %v114
  %2588 = vmatprep.subr.mxu0 0.0
  %2589 = vmatpush1.msra.mxu0 %v115
  %2590 = vmatprep.subr.mxu0 0.0
  %2591 = vmatpush1.msra.mxu0 %v116
  %2592 = vmatprep.subr.mxu0 0.0
  %2593 = vmatpush1.msra.mxu0 %v117
  %2594 = vmatprep.subr.mxu0 0.0
  %2595 = vmatpush1.msra.mxu0 %v118
  %2596 = vmatprep.subr.mxu0 0.0
  %2597 = vmatpush1.msra.mxu0 %v119
  %2598 = vmatprep.subr.mxu0 0.0
  %2599 = vmatpush1.msra.mxu0 %v120
  %2600 = vmatprep.subr.mxu0 0.0
  %2601 = vmatpush1.msra.mxu0 %v121
  %2602 = vmatprep.subr.mxu0 0.0
  %2603 = vmatpush1.msra.mxu0 %v122
  %2604 = vmatprep.subr.mxu0 0.0
  %2605 = vmatpush1.msra.mxu0 %v123
  %2606 = vmatprep.subr.mxu0 0.0
  %2607 = vmatpush1.msra.mxu0 %v124
  %2608 = vmatprep.subr.mxu0 0.0
  %2609 = vmatpush1.msra.mxu0 %v125
  %2610 = vmatprep.subr.mxu0 0.0
  %2611 = vmatpush1.msra.mxu0 %v126
  %2612 = vmatprep.subr.mxu0 0.0
  %2613 = vmatpush1.msra.mxu0 %v127
  %2614 = vmatprep.subr.mxu0 0.0
  %2615 = vmatpush1.msra.mxu0 %v128
  %2616 = vmatprep.subr.mxu0 0.0
  %2617 = vmatpush1.msra.mxu0 %v129
  %2618 = vmatprep.subr.mxu0 0.0
  %2619 = vmatpush1.msra.mxu0 %v130
  %2620 = vmatprep.subr.mxu0 0.0
  %2621 = vmatpush1.msra.mxu0 %v131
  %2622 = vmatprep.subr.mxu0 0.0
  %2623 = vmatpush1.msra.mxu0 %v132
  %2624 = vmatprep.subr.mxu0 0.0
  %2625 = vmatpush1.msra.mxu0 %v133
  %2626 = vmatprep.subr.mxu0 0.0
  %2627 = vmatpush1.msra.mxu0 %v134
  %2628 = vmatprep.subr.mxu0 0.0
  %2629 = vmatpush1.msra.mxu0 %v135
  %2630 = vmatprep.subr.mxu0 0.0
  %2631 = vmatpush1.msra.mxu0 %v136
  %2632 = vmatprep.subr.mxu0 0.0
  %2633 = vmatpush1.msra.mxu0 %v137
  %2634 = vmatprep.subr.mxu0 0.0
  %2635 = vmatpush1.msra.mxu0 %v138
  %2636 = vmatprep.subr.mxu0 0.0
  %2637 = vmatpush1.msra.mxu0 %v139
  %2638 = vmatprep.subr.mxu0 0.0
  %2639 = vmatpush1.msra.mxu0 %v140
  %2640 = vmatprep.subr.mxu0 0.0
  %2641 = vmatpush1.msra.mxu0 %v141
  %2642 = vmatprep.subr.mxu0 0.0
  %2643 = vmatpush1.msra.mxu0 %v142
  %2644 = vmatprep.subr.mxu0 0.0
  %2645 = vmatpush1.msra.mxu0 %v143
  %2646 = vmatprep.subr.mxu0 0.0
  %2647 = vmatpush1.msra.mxu0 %v144
  %2648 = vmatprep.mubr.f32.mxu0 %v2583
  %2649 = vmatmul.mubr.f32.gmra.mrb[0].mxu0 %v2582
  %v2650 = vpop.f32.mrb[0].mxu0
  %v2651 = vadd.f32 0.0, %v2650
  %v2652 = vpop.f32.mrb[0].mxu0
  %2653 = vdwg.mxu0
  %vm2654 = vcmask 130048
  %v2656 = vsel %vm2654, %v2651, 0
  %2658 = vmatprep.subr.mxu0 %v146
  %2659 = vmatpush1.msra.mxu0 %v145
  %2660 = vmatprep.subr.mxu0 %v148
  %2661 = vmatpush1.msra.mxu0 %v147
  %2662 = vmatprep.subr.mxu0 0.0
  %2663 = vmatpush1.msra.mxu0 0.0
  %2664 = vmatprep.subr.mxu0 0.0
  %2665 = vmatpush1.msra.mxu0 0.0
  %2666 = vmatprep.subr.mxu0 0.0
  %2667 = vmatpush1.msra.mxu0 0.0
  %2668 = vmatprep.subr.mxu0 0.0
  %2669 = vmatpush1.msra.mxu0 0.0
  %2670 = vmatprep.subr.mxu0 0.0
  %2671 = vmatpush1.msra.mxu0 0.0
  %2672 = vmatprep.subr.mxu0 0.0
  %2673 = vmatpush1.msra.mxu0 0.0
  %2674 = vmatprep.subr.mxu0 0.0
  %2675 = vmatpush1.msra.mxu0 0.0
  %2676 = vmatprep.subr.mxu0 0.0
  %2677 = vmatpush1.msra.mxu0 0.0
  %2678 = vmatprep.subr.mxu0 0.0
  %2679 = vmatpush1.msra.mxu0 0.0
  %2680 = vmatprep.subr.mxu0 0.0
  %2681 = vmatpush1.msra.mxu0 0.0
  %2682 = vmatprep.subr.mxu0 0.0
  %2683 = vmatpush1.msra.mxu0 0.0
  %2684 = vmatprep.subr.mxu0 0.0
  %2685 = vmatpush1.msra.mxu0 0.0
  %2686 = vmatprep.subr.mxu0 0.0
  %2687 = vmatpush1.msra.mxu0 0.0
  %2688 = vmatprep.subr.mxu0 0.0
  %2689 = vmatpush1.msra.mxu0 0.0
  %2690 = vmatprep.subr.mxu0 0.0
  %2691 = vmatpush1.msra.mxu0 0.0
  %2692 = vmatprep.subr.mxu0 0.0
  %2693 = vmatpush1.msra.mxu0 0.0
  %2694 = vmatprep.subr.mxu0 0.0
  %2695 = vmatpush1.msra.mxu0 0.0
  %2696 = vmatprep.subr.mxu0 0.0
  %2697 = vmatpush1.msra.mxu0 0.0
  %2698 = vmatprep.subr.mxu0 0.0
  %2699 = vmatpush1.msra.mxu0 0.0
  %2700 = vmatprep.subr.mxu0 0.0
  %2701 = vmatpush1.msra.mxu0 0.0
  %2702 = vmatprep.subr.mxu0 0.0
  %2703 = vmatpush1.msra.mxu0 0.0
  %2704 = vmatprep.subr.mxu0 0.0
  %2705 = vmatpush1.msra.mxu0 0.0
  %2706 = vmatprep.subr.mxu0 0.0
  %2707 = vmatpush1.msra.mxu0 0.0
  %2708 = vmatprep.subr.mxu0 0.0
  %2709 = vmatpush1.msra.mxu0 0.0
  %2710 = vmatprep.subr.mxu0 0.0
  %2711 = vmatpush1.msra.mxu0 0.0
  %2712 = vmatprep.subr.mxu0 0.0
  %2713 = vmatpush1.msra.mxu0 0.0
  %2714 = vmatprep.subr.mxu0 0.0
  %2715 = vmatpush1.msra.mxu0 0.0
  %2716 = vmatprep.subr.mxu0 0.0
  %2717 = vmatpush1.msra.mxu0 0.0
  %2718 = vmatprep.subr.mxu0 0.0
  %2719 = vmatpush1.msra.mxu0 0.0
  %2720 = vmatprep.subr.mxu0 0.0
  %2721 = vmatpush1.msra.mxu0 0.0
  %2722 = vmatprep.mubr.f32.mxu0 0.0
  %2723 = vmatmul.mubr.f32.gmra.mrb[0].mxu0 %v2656
  %v2724 = vpop.f32.mrb[0].mxu0
  %v2725 = vadd.f32 0.0, %v2724
  %v2726 = vpop.f32.mrb[0].mxu0
  %v2727 = vadd.f32 0.0, %v2726
  %2728 = vdwg.mxu0
  %v2729 = vadd.f32 %v2725, 1.0
  %v2730 = vadd.f32 %v2727, 1.0
  %v2731 = vrcp.pop %v2729
  %v2732 = vrcp.pop %v2730
  %v2733 = vmul.f32 %v2725, %v2731
  %v2734 = vmul.f32 %v2727, %v2732
  %v2735 = vmul.f32 %v2580, %v2733
  %v2736 = vmul.f32 %v2581, %v2734
  %v2737 = vadd.f32 %v2725, 1e-12
  %v2738 = vadd.f32 %v2727, 1e-12
  %v2739 = vrsqrt.pop %v2737
  %v2740 = vrsqrt.pop %v2738
  %v2741 = vmul.f32 %v2735, %v2739
  %v2742 = vmul.f32 %v2736, %v2740
  %v2743 = vmul.f32 %v220, %v2741
  %v2744 = vmul.f32 %v222, %v2742
  %v2745 = vmul.f32 %v294, %v2741
  %v2746 = vmul.f32 %v296, %v2742
  %v2747 = vmul.f32 %v368, %v2741
  %v2748 = vmul.f32 %v370, %v2742
  %v2749 = vmul.f32 %v442, %v2741
  %v2750 = vmul.f32 %v444, %v2742
  %v2751 = vmul.f32 %v516, %v2741
  %v2752 = vmul.f32 %v518, %v2742
  %v2753 = vmul.f32 %v590, %v2741
  %v2754 = vmul.f32 %v592, %v2742
  %v2755 = vmul.f32 %v664, %v2741
  %v2756 = vmul.f32 %v666, %v2742
  %v2757 = vmul.f32 %v738, %v2741
  %v2758 = vmul.f32 %v740, %v2742
  %v2759 = vmul.f32 %v812, %v2741
  %v2760 = vmul.f32 %v814, %v2742
  %v2761 = vmul.f32 %v886, %v2741
  %v2762 = vmul.f32 %v888, %v2742
  %v2763 = vmul.f32 %v960, %v2741
  %v2764 = vmul.f32 %v962, %v2742
  %v2765 = vmul.f32 %v1034, %v2741
  %v2766 = vmul.f32 %v1036, %v2742
  %v2767 = vmul.f32 %v1108, %v2741
  %v2768 = vmul.f32 %v1110, %v2742
  %v2769 = vmul.f32 %v1182, %v2741
  %v2770 = vmul.f32 %v1184, %v2742
  %v2771 = vmul.f32 %v1256, %v2741
  %v2772 = vmul.f32 %v1258, %v2742
  %v2773 = vmul.f32 %v1330, %v2741
  %v2774 = vmul.f32 %v1332, %v2742
  %v2775 = vmul.f32 %v1404, %v2741
  %v2776 = vmul.f32 %v1406, %v2742
  %v2777 = vmul.f32 %v1478, %v2741
  %v2778 = vmul.f32 %v1480, %v2742
  %v2779 = vmul.f32 %v1552, %v2741
  %v2780 = vmul.f32 %v1554, %v2742
  %v2781 = vmul.f32 %v1626, %v2741
  %v2782 = vmul.f32 %v1628, %v2742
  %v2783 = vmul.f32 %v1700, %v2741
  %v2784 = vmul.f32 %v1702, %v2742
  %v2785 = vmul.f32 %v1774, %v2741
  %v2786 = vmul.f32 %v1776, %v2742
  %v2787 = vmul.f32 %v1848, %v2741
  %v2788 = vmul.f32 %v1850, %v2742
  %v2789 = vmul.f32 %v1922, %v2741
  %v2790 = vmul.f32 %v1924, %v2742
  %v2791 = vmul.f32 %v1996, %v2741
  %v2792 = vmul.f32 %v1998, %v2742
  %v2793 = vmul.f32 %v2070, %v2741
  %v2794 = vmul.f32 %v2072, %v2742
  %v2795 = vmul.f32 %v2144, %v2741
  %v2796 = vmul.f32 %v2146, %v2742
  %v2797 = vmul.f32 %v2218, %v2741
  %v2798 = vmul.f32 %v2220, %v2742
  %v2799 = vmul.f32 %v2292, %v2741
  %v2800 = vmul.f32 %v2294, %v2742
  %v2801 = vmul.f32 %v2366, %v2741
  %v2802 = vmul.f32 %v2368, %v2742
  %v2803 = vmul.f32 %v2440, %v2741
  %v2804 = vmul.f32 %v2442, %v2742
  %v2805 = vmul.f32 %v2514, %v2741
  %v2806 = vmul.f32 %v2516, %v2742
  %2807 = vmatprep.subr.mxu0 0.0
  %2808 = vmatpush1.msra.mxu0 %v113
  %2809 = vmatprep.subr.mxu0 0.0
  %2810 = vmatpush1.msra.mxu0 %v114
  %2811 = vmatprep.subr.mxu0 0.0
  %2812 = vmatpush1.msra.mxu0 %v115
  %2813 = vmatprep.subr.mxu0 0.0
  %2814 = vmatpush1.msra.mxu0 %v116
  %2815 = vmatprep.subr.mxu0 0.0
  %2816 = vmatpush1.msra.mxu0 %v117
  %2817 = vmatprep.subr.mxu0 0.0
  %2818 = vmatpush1.msra.mxu0 %v118
  %2819 = vmatprep.subr.mxu0 0.0
  %2820 = vmatpush1.msra.mxu0 %v119
  %2821 = vmatprep.subr.mxu0 0.0
  %2822 = vmatpush1.msra.mxu0 %v120
  %2823 = vmatprep.subr.mxu0 0.0
  %2824 = vmatpush1.msra.mxu0 %v121
  %2825 = vmatprep.subr.mxu0 0.0
  %2826 = vmatpush1.msra.mxu0 %v122
  %2827 = vmatprep.subr.mxu0 0.0
  %2828 = vmatpush1.msra.mxu0 %v123
  %2829 = vmatprep.subr.mxu0 0.0
  %2830 = vmatpush1.msra.mxu0 %v124
  %2831 = vmatprep.subr.mxu0 0.0
  %2832 = vmatpush1.msra.mxu0 %v125
  %2833 = vmatprep.subr.mxu0 0.0
  %2834 = vmatpush1.msra.mxu0 %v126
  %2835 = vmatprep.subr.mxu0 0.0
  %2836 = vmatpush1.msra.mxu0 %v127
  %2837 = vmatprep.subr.mxu0 0.0
  %2838 = vmatpush1.msra.mxu0 %v128
  %2839 = vmatprep.subr.mxu0 0.0
  %2840 = vmatpush1.msra.mxu0 %v129
  %2841 = vmatprep.subr.mxu0 0.0
  %2842 = vmatpush1.msra.mxu0 %v130
  %2843 = vmatprep.subr.mxu0 0.0
  %2844 = vmatpush1.msra.mxu0 %v131
  %2845 = vmatprep.subr.mxu0 0.0
  %2846 = vmatpush1.msra.mxu0 %v132
  %2847 = vmatprep.subr.mxu0 0.0
  %2848 = vmatpush1.msra.mxu0 %v133
  %2849 = vmatprep.subr.mxu0 0.0
  %2850 = vmatpush1.msra.mxu0 %v134
  %2851 = vmatprep.subr.mxu0 0.0
  %2852 = vmatpush1.msra.mxu0 %v135
  %2853 = vmatprep.subr.mxu0 0.0
  %2854 = vmatpush1.msra.mxu0 %v136
  %2855 = vmatprep.subr.mxu0 0.0
  %2856 = vmatpush1.msra.mxu0 %v137
  %2857 = vmatprep.subr.mxu0 0.0
  %2858 = vmatpush1.msra.mxu0 %v138
  %2859 = vmatprep.subr.mxu0 0.0
  %2860 = vmatpush1.msra.mxu0 %v139
  %2861 = vmatprep.subr.mxu0 0.0
  %2862 = vmatpush1.msra.mxu0 %v140
  %2863 = vmatprep.subr.mxu0 0.0
  %2864 = vmatpush1.msra.mxu0 %v141
  %2865 = vmatprep.subr.mxu0 0.0
  %2866 = vmatpush1.msra.mxu0 %v142
  %2867 = vmatprep.subr.mxu0 0.0
  %2868 = vmatpush1.msra.mxu0 %v143
  %2869 = vmatprep.subr.mxu0 0.0
  %2870 = vmatpush1.msra.mxu0 %v144
  %2871 = vmatprep.mubr.f32.mxu0 %v2744
  %2872 = vmatmul.mubr.f32.gmra.mrb[0].mxu0 %v2743
  %v2873 = vpop.f32.mrb[0].mxu0
  %v2874 = vadd.f32 0.0, %v2873
  %v2875 = vpop.f32.mrb[0].mxu0
  %2876 = vmatprep.mubr.f32.mxu0 %v2746
  %2877 = vmatmul.mubr.f32.gmra.mrb[0].mxu0 %v2745
  %v2878 = vpop.f32.mrb[0].mxu0
  %v2879 = vadd.f32 0.0, %v2878
  %v2880 = vpop.f32.mrb[0].mxu0
  %2881 = vmatprep.mubr.f32.mxu0 %v2748
  %2882 = vmatmul.mubr.f32.gmra.mrb[0].mxu0 %v2747
  %v2883 = vpop.f32.mrb[0].mxu0
  %v2884 = vadd.f32 0.0, %v2883
  %v2885 = vpop.f32.mrb[0].mxu0
  %2886 = vmatprep.mubr.f32.mxu0 %v2750
  %2887 = vmatmul.mubr.f32.gmra.mrb[0].mxu0 %v2749
  %v2888 = vpop.f32.mrb[0].mxu0
  %v2889 = vadd.f32 0.0, %v2888
  %v2890 = vpop.f32.mrb[0].mxu0
  %2891 = vmatprep.mubr.f32.mxu0 %v2752
  %2892 = vmatmul.mubr.f32.gmra.mrb[0].mxu0 %v2751
  %v2893 = vpop.f32.mrb[0].mxu0
  %v2894 = vadd.f32 0.0, %v2893
  %v2895 = vpop.f32.mrb[0].mxu0
  %2896 = vmatprep.mubr.f32.mxu0 %v2754
  %2897 = vmatmul.mubr.f32.gmra.mrb[0].mxu0 %v2753
  %v2898 = vpop.f32.mrb[0].mxu0
  %v2899 = vadd.f32 0.0, %v2898
  %v2900 = vpop.f32.mrb[0].mxu0
  %2901 = vmatprep.mubr.f32.mxu0 %v2756
  %2902 = vmatmul.mubr.f32.gmra.mrb[0].mxu0 %v2755
  %v2903 = vpop.f32.mrb[0].mxu0
  %v2904 = vadd.f32 0.0, %v2903
  %v2905 = vpop.f32.mrb[0].mxu0
  %2906 = vmatprep.mubr.f32.mxu0 %v2758
  %2907 = vmatmul.mubr.f32.gmra.mrb[0].mxu0 %v2757
  %v2908 = vpop.f32.mrb[0].mxu0
  %v2909 = vadd.f32 0.0, %v2908
  %v2910 = vpop.f32.mrb[0].mxu0
  %2911 = vmatprep.mubr.f32.mxu0 %v2760
  %2912 = vmatmul.mubr.f32.gmra.mrb[0].mxu0 %v2759
  %v2913 = vpop.f32.mrb[0].mxu0
  %v2914 = vadd.f32 0.0, %v2913
  %v2915 = vpop.f32.mrb[0].mxu0
  %2916 = vmatprep.mubr.f32.mxu0 %v2762
  %2917 = vmatmul.mubr.f32.gmra.mrb[0].mxu0 %v2761
  %v2918 = vpop.f32.mrb[0].mxu0
  %v2919 = vadd.f32 0.0, %v2918
  %v2920 = vpop.f32.mrb[0].mxu0
  %2921 = vmatprep.mubr.f32.mxu0 %v2764
  %2922 = vmatmul.mubr.f32.gmra.mrb[0].mxu0 %v2763
  %v2923 = vpop.f32.mrb[0].mxu0
  %v2924 = vadd.f32 0.0, %v2923
  %v2925 = vpop.f32.mrb[0].mxu0
  %2926 = vmatprep.mubr.f32.mxu0 %v2766
  %2927 = vmatmul.mubr.f32.gmra.mrb[0].mxu0 %v2765
  %v2928 = vpop.f32.mrb[0].mxu0
  %v2929 = vadd.f32 0.0, %v2928
  %v2930 = vpop.f32.mrb[0].mxu0
  %2931 = vmatprep.mubr.f32.mxu0 %v2768
  %2932 = vmatmul.mubr.f32.gmra.mrb[0].mxu0 %v2767
  %v2933 = vpop.f32.mrb[0].mxu0
  %v2934 = vadd.f32 0.0, %v2933
  %v2935 = vpop.f32.mrb[0].mxu0
  %2936 = vmatprep.mubr.f32.mxu0 %v2770
  %2937 = vmatmul.mubr.f32.gmra.mrb[0].mxu0 %v2769
  %v2938 = vpop.f32.mrb[0].mxu0
  %v2939 = vadd.f32 0.0, %v2938
  %v2940 = vpop.f32.mrb[0].mxu0
  %2941 = vmatprep.mubr.f32.mxu0 %v2772
  %2942 = vmatmul.mubr.f32.gmra.mrb[0].mxu0 %v2771
  %v2943 = vpop.f32.mrb[0].mxu0
  %v2944 = vadd.f32 0.0, %v2943
  %v2945 = vpop.f32.mrb[0].mxu0
  %2946 = vmatprep.mubr.f32.mxu0 %v2774
  %2947 = vmatmul.mubr.f32.gmra.mrb[0].mxu0 %v2773
  %v2948 = vpop.f32.mrb[0].mxu0
  %v2949 = vadd.f32 0.0, %v2948
  %v2950 = vpop.f32.mrb[0].mxu0
  %2951 = vmatprep.mubr.f32.mxu0 %v2776
  %2952 = vmatmul.mubr.f32.gmra.mrb[0].mxu0 %v2775
  %v2953 = vpop.f32.mrb[0].mxu0
  %v2954 = vadd.f32 0.0, %v2953
  %v2955 = vpop.f32.mrb[0].mxu0
  %2956 = vmatprep.mubr.f32.mxu0 %v2778
  %2957 = vmatmul.mubr.f32.gmra.mrb[0].mxu0 %v2777
  %v2958 = vpop.f32.mrb[0].mxu0
  %v2959 = vadd.f32 0.0, %v2958
  %v2960 = vpop.f32.mrb[0].mxu0
  %2961 = vmatprep.mubr.f32.mxu0 %v2780
  %2962 = vmatmul.mubr.f32.gmra.mrb[0].mxu0 %v2779
  %v2963 = vpop.f32.mrb[0].mxu0
  %v2964 = vadd.f32 0.0, %v2963
  %v2965 = vpop.f32.mrb[0].mxu0
  %2966 = vmatprep.mubr.f32.mxu0 %v2782
  %2967 = vmatmul.mubr.f32.gmra.mrb[0].mxu0 %v2781
  %v2968 = vpop.f32.mrb[0].mxu0
  %v2969 = vadd.f32 0.0, %v2968
  %v2970 = vpop.f32.mrb[0].mxu0
  %2971 = vmatprep.mubr.f32.mxu0 %v2784
  %2972 = vmatmul.mubr.f32.gmra.mrb[0].mxu0 %v2783
  %v2973 = vpop.f32.mrb[0].mxu0
  %v2974 = vadd.f32 0.0, %v2973
  %v2975 = vpop.f32.mrb[0].mxu0
  %2976 = vmatprep.mubr.f32.mxu0 %v2786
  %2977 = vmatmul.mubr.f32.gmra.mrb[0].mxu0 %v2785
  %v2978 = vpop.f32.mrb[0].mxu0
  %v2979 = vadd.f32 0.0, %v2978
  %v2980 = vpop.f32.mrb[0].mxu0
  %2981 = vmatprep.mubr.f32.mxu0 %v2788
  %2982 = vmatmul.mubr.f32.gmra.mrb[0].mxu0 %v2787
  %v2983 = vpop.f32.mrb[0].mxu0
  %v2984 = vadd.f32 0.0, %v2983
  %v2985 = vpop.f32.mrb[0].mxu0
  %2986 = vmatprep.mubr.f32.mxu0 %v2790
  %2987 = vmatmul.mubr.f32.gmra.mrb[0].mxu0 %v2789
  %v2988 = vpop.f32.mrb[0].mxu0
  %v2989 = vadd.f32 0.0, %v2988
  %v2990 = vpop.f32.mrb[0].mxu0
  %2991 = vmatprep.mubr.f32.mxu0 %v2792
  %2992 = vmatmul.mubr.f32.gmra.mrb[0].mxu0 %v2791
  %v2993 = vpop.f32.mrb[0].mxu0
  %v2994 = vadd.f32 0.0, %v2993
  %v2995 = vpop.f32.mrb[0].mxu0
  %2996 = vmatprep.mubr.f32.mxu0 %v2794
  %2997 = vmatmul.mubr.f32.gmra.mrb[0].mxu0 %v2793
  %v2998 = vpop.f32.mrb[0].mxu0
  %v2999 = vadd.f32 0.0, %v2998
  %v3000 = vpop.f32.mrb[0].mxu0
  %3001 = vmatprep.mubr.f32.mxu0 %v2796
  %3002 = vmatmul.mubr.f32.gmra.mrb[0].mxu0 %v2795
  %v3003 = vpop.f32.mrb[0].mxu0
  %v3004 = vadd.f32 0.0, %v3003
  %v3005 = vpop.f32.mrb[0].mxu0
  %3006 = vmatprep.mubr.f32.mxu0 %v2798
  %3007 = vmatmul.mubr.f32.gmra.mrb[0].mxu0 %v2797
  %v3008 = vpop.f32.mrb[0].mxu0
  %v3009 = vadd.f32 0.0, %v3008
  %v3010 = vpop.f32.mrb[0].mxu0
  %3011 = vmatprep.mubr.f32.mxu0 %v2800
  %3012 = vmatmul.mubr.f32.gmra.mrb[0].mxu0 %v2799
  %v3013 = vpop.f32.mrb[0].mxu0
  %v3014 = vadd.f32 0.0, %v3013
  %v3015 = vpop.f32.mrb[0].mxu0
  %3016 = vmatprep.mubr.f32.mxu0 %v2802
  %3017 = vmatmul.mubr.f32.gmra.mrb[0].mxu0 %v2801
  %v3018 = vpop.f32.mrb[0].mxu0
  %v3019 = vadd.f32 0.0, %v3018
  %v3020 = vpop.f32.mrb[0].mxu0
  %3021 = vmatprep.mubr.f32.mxu0 %v2804
  %3022 = vmatmul.mubr.f32.gmra.mrb[0].mxu0 %v2803
  %v3023 = vpop.f32.mrb[0].mxu0
  %v3024 = vadd.f32 0.0, %v3023
  %v3025 = vpop.f32.mrb[0].mxu0
  %3026 = vmatprep.mubr.f32.mxu0 %v2806
  %3027 = vmatmul.mubr.f32.gmra.mrb[0].mxu0 %v2805
  %v3028 = vpop.f32.mrb[0].mxu0
  %v3029 = vadd.f32 0.0, %v3028
  %v3030 = vpop.f32.mrb[0].mxu0
  %3031 = vdwg.mxu0
  %v3032 = vadd.f32 %v2874, 0.0
  %v3033 = vadd.f32 %v2879, 0.0
  %v3034 = vadd.f32 %v2884, 0.0
  %v3035 = vadd.f32 %v2889, 0.0
  %v3036 = vadd.f32 %v2894, 0.0
  %v3037 = vadd.f32 %v2899, 0.0
  %v3038 = vadd.f32 %v2904, 0.0
  %v3039 = vadd.f32 %v2909, 0.0
  %v3040 = vadd.f32 %v2914, 0.0
  %v3041 = vadd.f32 %v2919, 0.0
  %v3042 = vadd.f32 %v2924, 0.0
  %v3043 = vadd.f32 %v2929, 0.0
  %v3044 = vadd.f32 %v2934, 0.0
  %v3045 = vadd.f32 %v2939, 0.0
  %v3046 = vadd.f32 %v2944, 0.0
  %v3047 = vadd.f32 %v2949, 0.0
  %v3048 = vadd.f32 %v2954, 0.0
  %v3049 = vadd.f32 %v2959, 0.0
  %v3050 = vadd.f32 %v2964, 0.0
  %v3051 = vadd.f32 %v2969, 0.0
  %v3052 = vadd.f32 %v2974, 0.0
  %v3053 = vadd.f32 %v2979, 0.0
  %v3054 = vadd.f32 %v2984, 0.0
  %v3055 = vadd.f32 %v2989, 0.0
  %v3056 = vadd.f32 %v2994, 0.0
  %v3057 = vadd.f32 %v2999, 0.0
  %v3058 = vadd.f32 %v3004, 0.0
  %v3059 = vadd.f32 %v3009, 0.0
  %v3060 = vadd.f32 %v3014, 0.0
  %v3061 = vadd.f32 %v3019, 0.0
  %v3062 = vadd.f32 %v3024, 0.0
  %v3063 = vadd.f32 %v3029, 0.0
  %v3064 = vsel %vm2654, %v3032, -inf
  %v3065 = vsel %vm2654, %v3033, -inf
  %v3066 = vsel %vm2654, %v3034, -inf
  %v3067 = vsel %vm2654, %v3035, -inf
  %v3068 = vsel %vm2654, %v3036, -inf
  %v3069 = vmax.f32 %v3064, %v3068
  %v3070 = vsel %vm2654, %v3037, -inf
  %v3071 = vmax.f32 %v3065, %v3070
  %v3072 = vsel %vm2654, %v3038, -inf
  %v3073 = vmax.f32 %v3066, %v3072
  %v3074 = vsel %vm2654, %v3039, -inf
  %v3075 = vmax.f32 %v3067, %v3074
  %v3076 = vsel %vm2654, %v3040, -inf
  %v3077 = vmax.f32 %v3069, %v3076
  %v3078 = vsel %vm2654, %v3041, -inf
  %v3079 = vmax.f32 %v3071, %v3078
  %v3080 = vsel %vm2654, %v3042, -inf
  %v3081 = vmax.f32 %v3073, %v3080
  %v3082 = vsel %vm2654, %v3043, -inf
  %v3083 = vmax.f32 %v3075, %v3082
  %v3084 = vsel %vm2654, %v3044, -inf
  %v3085 = vmax.f32 %v3077, %v3084
  %v3086 = vsel %vm2654, %v3045, -inf
  %v3087 = vmax.f32 %v3079, %v3086
  %v3088 = vsel %vm2654, %v3046, -inf
  %v3089 = vmax.f32 %v3081, %v3088
  %v3090 = vsel %vm2654, %v3047, -inf
  %v3091 = vmax.f32 %v3083, %v3090
  %v3092 = vsel %vm2654, %v3048, -inf
  %v3093 = vmax.f32 %v3085, %v3092
  %v3094 = vsel %vm2654, %v3049, -inf
  %v3095 = vmax.f32 %v3087, %v3094
  %v3096 = vsel %vm2654, %v3050, -inf
  %v3097 = vmax.f32 %v3089, %v3096
  %v3098 = vsel %vm2654, %v3051, -inf
  %v3099 = vmax.f32 %v3091, %v3098
  %v3100 = vsel %vm2654, %v3052, -inf
  %v3101 = vmax.f32 %v3093, %v3100
  %v3102 = vsel %vm2654, %v3053, -inf
  %v3103 = vmax.f32 %v3095, %v3102
  %v3104 = vsel %vm2654, %v3054, -inf
  %v3105 = vmax.f32 %v3097, %v3104
  %v3106 = vsel %vm2654, %v3055, -inf
  %v3107 = vmax.f32 %v3099, %v3106
  %v3108 = vsel %vm2654, %v3056, -inf
  %v3109 = vmax.f32 %v3101, %v3108
  %v3110 = vsel %vm2654, %v3057, -inf
  %v3111 = vmax.f32 %v3103, %v3110
  %v3112 = vsel %vm2654, %v3058, -inf
  %v3113 = vmax.f32 %v3105, %v3112
  %v3114 = vsel %vm2654, %v3059, -inf
  %v3115 = vmax.f32 %v3107, %v3114
  %v3116 = vsel %vm2654, %v3060, -inf
  %v3117 = vmax.f32 %v3109, %v3116
  %v3118 = vsel %vm2654, %v3061, -inf
  %v3119 = vmax.f32 %v3111, %v3118
  %v3120 = vsel %vm2654, %v3062, -inf
  %v3121 = vmax.f32 %v3113, %v3120
  %v3122 = vsel %vm2654, %v3063, -inf
  %v3123 = vmax.f32 %v3115, %v3122
  %v3124 = vmax.f32 %v3117, %v3119
  %v3125 = vmax.f32 %v3121, %v3123
  %v3126 = vmax.f32 %v3124, %v3125
  %v3127 = vsub.f32 %v3032, %v3126
  %v3128 = vsub.f32 %v3033, %v3126
  %v3129 = vsub.f32 %v3034, %v3126
  %v3130 = vsub.f32 %v3035, %v3126
  %v3131 = vsub.f32 %v3036, %v3126
  %v3132 = vsub.f32 %v3037, %v3126
  %v3133 = vsub.f32 %v3038, %v3126
  %v3134 = vsub.f32 %v3039, %v3126
  %v3135 = vsub.f32 %v3040, %v3126
  %v3136 = vsub.f32 %v3041, %v3126
  %v3137 = vsub.f32 %v3042, %v3126
  %v3138 = vsub.f32 %v3043, %v3126
  %v3139 = vsub.f32 %v3044, %v3126
  %v3140 = vsub.f32 %v3045, %v3126
  %v3141 = vsub.f32 %v3046, %v3126
  %v3142 = vsub.f32 %v3047, %v3126
  %v3143 = vsub.f32 %v3048, %v3126
  %v3144 = vsub.f32 %v3049, %v3126
  %v3145 = vsub.f32 %v3050, %v3126
  %v3146 = vsub.f32 %v3051, %v3126
  %v3147 = vsub.f32 %v3052, %v3126
  %v3148 = vsub.f32 %v3053, %v3126
  %v3149 = vsub.f32 %v3054, %v3126
  %v3150 = vsub.f32 %v3055, %v3126
  %v3151 = vsub.f32 %v3056, %v3126
  %v3152 = vsub.f32 %v3057, %v3126
  %v3153 = vsub.f32 %v3058, %v3126
  %v3154 = vsub.f32 %v3059, %v3126
  %v3155 = vsub.f32 %v3060, %v3126
  %v3156 = vsub.f32 %v3061, %v3126
  %v3157 = vsub.f32 %v3062, %v3126
  %v3158 = vsub.f32 %v3063, %v3126
  %v3159 = vmul.f32 %v3127, 1.442695
  %v3160 = vpow.pop %v3159
  %v3161 = vmul.f32 %v3128, 1.442695
  %v3162 = vpow.pop %v3161
  %v3163 = vmul.f32 %v3129, 1.442695
  %v3164 = vpow.pop %v3163
  %v3165 = vmul.f32 %v3130, 1.442695
  %v3166 = vpow.pop %v3165
  %v3167 = vmul.f32 %v3131, 1.442695
  %v3168 = vpow.pop %v3167
  %v3169 = vmul.f32 %v3132, 1.442695
  %v3170 = vpow.pop %v3169
  %v3171 = vmul.f32 %v3133, 1.442695
  %v3172 = vpow.pop %v3171
  %v3173 = vmul.f32 %v3134, 1.442695
  %v3174 = vpow.pop %v3173
  %v3175 = vmul.f32 %v3135, 1.442695
  %v3176 = vpow.pop %v3175
  %v3177 = vmul.f32 %v3136, 1.442695
  %v3178 = vpow.pop %v3177
  %v3179 = vmul.f32 %v3137, 1.442695
  %v3180 = vpow.pop %v3179
  %v3181 = vmul.f32 %v3138, 1.442695
  %v3182 = vpow.pop %v3181
  %v3183 = vmul.f32 %v3139, 1.442695
  %v3184 = vpow.pop %v3183
  %v3185 = vmul.f32 %v3140, 1.442695
  %v3186 = vpow.pop %v3185
  %v3187 = vmul.f32 %v3141, 1.442695
  %v3188 = vpow.pop %v3187
  %v3189 = vmul.f32 %v3142, 1.442695
  %v3190 = vpow.pop %v3189
  %v3191 = vmul.f32 %v3143, 1.442695
  %v3192 = vpow.pop %v3191
  %v3193 = vmul.f32 %v3144, 1.442695
  %v3194 = vpow.pop %v3193
  %v3195 = vmul.f32 %v3145, 1.442695
  %v3196 = vpow.pop %v3195
  %v3197 = vmul.f32 %v3146, 1.442695
  %v3198 = vpow.pop %v3197
  %v3199 = vmul.f32 %v3147, 1.442695
  %v3200 = vpow.pop %v3199
  %v3201 = vmul.f32 %v3148, 1.442695
  %v3202 = vpow.pop %v3201
  %v3203 = vmul.f32 %v3149, 1.442695
  %v3204 = vpow.pop %v3203
  %v3205 = vmul.f32 %v3150, 1.442695
  %v3206 = vpow.pop %v3205
  %v3207 = vmul.f32 %v3151, 1.442695
  %v3208 = vpow.pop %v3207
  %v3209 = vmul.f32 %v3152, 1.442695
  %v3210 = vpow.pop %v3209
  %v3211 = vmul.f32 %v3153, 1.442695
  %v3212 = vpow.pop %v3211
  %v3213 = vmul.f32 %v3154, 1.442695
  %v3214 = vpow.pop %v3213
  %v3215 = vmul.f32 %v3155, 1.442695
  %v3216 = vpow.pop %v3215
  %v3217 = vmul.f32 %v3156, 1.442695
  %v3218 = vpow.pop %v3217
  %v3219 = vmul.f32 %v3157, 1.442695
  %v3220 = vpow.pop %v3219
  %v3221 = vmul.f32 %v3158, 1.442695
  %v3222 = vpow.pop %v3221
  %v3223 = vsel %vm2654, %v3160, 0.0
  %v3224 = vsel %vm2654, %v3162, 0.0
  %v3225 = vadd.f32 %v3223, %v3224
  %v3226 = vsel %vm2654, %v3164, 0.0
  %v3227 = vadd.f32 %v3225, %v3226
  %v3228 = vsel %vm2654, %v3166, 0.0
  %v3229 = vadd.f32 %v3227, %v3228
  %v3230 = vsel %vm2654, %v3168, 0.0
  %v3231 = vadd.f32 %v3229, %v3230
  %v3232 = vsel %vm2654, %v3170, 0.0
  %v3233 = vadd.f32 %v3231, %v3232
  %v3234 = vsel %vm2654, %v3172, 0.0
  %v3235 = vadd.f32 %v3233, %v3234
  %v3236 = vsel %vm2654, %v3174, 0.0
  %v3237 = vadd.f32 %v3235, %v3236
  %v3238 = vsel %vm2654, %v3176, 0.0
  %v3239 = vadd.f32 %v3237, %v3238
  %v3240 = vsel %vm2654, %v3178, 0.0
  %v3241 = vadd.f32 %v3239, %v3240
  %v3242 = vsel %vm2654, %v3180, 0.0
  %v3243 = vadd.f32 %v3241, %v3242
  %v3244 = vsel %vm2654, %v3182, 0.0
  %v3245 = vadd.f32 %v3243, %v3244
  %v3246 = vsel %vm2654, %v3184, 0.0
  %v3247 = vadd.f32 %v3245, %v3246
  %v3248 = vsel %vm2654, %v3186, 0.0
  %v3249 = vadd.f32 %v3247, %v3248
  %v3250 = vsel %vm2654, %v3188, 0.0
  %v3251 = vadd.f32 %v3249, %v3250
  %v3252 = vsel %vm2654, %v3190, 0.0
  %v3253 = vadd.f32 %v3251, %v3252
  %v3254 = vsel %vm2654, %v3192, 0.0
  %v3255 = vadd.f32 %v3253, %v3254
  %v3256 = vsel %vm2654, %v3194, 0.0
  %v3257 = vadd.f32 %v3255, %v3256
  %v3258 = vsel %vm2654, %v3196, 0.0
  %v3259 = vadd.f32 %v3257, %v3258
  %v3260 = vsel %vm2654, %v3198, 0.0
  %v3261 = vadd.f32 %v3259, %v3260
  %v3262 = vsel %vm2654, %v3200, 0.0
  %v3263 = vadd.f32 %v3261, %v3262
  %v3264 = vsel %vm2654, %v3202, 0.0
  %v3265 = vadd.f32 %v3263, %v3264
  %v3266 = vsel %vm2654, %v3204, 0.0
  %v3267 = vadd.f32 %v3265, %v3266
  %v3268 = vsel %vm2654, %v3206, 0.0
  %v3269 = vadd.f32 %v3267, %v3268
  %v3270 = vsel %vm2654, %v3208, 0.0
  %v3271 = vadd.f32 %v3269, %v3270
  %v3272 = vsel %vm2654, %v3210, 0.0
  %v3273 = vadd.f32 %v3271, %v3272
  %v3274 = vsel %vm2654, %v3212, 0.0
  %v3275 = vadd.f32 %v3273, %v3274
  %v3276 = vsel %vm2654, %v3214, 0.0
  %v3277 = vadd.f32 %v3275, %v3276
  %v3278 = vsel %vm2654, %v3216, 0.0
  %v3279 = vadd.f32 %v3277, %v3278
  %v3280 = vsel %vm2654, %v3218, 0.0
  %v3281 = vadd.f32 %v3279, %v3280
  %v3282 = vsel %vm2654, %v3220, 0.0
  %v3283 = vadd.f32 %v3281, %v3282
  %v3284 = vsel %vm2654, %v3222, 0.0
  %v3285 = vadd.f32 %v3283, %v3284
  %v3286 = vrcp.pop %v3285
  %v3287 = vmul.f32 %v3160, %v3286
  %v3288 = vmul.f32 %v3162, %v3286
  %v3289 = vmul.f32 %v3164, %v3286
  %v3290 = vmul.f32 %v3166, %v3286
  %v3291 = vmul.f32 %v3168, %v3286
  %v3292 = vmul.f32 %v3170, %v3286
  %v3293 = vmul.f32 %v3172, %v3286
  %v3294 = vmul.f32 %v3174, %v3286
  %v3295 = vmul.f32 %v3176, %v3286
  %v3296 = vmul.f32 %v3178, %v3286
  %v3297 = vmul.f32 %v3180, %v3286
  %v3298 = vmul.f32 %v3182, %v3286
  %v3299 = vmul.f32 %v3184, %v3286
  %v3300 = vmul.f32 %v3186, %v3286
  %v3301 = vmul.f32 %v3188, %v3286
  %v3302 = vmul.f32 %v3190, %v3286
  %v3303 = vmul.f32 %v3192, %v3286
  %v3304 = vmul.f32 %v3194, %v3286
  %v3305 = vmul.f32 %v3196, %v3286
  %v3306 = vmul.f32 %v3198, %v3286
  %v3307 = vmul.f32 %v3200, %v3286
  %v3308 = vmul.f32 %v3202, %v3286
  %v3309 = vmul.f32 %v3204, %v3286
  %v3310 = vmul.f32 %v3206, %v3286
  %v3311 = vmul.f32 %v3208, %v3286
  %v3312 = vmul.f32 %v3210, %v3286
  %v3313 = vmul.f32 %v3212, %v3286
  %v3314 = vmul.f32 %v3214, %v3286
  %v3315 = vmul.f32 %v3216, %v3286
  %v3316 = vmul.f32 %v3218, %v3286
  %v3317 = vmul.f32 %v3220, %v3286
  %v3318 = vmul.f32 %v3222, %v3286
  %v3320 = vsel %vm2654, %v3287, 0
  %v3323 = vsel %vm2654, %v3288, 0
  %v3326 = vsel %vm2654, %v3289, 0
  %v3329 = vsel %vm2654, %v3290, 0
  %v3332 = vsel %vm2654, %v3291, 0
  %v3335 = vsel %vm2654, %v3292, 0
  %v3338 = vsel %vm2654, %v3293, 0
  %v3341 = vsel %vm2654, %v3294, 0
  %v3344 = vsel %vm2654, %v3295, 0
  %v3347 = vsel %vm2654, %v3296, 0
  %v3350 = vsel %vm2654, %v3297, 0
  %v3353 = vsel %vm2654, %v3298, 0
  %v3356 = vsel %vm2654, %v3299, 0
  %v3359 = vsel %vm2654, %v3300, 0
  %v3362 = vsel %vm2654, %v3301, 0
  %v3365 = vsel %vm2654, %v3302, 0
  %v3368 = vsel %vm2654, %v3303, 0
  %v3371 = vsel %vm2654, %v3304, 0
  %v3374 = vsel %vm2654, %v3305, 0
  %v3377 = vsel %vm2654, %v3306, 0
  %v3380 = vsel %vm2654, %v3307, 0
  %v3383 = vsel %vm2654, %v3308, 0
  %v3386 = vsel %vm2654, %v3309, 0
  %v3389 = vsel %vm2654, %v3310, 0
  %v3392 = vsel %vm2654, %v3311, 0
  %v3395 = vsel %vm2654, %v3312, 0
  %v3398 = vsel %vm2654, %v3313, 0
  %v3401 = vsel %vm2654, %v3314, 0
  %v3404 = vsel %vm2654, %v3315, 0
  %v3407 = vsel %vm2654, %v3316, 0
  %v3410 = vsel %vm2654, %v3317, 0
  %v3413 = vsel %vm2654, %v3318, 0
  %3415 = vmatprep.subr.mxu0 %v146
  %3416 = vmatpush1.msra.mxu0 %v145
  %3417 = vmatprep.subr.mxu0 %v148
  %3418 = vmatpush1.msra.mxu0 %v147
  %3419 = vmatprep.subr.mxu0 0.0
  %3420 = vmatpush1.msra.mxu0 0.0
  %3421 = vmatprep.subr.mxu0 0.0
  %3422 = vmatpush1.msra.mxu0 0.0
  %3423 = vmatprep.subr.mxu0 0.0
  %3424 = vmatpush1.msra.mxu0 0.0
  %3425 = vmatprep.subr.mxu0 0.0
  %3426 = vmatpush1.msra.mxu0 0.0
  %3427 = vmatprep.subr.mxu0 0.0
  %3428 = vmatpush1.msra.mxu0 0.0
  %3429 = vmatprep.subr.mxu0 0.0
  %3430 = vmatpush1.msra.mxu0 0.0
  %3431 = vmatprep.subr.mxu0 0.0
  %3432 = vmatpush1.msra.mxu0 0.0
  %3433 = vmatprep.subr.mxu0 0.0
  %3434 = vmatpush1.msra.mxu0 0.0
  %3435 = vmatprep.subr.mxu0 0.0
  %3436 = vmatpush1.msra.mxu0 0.0
  %3437 = vmatprep.subr.mxu0 0.0
  %3438 = vmatpush1.msra.mxu0 0.0
  %3439 = vmatprep.subr.mxu0 0.0
  %3440 = vmatpush1.msra.mxu0 0.0
  %3441 = vmatprep.subr.mxu0 0.0
  %3442 = vmatpush1.msra.mxu0 0.0
  %3443 = vmatprep.subr.mxu0 0.0
  %3444 = vmatpush1.msra.mxu0 0.0
  %3445 = vmatprep.subr.mxu0 0.0
  %3446 = vmatpush1.msra.mxu0 0.0
  %3447 = vmatprep.subr.mxu0 0.0
  %3448 = vmatpush1.msra.mxu0 0.0
  %3449 = vmatprep.subr.mxu0 0.0
  %3450 = vmatpush1.msra.mxu0 0.0
  %3451 = vmatprep.subr.mxu0 0.0
  %3452 = vmatpush1.msra.mxu0 0.0
  %3453 = vmatprep.subr.mxu0 0.0
  %3454 = vmatpush1.msra.mxu0 0.0
  %3455 = vmatprep.subr.mxu0 0.0
  %3456 = vmatpush1.msra.mxu0 0.0
  %3457 = vmatprep.subr.mxu0 0.0
  %3458 = vmatpush1.msra.mxu0 0.0
  %3459 = vmatprep.subr.mxu0 0.0
  %3460 = vmatpush1.msra.mxu0 0.0
  %3461 = vmatprep.subr.mxu0 0.0
  %3462 = vmatpush1.msra.mxu0 0.0
  %3463 = vmatprep.subr.mxu0 0.0
  %3464 = vmatpush1.msra.mxu0 0.0
  %3465 = vmatprep.subr.mxu0 0.0
  %3466 = vmatpush1.msra.mxu0 0.0
  %3467 = vmatprep.subr.mxu0 0.0
  %3468 = vmatpush1.msra.mxu0 0.0
  %3469 = vmatprep.subr.mxu0 0.0
  %3470 = vmatpush1.msra.mxu0 0.0
  %3471 = vmatprep.subr.mxu0 0.0
  %3472 = vmatpush1.msra.mxu0 0.0
  %3473 = vmatprep.subr.mxu0 0.0
  %3474 = vmatpush1.msra.mxu0 0.0
  %3475 = vmatprep.subr.mxu0 0.0
  %3476 = vmatpush1.msra.mxu0 0.0
  %3477 = vmatprep.subr.mxu0 0.0
  %3478 = vmatpush1.msra.mxu0 0.0
  %3479 = vmatprep.mubr.f32.mxu0 0.0
  %3480 = vmatmul.mubr.f32.gmra.mrb[0].mxu0 %v3320
  %v3481 = vpop.f32.mrb[0].mxu0
  %v3482 = vadd.f32 0.0, %v3481
  %v3483 = vpop.f32.mrb[0].mxu0
  %v3484 = vadd.f32 0.0, %v3483
  %3485 = vmatprep.mubr.f32.mxu0 0.0
  %3486 = vmatmul.mubr.f32.gmra.mrb[0].mxu0 %v3323
  %v3487 = vpop.f32.mrb[0].mxu0
  %v3488 = vadd.f32 0.0, %v3487
  %v3489 = vpop.f32.mrb[0].mxu0
  %v3490 = vadd.f32 0.0, %v3489
  %3491 = vmatprep.mubr.f32.mxu0 0.0
  %3492 = vmatmul.mubr.f32.gmra.mrb[0].mxu0 %v3326
  %v3493 = vpop.f32.mrb[0].mxu0
  %v3494 = vadd.f32 0.0, %v3493
  %v3495 = vpop.f32.mrb[0].mxu0
  %v3496 = vadd.f32 0.0, %v3495
  %3497 = vmatprep.mubr.f32.mxu0 0.0
  %3498 = vmatmul.mubr.f32.gmra.mrb[0].mxu0 %v3329
  %v3499 = vpop.f32.mrb[0].mxu0
  %v3500 = vadd.f32 0.0, %v3499
  %v3501 = vpop.f32.mrb[0].mxu0
  %v3502 = vadd.f32 0.0, %v3501
  %3503 = vmatprep.mubr.f32.mxu0 0.0
  %3504 = vmatmul.mubr.f32.gmra.mrb[0].mxu0 %v3332
  %v3505 = vpop.f32.mrb[0].mxu0
  %v3506 = vadd.f32 0.0, %v3505
  %v3507 = vpop.f32.mrb[0].mxu0
  %v3508 = vadd.f32 0.0, %v3507
  %3509 = vmatprep.mubr.f32.mxu0 0.0
  %3510 = vmatmul.mubr.f32.gmra.mrb[0].mxu0 %v3335
  %v3511 = vpop.f32.mrb[0].mxu0
  %v3512 = vadd.f32 0.0, %v3511
  %v3513 = vpop.f32.mrb[0].mxu0
  %v3514 = vadd.f32 0.0, %v3513
  %3515 = vmatprep.mubr.f32.mxu0 0.0
  %3516 = vmatmul.mubr.f32.gmra.mrb[0].mxu0 %v3338
  %v3517 = vpop.f32.mrb[0].mxu0
  %v3518 = vadd.f32 0.0, %v3517
  %v3519 = vpop.f32.mrb[0].mxu0
  %v3520 = vadd.f32 0.0, %v3519
  %3521 = vmatprep.mubr.f32.mxu0 0.0
  %3522 = vmatmul.mubr.f32.gmra.mrb[0].mxu0 %v3341
  %v3523 = vpop.f32.mrb[0].mxu0
  %v3524 = vadd.f32 0.0, %v3523
  %v3525 = vpop.f32.mrb[0].mxu0
  %v3526 = vadd.f32 0.0, %v3525
  %3527 = vmatprep.mubr.f32.mxu0 0.0
  %3528 = vmatmul.mubr.f32.gmra.mrb[0].mxu0 %v3344
  %v3529 = vpop.f32.mrb[0].mxu0
  %v3530 = vadd.f32 0.0, %v3529
  %v3531 = vpop.f32.mrb[0].mxu0
  %v3532 = vadd.f32 0.0, %v3531
  %3533 = vmatprep.mubr.f32.mxu0 0.0
  %3534 = vmatmul.mubr.f32.gmra.mrb[0].mxu0 %v3347
  %v3535 = vpop.f32.mrb[0].mxu0
  %v3536 = vadd.f32 0.0, %v3535
  %v3537 = vpop.f32.mrb[0].mxu0
  %v3538 = vadd.f32 0.0, %v3537
  %3539 = vmatprep.mubr.f32.mxu0 0.0
  %3540 = vmatmul.mubr.f32.gmra.mrb[0].mxu0 %v3350
  %v3541 = vpop.f32.mrb[0].mxu0
  %v3542 = vadd.f32 0.0, %v3541
  %v3543 = vpop.f32.mrb[0].mxu0
  %v3544 = vadd.f32 0.0, %v3543
  %3545 = vmatprep.mubr.f32.mxu0 0.0
  %3546 = vmatmul.mubr.f32.gmra.mrb[0].mxu0 %v3353
  %v3547 = vpop.f32.mrb[0].mxu0
  %v3548 = vadd.f32 0.0, %v3547
  %v3549 = vpop.f32.mrb[0].mxu0
  %v3550 = vadd.f32 0.0, %v3549
  %3551 = vmatprep.mubr.f32.mxu0 0.0
  %3552 = vmatmul.mubr.f32.gmra.mrb[0].mxu0 %v3356
  %v3553 = vpop.f32.mrb[0].mxu0
  %v3554 = vadd.f32 0.0, %v3553
  %v3555 = vpop.f32.mrb[0].mxu0
  %v3556 = vadd.f32 0.0, %v3555
  %3557 = vmatprep.mubr.f32.mxu0 0.0
  %3558 = vmatmul.mubr.f32.gmra.mrb[0].mxu0 %v3359
  %v3559 = vpop.f32.mrb[0].mxu0
  %v3560 = vadd.f32 0.0, %v3559
  %v3561 = vpop.f32.mrb[0].mxu0
  %v3562 = vadd.f32 0.0, %v3561
  %3563 = vmatprep.mubr.f32.mxu0 0.0
  %3564 = vmatmul.mubr.f32.gmra.mrb[0].mxu0 %v3362
  %v3565 = vpop.f32.mrb[0].mxu0
  %v3566 = vadd.f32 0.0, %v3565
  %v3567 = vpop.f32.mrb[0].mxu0
  %v3568 = vadd.f32 0.0, %v3567
  %3569 = vmatprep.mubr.f32.mxu0 0.0
  %3570 = vmatmul.mubr.f32.gmra.mrb[0].mxu0 %v3365
  %v3571 = vpop.f32.mrb[0].mxu0
  %v3572 = vadd.f32 0.0, %v3571
  %v3573 = vpop.f32.mrb[0].mxu0
  %v3574 = vadd.f32 0.0, %v3573
  %3575 = vmatprep.mubr.f32.mxu0 0.0
  %3576 = vmatmul.mubr.f32.gmra.mrb[0].mxu0 %v3368
  %v3577 = vpop.f32.mrb[0].mxu0
  %v3578 = vadd.f32 0.0, %v3577
  %v3579 = vpop.f32.mrb[0].mxu0
  %v3580 = vadd.f32 0.0, %v3579
  %3581 = vmatprep.mubr.f32.mxu0 0.0
  %3582 = vmatmul.mubr.f32.gmra.mrb[0].mxu0 %v3371
  %v3583 = vpop.f32.mrb[0].mxu0
  %v3584 = vadd.f32 0.0, %v3583
  %v3585 = vpop.f32.mrb[0].mxu0
  %v3586 = vadd.f32 0.0, %v3585
  %3587 = vmatprep.mubr.f32.mxu0 0.0
  %3588 = vmatmul.mubr.f32.gmra.mrb[0].mxu0 %v3374
  %v3589 = vpop.f32.mrb[0].mxu0
  %v3590 = vadd.f32 0.0, %v3589
  %v3591 = vpop.f32.mrb[0].mxu0
  %v3592 = vadd.f32 0.0, %v3591
  %3593 = vmatprep.mubr.f32.mxu0 0.0
  %3594 = vmatmul.mubr.f32.gmra.mrb[0].mxu0 %v3377
  %v3595 = vpop.f32.mrb[0].mxu0
  %v3596 = vadd.f32 0.0, %v3595
  %v3597 = vpop.f32.mrb[0].mxu0
  %v3598 = vadd.f32 0.0, %v3597
  %3599 = vmatprep.mubr.f32.mxu0 0.0
  %3600 = vmatmul.mubr.f32.gmra.mrb[0].mxu0 %v3380
  %v3601 = vpop.f32.mrb[0].mxu0
  %v3602 = vadd.f32 0.0, %v3601
  %v3603 = vpop.f32.mrb[0].mxu0
  %v3604 = vadd.f32 0.0, %v3603
  %3605 = vmatprep.mubr.f32.mxu0 0.0
  %3606 = vmatmul.mubr.f32.gmra.mrb[0].mxu0 %v3383
  %v3607 = vpop.f32.mrb[0].mxu0
  %v3608 = vadd.f32 0.0, %v3607
  %v3609 = vpop.f32.mrb[0].mxu0
  %v3610 = vadd.f32 0.0, %v3609
  %3611 = vmatprep.mubr.f32.mxu0 0.0
  %3612 = vmatmul.mubr.f32.gmra.mrb[0].mxu0 %v3386
  %v3613 = vpop.f32.mrb[0].mxu0
  %v3614 = vadd.f32 0.0, %v3613
  %v3615 = vpop.f32.mrb[0].mxu0
  %v3616 = vadd.f32 0.0, %v3615
  %3617 = vmatprep.mubr.f32.mxu0 0.0
  %3618 = vmatmul.mubr.f32.gmra.mrb[0].mxu0 %v3389
  %v3619 = vpop.f32.mrb[0].mxu0
  %v3620 = vadd.f32 0.0, %v3619
  %v3621 = vpop.f32.mrb[0].mxu0
  %v3622 = vadd.f32 0.0, %v3621
  %3623 = vmatprep.mubr.f32.mxu0 0.0
  %3624 = vmatmul.mubr.f32.gmra.mrb[0].mxu0 %v3392
  %v3625 = vpop.f32.mrb[0].mxu0
  %v3626 = vadd.f32 0.0, %v3625
  %v3627 = vpop.f32.mrb[0].mxu0
  %v3628 = vadd.f32 0.0, %v3627
  %3629 = vmatprep.mubr.f32.mxu0 0.0
  %3630 = vmatmul.mubr.f32.gmra.mrb[0].mxu0 %v3395
  %v3631 = vpop.f32.mrb[0].mxu0
  %v3632 = vadd.f32 0.0, %v3631
  %v3633 = vpop.f32.mrb[0].mxu0
  %v3634 = vadd.f32 0.0, %v3633
  %3635 = vmatprep.mubr.f32.mxu0 0.0
  %3636 = vmatmul.mubr.f32.gmra.mrb[0].mxu0 %v3398
  %v3637 = vpop.f32.mrb[0].mxu0
  %v3638 = vadd.f32 0.0, %v3637
  %v3639 = vpop.f32.mrb[0].mxu0
  %v3640 = vadd.f32 0.0, %v3639
  %3641 = vmatprep.mubr.f32.mxu0 0.0
  %3642 = vmatmul.mubr.f32.gmra.mrb[0].mxu0 %v3401
  %v3643 = vpop.f32.mrb[0].mxu0
  %v3644 = vadd.f32 0.0, %v3643
  %v3645 = vpop.f32.mrb[0].mxu0
  %v3646 = vadd.f32 0.0, %v3645
  %3647 = vmatprep.mubr.f32.mxu0 0.0
  %3648 = vmatmul.mubr.f32.gmra.mrb[0].mxu0 %v3404
  %v3649 = vpop.f32.mrb[0].mxu0
  %v3650 = vadd.f32 0.0, %v3649
  %v3651 = vpop.f32.mrb[0].mxu0
  %v3652 = vadd.f32 0.0, %v3651
  %3653 = vmatprep.mubr.f32.mxu0 0.0
  %3654 = vmatmul.mubr.f32.gmra.mrb[0].mxu0 %v3407
  %v3655 = vpop.f32.mrb[0].mxu0
  %v3656 = vadd.f32 0.0, %v3655
  %v3657 = vpop.f32.mrb[0].mxu0
  %v3658 = vadd.f32 0.0, %v3657
  %3659 = vmatprep.mubr.f32.mxu0 0.0
  %3660 = vmatmul.mubr.f32.gmra.mrb[0].mxu0 %v3410
  %v3661 = vpop.f32.mrb[0].mxu0
  %v3662 = vadd.f32 0.0, %v3661
  %v3663 = vpop.f32.mrb[0].mxu0
  %v3664 = vadd.f32 0.0, %v3663
  %3665 = vmatprep.mubr.f32.mxu0 0.0
  %3666 = vmatmul.mubr.f32.gmra.mrb[0].mxu0 %v3413
  %v3667 = vpop.f32.mrb[0].mxu0
  %v3668 = vadd.f32 0.0, %v3667
  %v3669 = vpop.f32.mrb[0].mxu0
  %v3670 = vadd.f32 0.0, %v3669
  %3671 = vdwg.mxu0
  %v3672 = vmul.f32 %v3482, %v220
  %v3673 = vmul.f32 %v3484, %v222
  %v3674 = vmul.f32 %v3488, %v294
  %v3675 = vmul.f32 %v3490, %v296
  %v3676 = vmul.f32 %v3494, %v368
  %v3677 = vmul.f32 %v3496, %v370
  %v3678 = vmul.f32 %v3500, %v442
  %v3679 = vmul.f32 %v3502, %v444
  %v3680 = vmul.f32 %v3506, %v516
  %v3681 = vmul.f32 %v3508, %v518
  %v3682 = vmul.f32 %v3512, %v590
  %v3683 = vmul.f32 %v3514, %v592
  %v3684 = vmul.f32 %v3518, %v664
  %v3685 = vmul.f32 %v3520, %v666
  %v3686 = vmul.f32 %v3524, %v738
  %v3687 = vmul.f32 %v3526, %v740
  %v3688 = vmul.f32 %v3530, %v812
  %v3689 = vmul.f32 %v3532, %v814
  %v3690 = vmul.f32 %v3536, %v886
  %v3691 = vmul.f32 %v3538, %v888
  %v3692 = vmul.f32 %v3542, %v960
  %v3693 = vmul.f32 %v3544, %v962
  %v3694 = vmul.f32 %v3548, %v1034
  %v3695 = vmul.f32 %v3550, %v1036
  %v3696 = vmul.f32 %v3554, %v1108
  %v3697 = vmul.f32 %v3556, %v1110
  %v3698 = vmul.f32 %v3560, %v1182
  %v3699 = vmul.f32 %v3562, %v1184
  %v3700 = vmul.f32 %v3566, %v1256
  %v3701 = vmul.f32 %v3568, %v1258
  %v3702 = vmul.f32 %v3572, %v1330
  %v3703 = vmul.f32 %v3574, %v1332
  %v3704 = vmul.f32 %v3578, %v1404
  %v3705 = vmul.f32 %v3580, %v1406
  %v3706 = vmul.f32 %v3584, %v1478
  %v3707 = vmul.f32 %v3586, %v1480
  %v3708 = vmul.f32 %v3590, %v1552
  %v3709 = vmul.f32 %v3592, %v1554
  %v3710 = vmul.f32 %v3596, %v1626
  %v3711 = vmul.f32 %v3598, %v1628
  %v3712 = vmul.f32 %v3602, %v1700
  %v3713 = vmul.f32 %v3604, %v1702
  %v3714 = vmul.f32 %v3608, %v1774
  %v3715 = vmul.f32 %v3610, %v1776
  %v3716 = vmul.f32 %v3614, %v1848
  %v3717 = vmul.f32 %v3616, %v1850
  %v3718 = vmul.f32 %v3620, %v1922
  %v3719 = vmul.f32 %v3622, %v1924
  %v3720 = vmul.f32 %v3626, %v1996
  %v3721 = vmul.f32 %v3628, %v1998
  %v3722 = vmul.f32 %v3632, %v2070
  %v3723 = vmul.f32 %v3634, %v2072
  %v3724 = vmul.f32 %v3638, %v2144
  %v3725 = vmul.f32 %v3640, %v2146
  %v3726 = vmul.f32 %v3644, %v2218
  %v3727 = vmul.f32 %v3646, %v2220
  %v3728 = vmul.f32 %v3650, %v2292
  %v3729 = vmul.f32 %v3652, %v2294
  %v3730 = vmul.f32 %v3656, %v2366
  %v3731 = vmul.f32 %v3658, %v2368
  %v3732 = vmul.f32 %v3662, %v2440
  %v3733 = vmul.f32 %v3664, %v2442
  %v3734 = vmul.f32 %v3668, %v2514
  %v3735 = vmul.f32 %v3670, %v2516
  %v3736 = vadd.f32 %v3672, %v3674
  %v3737 = vadd.f32 %v3736, %v3676
  %v3738 = vadd.f32 %v3737, %v3678
  %v3739 = vadd.f32 %v3738, %v3680
  %v3740 = vadd.f32 %v3739, %v3682
  %v3741 = vadd.f32 %v3740, %v3684
  %v3742 = vadd.f32 %v3741, %v3686
  %v3743 = vadd.f32 %v3742, %v3688
  %v3744 = vadd.f32 %v3743, %v3690
  %v3745 = vadd.f32 %v3744, %v3692
  %v3746 = vadd.f32 %v3745, %v3694
  %v3747 = vadd.f32 %v3746, %v3696
  %v3748 = vadd.f32 %v3747, %v3698
  %v3749 = vadd.f32 %v3748, %v3700
  %v3750 = vadd.f32 %v3749, %v3702
  %v3751 = vadd.f32 %v3750, %v3704
  %v3752 = vadd.f32 %v3751, %v3706
  %v3753 = vadd.f32 %v3752, %v3708
  %v3754 = vadd.f32 %v3753, %v3710
  %v3755 = vadd.f32 %v3754, %v3712
  %v3756 = vadd.f32 %v3755, %v3714
  %v3757 = vadd.f32 %v3756, %v3716
  %v3758 = vadd.f32 %v3757, %v3718
  %v3759 = vadd.f32 %v3758, %v3720
  %v3760 = vadd.f32 %v3759, %v3722
  %v3761 = vadd.f32 %v3760, %v3724
  %v3762 = vadd.f32 %v3761, %v3726
  %v3763 = vadd.f32 %v3762, %v3728
  %v3764 = vadd.f32 %v3763, %v3730
  %v3765 = vadd.f32 %v3764, %v3732
  %v3766 = vadd.f32 %v3765, %v3734
  %v3767 = vadd.f32 %v3673, %v3675
  %v3768 = vadd.f32 %v3767, %v3677
  %v3769 = vadd.f32 %v3768, %v3679
  %v3770 = vadd.f32 %v3769, %v3681
  %v3771 = vadd.f32 %v3770, %v3683
  %v3772 = vadd.f32 %v3771, %v3685
  %v3773 = vadd.f32 %v3772, %v3687
  %v3774 = vadd.f32 %v3773, %v3689
  %v3775 = vadd.f32 %v3774, %v3691
  %v3776 = vadd.f32 %v3775, %v3693
  %v3777 = vadd.f32 %v3776, %v3695
  %v3778 = vadd.f32 %v3777, %v3697
  %v3779 = vadd.f32 %v3778, %v3699
  %v3780 = vadd.f32 %v3779, %v3701
  %v3781 = vadd.f32 %v3780, %v3703
  %v3782 = vadd.f32 %v3781, %v3705
  %v3783 = vadd.f32 %v3782, %v3707
  %v3784 = vadd.f32 %v3783, %v3709
  %v3785 = vadd.f32 %v3784, %v3711
  %v3786 = vadd.f32 %v3785, %v3713
  %v3787 = vadd.f32 %v3786, %v3715
  %v3788 = vadd.f32 %v3787, %v3717
  %v3789 = vadd.f32 %v3788, %v3719
  %v3790 = vadd.f32 %v3789, %v3721
  %v3791 = vadd.f32 %v3790, %v3723
  %v3792 = vadd.f32 %v3791, %v3725
  %v3793 = vadd.f32 %v3792, %v3727
  %v3794 = vadd.f32 %v3793, %v3729
  %v3795 = vadd.f32 %v3794, %v3731
  %v3796 = vadd.f32 %v3795, %v3733
  %v3797 = vadd.f32 %v3796, %v3735
  %v3798 = vmul.f32 %v3766, %v3766
  %v3799 = vmul.f32 %v3797, %v3797
  %3800 = vmatprep.subr.mxu0 0.0
  %3801 = vmatpush1.msra.mxu0 %v113
  %3802 = vmatprep.subr.mxu0 0.0
  %3803 = vmatpush1.msra.mxu0 %v114
  %3804 = vmatprep.subr.mxu0 0.0
  %3805 = vmatpush1.msra.mxu0 %v115
  %3806 = vmatprep.subr.mxu0 0.0
  %3807 = vmatpush1.msra.mxu0 %v116
  %3808 = vmatprep.subr.mxu0 0.0
  %3809 = vmatpush1.msra.mxu0 %v117
  %3810 = vmatprep.subr.mxu0 0.0
  %3811 = vmatpush1.msra.mxu0 %v118
  %3812 = vmatprep.subr.mxu0 0.0
  %3813 = vmatpush1.msra.mxu0 %v119
  %3814 = vmatprep.subr.mxu0 0.0
  %3815 = vmatpush1.msra.mxu0 %v120
  %3816 = vmatprep.subr.mxu0 0.0
  %3817 = vmatpush1.msra.mxu0 %v121
  %3818 = vmatprep.subr.mxu0 0.0
  %3819 = vmatpush1.msra.mxu0 %v122
  %3820 = vmatprep.subr.mxu0 0.0
  %3821 = vmatpush1.msra.mxu0 %v123
  %3822 = vmatprep.subr.mxu0 0.0
  %3823 = vmatpush1.msra.mxu0 %v124
  %3824 = vmatprep.subr.mxu0 0.0
  %3825 = vmatpush1.msra.mxu0 %v125
  %3826 = vmatprep.subr.mxu0 0.0
  %3827 = vmatpush1.msra.mxu0 %v126
  %3828 = vmatprep.subr.mxu0 0.0
  %3829 = vmatpush1.msra.mxu0 %v127
  %3830 = vmatprep.subr.mxu0 0.0
  %3831 = vmatpush1.msra.mxu0 %v128
  %3832 = vmatprep.subr.mxu0 0.0
  %3833 = vmatpush1.msra.mxu0 %v129
  %3834 = vmatprep.subr.mxu0 0.0
  %3835 = vmatpush1.msra.mxu0 %v130
  %3836 = vmatprep.subr.mxu0 0.0
  %3837 = vmatpush1.msra.mxu0 %v131
  %3838 = vmatprep.subr.mxu0 0.0
  %3839 = vmatpush1.msra.mxu0 %v132
  %3840 = vmatprep.subr.mxu0 0.0
  %3841 = vmatpush1.msra.mxu0 %v133
  %3842 = vmatprep.subr.mxu0 0.0
  %3843 = vmatpush1.msra.mxu0 %v134
  %3844 = vmatprep.subr.mxu0 0.0
  %3845 = vmatpush1.msra.mxu0 %v135
  %3846 = vmatprep.subr.mxu0 0.0
  %3847 = vmatpush1.msra.mxu0 %v136
  %3848 = vmatprep.subr.mxu0 0.0
  %3849 = vmatpush1.msra.mxu0 %v137
  %3850 = vmatprep.subr.mxu0 0.0
  %3851 = vmatpush1.msra.mxu0 %v138
  %3852 = vmatprep.subr.mxu0 0.0
  %3853 = vmatpush1.msra.mxu0 %v139
  %3854 = vmatprep.subr.mxu0 0.0
  %3855 = vmatpush1.msra.mxu0 %v140
  %3856 = vmatprep.subr.mxu0 0.0
  %3857 = vmatpush1.msra.mxu0 %v141
  %3858 = vmatprep.subr.mxu0 0.0
  %3859 = vmatpush1.msra.mxu0 %v142
  %3860 = vmatprep.subr.mxu0 0.0
  %3861 = vmatpush1.msra.mxu0 %v143
  %3862 = vmatprep.subr.mxu0 0.0
  %3863 = vmatpush1.msra.mxu0 %v144
  %3864 = vmatprep.mubr.f32.mxu0 %v3799
  %3865 = vmatmul.mubr.f32.gmra.mrb[0].mxu0 %v3798
  %v3866 = vpop.f32.mrb[0].mxu0
  %v3867 = vadd.f32 0.0, %v3866
  %v3868 = vpop.f32.mrb[0].mxu0
  %3869 = vdwg.mxu0
  %v3871 = vsel %vm2654, %v3867, 0
  %3873 = vmatprep.subr.mxu0 %v146
  %3874 = vmatpush1.msra.mxu0 %v145
  %3875 = vmatprep.subr.mxu0 %v148
  %3876 = vmatpush1.msra.mxu0 %v147
  %3877 = vmatprep.subr.mxu0 0.0
  %3878 = vmatpush1.msra.mxu0 0.0
  %3879 = vmatprep.subr.mxu0 0.0
  %3880 = vmatpush1.msra.mxu0 0.0
  %3881 = vmatprep.subr.mxu0 0.0
  %3882 = vmatpush1.msra.mxu0 0.0
  %3883 = vmatprep.subr.mxu0 0.0
  %3884 = vmatpush1.msra.mxu0 0.0
  %3885 = vmatprep.subr.mxu0 0.0
  %3886 = vmatpush1.msra.mxu0 0.0
  %3887 = vmatprep.subr.mxu0 0.0
  %3888 = vmatpush1.msra.mxu0 0.0
  %3889 = vmatprep.subr.mxu0 0.0
  %3890 = vmatpush1.msra.mxu0 0.0
  %3891 = vmatprep.subr.mxu0 0.0
  %3892 = vmatpush1.msra.mxu0 0.0
  %3893 = vmatprep.subr.mxu0 0.0
  %3894 = vmatpush1.msra.mxu0 0.0
  %3895 = vmatprep.subr.mxu0 0.0
  %3896 = vmatpush1.msra.mxu0 0.0
  %3897 = vmatprep.subr.mxu0 0.0
  %3898 = vmatpush1.msra.mxu0 0.0
  %3899 = vmatprep.subr.mxu0 0.0
  %3900 = vmatpush1.msra.mxu0 0.0
  %3901 = vmatprep.subr.mxu0 0.0
  %3902 = vmatpush1.msra.mxu0 0.0
  %3903 = vmatprep.subr.mxu0 0.0
  %3904 = vmatpush1.msra.mxu0 0.0
  %3905 = vmatprep.subr.mxu0 0.0
  %3906 = vmatpush1.msra.mxu0 0.0
  %3907 = vmatprep.subr.mxu0 0.0
  %3908 = vmatpush1.msra.mxu0 0.0
  %3909 = vmatprep.subr.mxu0 0.0
  %3910 = vmatpush1.msra.mxu0 0.0
  %3911 = vmatprep.subr.mxu0 0.0
  %3912 = vmatpush1.msra.mxu0 0.0
  %3913 = vmatprep.subr.mxu0 0.0
  %3914 = vmatpush1.msra.mxu0 0.0
  %3915 = vmatprep.subr.mxu0 0.0
  %3916 = vmatpush1.msra.mxu0 0.0
  %3917 = vmatprep.subr.mxu0 0.0
  %3918 = vmatpush1.msra.mxu0 0.0
  %3919 = vmatprep.subr.mxu0 0.0
  %3920 = vmatpush1.msra.mxu0 0.0
  %3921 = vmatprep.subr.mxu0 0.0
  %3922 = vmatpush1.msra.mxu0 0.0
  %3923 = vmatprep.subr.mxu0 0.0
  %3924 = vmatpush1.msra.mxu0 0.0
  %3925 = vmatprep.subr.mxu0 0.0
  %3926 = vmatpush1.msra.mxu0 0.0
  %3927 = vmatprep.subr.mxu0 0.0
  %3928 = vmatpush1.msra.mxu0 0.0
  %3929 = vmatprep.subr.mxu0 0.0
  %3930 = vmatpush1.msra.mxu0 0.0
  %3931 = vmatprep.subr.mxu0 0.0
  %3932 = vmatpush1.msra.mxu0 0.0
  %3933 = vmatprep.subr.mxu0 0.0
  %3934 = vmatpush1.msra.mxu0 0.0
  %3935 = vmatprep.subr.mxu0 0.0
  %3936 = vmatpush1.msra.mxu0 0.0
  %3937 = vmatprep.mubr.f32.mxu0 0.0
  %3938 = vmatmul.mubr.f32.gmra.mrb[0].mxu0 %v3871
  %v3939 = vpop.f32.mrb[0].mxu0
  %v3940 = vadd.f32 0.0, %v3939
  %v3941 = vpop.f32.mrb[0].mxu0
  %v3942 = vadd.f32 0.0, %v3941
  %3943 = vdwg.mxu0
  %v3944 = vadd.f32 %v3940, 1.0
  %v3945 = vadd.f32 %v3942, 1.0
  %v3946 = vrcp.pop %v3944
  %v3947 = vrcp.pop %v3945
  %v3948 = vmul.f32 %v3940, %v3946
  %v3949 = vmul.f32 %v3942, %v3947
  %v3950 = vmul.f32 %v3766, %v3948
  %v3951 = vmul.f32 %v3797, %v3949
  %v3952 = vadd.f32 %v3940, 1e-12
  %v3953 = vadd.f32 %v3942, 1e-12
  %v3954 = vrsqrt.pop %v3952
  %v3955 = vrsqrt.pop %v3953
  %v3956 = vmul.f32 %v3950, %v3954
  %v3957 = vmul.f32 %v3951, %v3955
  %v3958 = vmul.f32 %v220, %v3956
  %v3959 = vmul.f32 %v222, %v3957
  %v3960 = vmul.f32 %v294, %v3956
  %v3961 = vmul.f32 %v296, %v3957
  %v3962 = vmul.f32 %v368, %v3956
  %v3963 = vmul.f32 %v370, %v3957
  %v3964 = vmul.f32 %v442, %v3956
  %v3965 = vmul.f32 %v444, %v3957
  %v3966 = vmul.f32 %v516, %v3956
  %v3967 = vmul.f32 %v518, %v3957
  %v3968 = vmul.f32 %v590, %v3956
  %v3969 = vmul.f32 %v592, %v3957
  %v3970 = vmul.f32 %v664, %v3956
  %v3971 = vmul.f32 %v666, %v3957
  %v3972 = vmul.f32 %v738, %v3956
  %v3973 = vmul.f32 %v740, %v3957
  %v3974 = vmul.f32 %v812, %v3956
  %v3975 = vmul.f32 %v814, %v3957
  %v3976 = vmul.f32 %v886, %v3956
  %v3977 = vmul.f32 %v888, %v3957
  %v3978 = vmul.f32 %v960, %v3956
  %v3979 = vmul.f32 %v962, %v3957
  %v3980 = vmul.f32 %v1034, %v3956
  %v3981 = vmul.f32 %v1036, %v3957
  %v3982 = vmul.f32 %v1108, %v3956
  %v3983 = vmul.f32 %v1110, %v3957
  %v3984 = vmul.f32 %v1182, %v3956
  %v3985 = vmul.f32 %v1184, %v3957
  %v3986 = vmul.f32 %v1256, %v3956
  %v3987 = vmul.f32 %v1258, %v3957
  %v3988 = vmul.f32 %v1330, %v3956
  %v3989 = vmul.f32 %v1332, %v3957
  %v3990 = vmul.f32 %v1404, %v3956
  %v3991 = vmul.f32 %v1406, %v3957
  %v3992 = vmul.f32 %v1478, %v3956
  %v3993 = vmul.f32 %v1480, %v3957
  %v3994 = vmul.f32 %v1552, %v3956
  %v3995 = vmul.f32 %v1554, %v3957
  %v3996 = vmul.f32 %v1626, %v3956
  %v3997 = vmul.f32 %v1628, %v3957
  %v3998 = vmul.f32 %v1700, %v3956
  %v3999 = vmul.f32 %v1702, %v3957
  %v4000 = vmul.f32 %v1774, %v3956
  %v4001 = vmul.f32 %v1776, %v3957
  %v4002 = vmul.f32 %v1848, %v3956
  %v4003 = vmul.f32 %v1850, %v3957
  %v4004 = vmul.f32 %v1922, %v3956
  %v4005 = vmul.f32 %v1924, %v3957
  %v4006 = vmul.f32 %v1996, %v3956
  %v4007 = vmul.f32 %v1998, %v3957
  %v4008 = vmul.f32 %v2070, %v3956
  %v4009 = vmul.f32 %v2072, %v3957
  %v4010 = vmul.f32 %v2144, %v3956
  %v4011 = vmul.f32 %v2146, %v3957
  %v4012 = vmul.f32 %v2218, %v3956
  %v4013 = vmul.f32 %v2220, %v3957
  %v4014 = vmul.f32 %v2292, %v3956
  %v4015 = vmul.f32 %v2294, %v3957
  %v4016 = vmul.f32 %v2366, %v3956
  %v4017 = vmul.f32 %v2368, %v3957
  %v4018 = vmul.f32 %v2440, %v3956
  %v4019 = vmul.f32 %v2442, %v3957
  %v4020 = vmul.f32 %v2514, %v3956
  %v4021 = vmul.f32 %v2516, %v3957
  %4022 = vmatprep.subr.mxu0 0.0
  %4023 = vmatpush1.msra.mxu0 %v113
  %4024 = vmatprep.subr.mxu0 0.0
  %4025 = vmatpush1.msra.mxu0 %v114
  %4026 = vmatprep.subr.mxu0 0.0
  %4027 = vmatpush1.msra.mxu0 %v115
  %4028 = vmatprep.subr.mxu0 0.0
  %4029 = vmatpush1.msra.mxu0 %v116
  %4030 = vmatprep.subr.mxu0 0.0
  %4031 = vmatpush1.msra.mxu0 %v117
  %4032 = vmatprep.subr.mxu0 0.0
  %4033 = vmatpush1.msra.mxu0 %v118
  %4034 = vmatprep.subr.mxu0 0.0
  %4035 = vmatpush1.msra.mxu0 %v119
  %4036 = vmatprep.subr.mxu0 0.0
  %4037 = vmatpush1.msra.mxu0 %v120
  %4038 = vmatprep.subr.mxu0 0.0
  %4039 = vmatpush1.msra.mxu0 %v121
  %4040 = vmatprep.subr.mxu0 0.0
  %4041 = vmatpush1.msra.mxu0 %v122
  %4042 = vmatprep.subr.mxu0 0.0
  %4043 = vmatpush1.msra.mxu0 %v123
  %4044 = vmatprep.subr.mxu0 0.0
  %4045 = vmatpush1.msra.mxu0 %v124
  %4046 = vmatprep.subr.mxu0 0.0
  %4047 = vmatpush1.msra.mxu0 %v125
  %4048 = vmatprep.subr.mxu0 0.0
  %4049 = vmatpush1.msra.mxu0 %v126
  %4050 = vmatprep.subr.mxu0 0.0
  %4051 = vmatpush1.msra.mxu0 %v127
  %4052 = vmatprep.subr.mxu0 0.0
  %4053 = vmatpush1.msra.mxu0 %v128
  %4054 = vmatprep.subr.mxu0 0.0
  %4055 = vmatpush1.msra.mxu0 %v129
  %4056 = vmatprep.subr.mxu0 0.0
  %4057 = vmatpush1.msra.mxu0 %v130
  %4058 = vmatprep.subr.mxu0 0.0
  %4059 = vmatpush1.msra.mxu0 %v131
  %4060 = vmatprep.subr.mxu0 0.0
  %4061 = vmatpush1.msra.mxu0 %v132
  %4062 = vmatprep.subr.mxu0 0.0
  %4063 = vmatpush1.msra.mxu0 %v133
  %4064 = vmatprep.subr.mxu0 0.0
  %4065 = vmatpush1.msra.mxu0 %v134
  %4066 = vmatprep.subr.mxu0 0.0
  %4067 = vmatpush1.msra.mxu0 %v135
  %4068 = vmatprep.subr.mxu0 0.0
  %4069 = vmatpush1.msra.mxu0 %v136
  %4070 = vmatprep.subr.mxu0 0.0
  %4071 = vmatpush1.msra.mxu0 %v137
  %4072 = vmatprep.subr.mxu0 0.0
  %4073 = vmatpush1.msra.mxu0 %v138
  %4074 = vmatprep.subr.mxu0 0.0
  %4075 = vmatpush1.msra.mxu0 %v139
  %4076 = vmatprep.subr.mxu0 0.0
  %4077 = vmatpush1.msra.mxu0 %v140
  %4078 = vmatprep.subr.mxu0 0.0
  %4079 = vmatpush1.msra.mxu0 %v141
  %4080 = vmatprep.subr.mxu0 0.0
  %4081 = vmatpush1.msra.mxu0 %v142
  %4082 = vmatprep.subr.mxu0 0.0
  %4083 = vmatpush1.msra.mxu0 %v143
  %4084 = vmatprep.subr.mxu0 0.0
  %4085 = vmatpush1.msra.mxu0 %v144
  %4086 = vmatprep.mubr.f32.mxu0 %v3959
  %4087 = vmatmul.mubr.f32.gmra.mrb[0].mxu0 %v3958
  %v4088 = vpop.f32.mrb[0].mxu0
  %v4089 = vadd.f32 0.0, %v4088
  %v4090 = vpop.f32.mrb[0].mxu0
  %4091 = vmatprep.mubr.f32.mxu0 %v3961
  %4092 = vmatmul.mubr.f32.gmra.mrb[0].mxu0 %v3960
  %v4093 = vpop.f32.mrb[0].mxu0
  %v4094 = vadd.f32 0.0, %v4093
  %v4095 = vpop.f32.mrb[0].mxu0
  %4096 = vmatprep.mubr.f32.mxu0 %v3963
  %4097 = vmatmul.mubr.f32.gmra.mrb[0].mxu0 %v3962
  %v4098 = vpop.f32.mrb[0].mxu0
  %v4099 = vadd.f32 0.0, %v4098
  %v4100 = vpop.f32.mrb[0].mxu0
  %4101 = vmatprep.mubr.f32.mxu0 %v3965
  %4102 = vmatmul.mubr.f32.gmra.mrb[0].mxu0 %v3964
  %v4103 = vpop.f32.mrb[0].mxu0
  %v4104 = vadd.f32 0.0, %v4103
  %v4105 = vpop.f32.mrb[0].mxu0
  %4106 = vmatprep.mubr.f32.mxu0 %v3967
  %4107 = vmatmul.mubr.f32.gmra.mrb[0].mxu0 %v3966
  %v4108 = vpop.f32.mrb[0].mxu0
  %v4109 = vadd.f32 0.0, %v4108
  %v4110 = vpop.f32.mrb[0].mxu0
  %4111 = vmatprep.mubr.f32.mxu0 %v3969
  %4112 = vmatmul.mubr.f32.gmra.mrb[0].mxu0 %v3968
  %v4113 = vpop.f32.mrb[0].mxu0
  %v4114 = vadd.f32 0.0, %v4113
  %v4115 = vpop.f32.mrb[0].mxu0
  %4116 = vmatprep.mubr.f32.mxu0 %v3971
  %4117 = vmatmul.mubr.f32.gmra.mrb[0].mxu0 %v3970
  %v4118 = vpop.f32.mrb[0].mxu0
  %v4119 = vadd.f32 0.0, %v4118
  %v4120 = vpop.f32.mrb[0].mxu0
  %4121 = vmatprep.mubr.f32.mxu0 %v3973
  %4122 = vmatmul.mubr.f32.gmra.mrb[0].mxu0 %v3972
  %v4123 = vpop.f32.mrb[0].mxu0
  %v4124 = vadd.f32 0.0, %v4123
  %v4125 = vpop.f32.mrb[0].mxu0
  %4126 = vmatprep.mubr.f32.mxu0 %v3975
  %4127 = vmatmul.mubr.f32.gmra.mrb[0].mxu0 %v3974
  %v4128 = vpop.f32.mrb[0].mxu0
  %v4129 = vadd.f32 0.0, %v4128
  %v4130 = vpop.f32.mrb[0].mxu0
  %4131 = vmatprep.mubr.f32.mxu0 %v3977
  %4132 = vmatmul.mubr.f32.gmra.mrb[0].mxu0 %v3976
  %v4133 = vpop.f32.mrb[0].mxu0
  %v4134 = vadd.f32 0.0, %v4133
  %v4135 = vpop.f32.mrb[0].mxu0
  %4136 = vmatprep.mubr.f32.mxu0 %v3979
  %4137 = vmatmul.mubr.f32.gmra.mrb[0].mxu0 %v3978
  %v4138 = vpop.f32.mrb[0].mxu0
  %v4139 = vadd.f32 0.0, %v4138
  %v4140 = vpop.f32.mrb[0].mxu0
  %4141 = vmatprep.mubr.f32.mxu0 %v3981
  %4142 = vmatmul.mubr.f32.gmra.mrb[0].mxu0 %v3980
  %v4143 = vpop.f32.mrb[0].mxu0
  %v4144 = vadd.f32 0.0, %v4143
  %v4145 = vpop.f32.mrb[0].mxu0
  %4146 = vmatprep.mubr.f32.mxu0 %v3983
  %4147 = vmatmul.mubr.f32.gmra.mrb[0].mxu0 %v3982
  %v4148 = vpop.f32.mrb[0].mxu0
  %v4149 = vadd.f32 0.0, %v4148
  %v4150 = vpop.f32.mrb[0].mxu0
  %4151 = vmatprep.mubr.f32.mxu0 %v3985
  %4152 = vmatmul.mubr.f32.gmra.mrb[0].mxu0 %v3984
  %v4153 = vpop.f32.mrb[0].mxu0
  %v4154 = vadd.f32 0.0, %v4153
  %v4155 = vpop.f32.mrb[0].mxu0
  %4156 = vmatprep.mubr.f32.mxu0 %v3987
  %4157 = vmatmul.mubr.f32.gmra.mrb[0].mxu0 %v3986
  %v4158 = vpop.f32.mrb[0].mxu0
  %v4159 = vadd.f32 0.0, %v4158
  %v4160 = vpop.f32.mrb[0].mxu0
  %4161 = vmatprep.mubr.f32.mxu0 %v3989
  %4162 = vmatmul.mubr.f32.gmra.mrb[0].mxu0 %v3988
  %v4163 = vpop.f32.mrb[0].mxu0
  %v4164 = vadd.f32 0.0, %v4163
  %v4165 = vpop.f32.mrb[0].mxu0
  %4166 = vmatprep.mubr.f32.mxu0 %v3991
  %4167 = vmatmul.mubr.f32.gmra.mrb[0].mxu0 %v3990
  %v4168 = vpop.f32.mrb[0].mxu0
  %v4169 = vadd.f32 0.0, %v4168
  %v4170 = vpop.f32.mrb[0].mxu0
  %4171 = vmatprep.mubr.f32.mxu0 %v3993
  %4172 = vmatmul.mubr.f32.gmra.mrb[0].mxu0 %v3992
  %v4173 = vpop.f32.mrb[0].mxu0
  %v4174 = vadd.f32 0.0, %v4173
  %v4175 = vpop.f32.mrb[0].mxu0
  %4176 = vmatprep.mubr.f32.mxu0 %v3995
  %4177 = vmatmul.mubr.f32.gmra.mrb[0].mxu0 %v3994
  %v4178 = vpop.f32.mrb[0].mxu0
  %v4179 = vadd.f32 0.0, %v4178
  %v4180 = vpop.f32.mrb[0].mxu0
  %4181 = vmatprep.mubr.f32.mxu0 %v3997
  %4182 = vmatmul.mubr.f32.gmra.mrb[0].mxu0 %v3996
  %v4183 = vpop.f32.mrb[0].mxu0
  %v4184 = vadd.f32 0.0, %v4183
  %v4185 = vpop.f32.mrb[0].mxu0
  %4186 = vmatprep.mubr.f32.mxu0 %v3999
  %4187 = vmatmul.mubr.f32.gmra.mrb[0].mxu0 %v3998
  %v4188 = vpop.f32.mrb[0].mxu0
  %v4189 = vadd.f32 0.0, %v4188
  %v4190 = vpop.f32.mrb[0].mxu0
  %4191 = vmatprep.mubr.f32.mxu0 %v4001
  %4192 = vmatmul.mubr.f32.gmra.mrb[0].mxu0 %v4000
  %v4193 = vpop.f32.mrb[0].mxu0
  %v4194 = vadd.f32 0.0, %v4193
  %v4195 = vpop.f32.mrb[0].mxu0
  %4196 = vmatprep.mubr.f32.mxu0 %v4003
  %4197 = vmatmul.mubr.f32.gmra.mrb[0].mxu0 %v4002
  %v4198 = vpop.f32.mrb[0].mxu0
  %v4199 = vadd.f32 0.0, %v4198
  %v4200 = vpop.f32.mrb[0].mxu0
  %4201 = vmatprep.mubr.f32.mxu0 %v4005
  %4202 = vmatmul.mubr.f32.gmra.mrb[0].mxu0 %v4004
  %v4203 = vpop.f32.mrb[0].mxu0
  %v4204 = vadd.f32 0.0, %v4203
  %v4205 = vpop.f32.mrb[0].mxu0
  %4206 = vmatprep.mubr.f32.mxu0 %v4007
  %4207 = vmatmul.mubr.f32.gmra.mrb[0].mxu0 %v4006
  %v4208 = vpop.f32.mrb[0].mxu0
  %v4209 = vadd.f32 0.0, %v4208
  %v4210 = vpop.f32.mrb[0].mxu0
  %4211 = vmatprep.mubr.f32.mxu0 %v4009
  %4212 = vmatmul.mubr.f32.gmra.mrb[0].mxu0 %v4008
  %v4213 = vpop.f32.mrb[0].mxu0
  %v4214 = vadd.f32 0.0, %v4213
  %v4215 = vpop.f32.mrb[0].mxu0
  %4216 = vmatprep.mubr.f32.mxu0 %v4011
  %4217 = vmatmul.mubr.f32.gmra.mrb[0].mxu0 %v4010
  %v4218 = vpop.f32.mrb[0].mxu0
  %v4219 = vadd.f32 0.0, %v4218
  %v4220 = vpop.f32.mrb[0].mxu0
  %4221 = vmatprep.mubr.f32.mxu0 %v4013
  %4222 = vmatmul.mubr.f32.gmra.mrb[0].mxu0 %v4012
  %v4223 = vpop.f32.mrb[0].mxu0
  %v4224 = vadd.f32 0.0, %v4223
  %v4225 = vpop.f32.mrb[0].mxu0
  %4226 = vmatprep.mubr.f32.mxu0 %v4015
  %4227 = vmatmul.mubr.f32.gmra.mrb[0].mxu0 %v4014
  %v4228 = vpop.f32.mrb[0].mxu0
  %v4229 = vadd.f32 0.0, %v4228
  %v4230 = vpop.f32.mrb[0].mxu0
  %4231 = vmatprep.mubr.f32.mxu0 %v4017
  %4232 = vmatmul.mubr.f32.gmra.mrb[0].mxu0 %v4016
  %v4233 = vpop.f32.mrb[0].mxu0
  %v4234 = vadd.f32 0.0, %v4233
  %v4235 = vpop.f32.mrb[0].mxu0
  %4236 = vmatprep.mubr.f32.mxu0 %v4019
  %4237 = vmatmul.mubr.f32.gmra.mrb[0].mxu0 %v4018
  %v4238 = vpop.f32.mrb[0].mxu0
  %v4239 = vadd.f32 0.0, %v4238
  %v4240 = vpop.f32.mrb[0].mxu0
  %4241 = vmatprep.mubr.f32.mxu0 %v4021
  %4242 = vmatmul.mubr.f32.gmra.mrb[0].mxu0 %v4020
  %v4243 = vpop.f32.mrb[0].mxu0
  %v4244 = vadd.f32 0.0, %v4243
  %v4245 = vpop.f32.mrb[0].mxu0
  %4246 = vdwg.mxu0
  %v4247 = vadd.f32 %v3032, %v4089
  %v4248 = vadd.f32 %v3033, %v4094
  %v4249 = vadd.f32 %v3034, %v4099
  %v4250 = vadd.f32 %v3035, %v4104
  %v4251 = vadd.f32 %v3036, %v4109
  %v4252 = vadd.f32 %v3037, %v4114
  %v4253 = vadd.f32 %v3038, %v4119
  %v4254 = vadd.f32 %v3039, %v4124
  %v4255 = vadd.f32 %v3040, %v4129
  %v4256 = vadd.f32 %v3041, %v4134
  %v4257 = vadd.f32 %v3042, %v4139
  %v4258 = vadd.f32 %v3043, %v4144
  %v4259 = vadd.f32 %v3044, %v4149
  %v4260 = vadd.f32 %v3045, %v4154
  %v4261 = vadd.f32 %v3046, %v4159
  %v4262 = vadd.f32 %v3047, %v4164
  %v4263 = vadd.f32 %v3048, %v4169
  %v4264 = vadd.f32 %v3049, %v4174
  %v4265 = vadd.f32 %v3050, %v4179
  %v4266 = vadd.f32 %v3051, %v4184
  %v4267 = vadd.f32 %v3052, %v4189
  %v4268 = vadd.f32 %v3053, %v4194
  %v4269 = vadd.f32 %v3054, %v4199
  %v4270 = vadd.f32 %v3055, %v4204
  %v4271 = vadd.f32 %v3056, %v4209
  %v4272 = vadd.f32 %v3057, %v4214
  %v4273 = vadd.f32 %v3058, %v4219
  %v4274 = vadd.f32 %v3059, %v4224
  %v4275 = vadd.f32 %v3060, %v4229
  %v4276 = vadd.f32 %v3061, %v4234
  %v4277 = vadd.f32 %v3062, %v4239
  %v4278 = vadd.f32 %v3063, %v4244
  %v4279 = vsel %vm2654, %v4247, -inf
  %v4280 = vsel %vm2654, %v4248, -inf
  %v4281 = vsel %vm2654, %v4249, -inf
  %v4282 = vsel %vm2654, %v4250, -inf
  %v4283 = vsel %vm2654, %v4251, -inf
  %v4284 = vmax.f32 %v4279, %v4283
  %v4285 = vsel %vm2654, %v4252, -inf
  %v4286 = vmax.f32 %v4280, %v4285
  %v4287 = vsel %vm2654, %v4253, -inf
  %v4288 = vmax.f32 %v4281, %v4287
  %v4289 = vsel %vm2654, %v4254, -inf
  %v4290 = vmax.f32 %v4282, %v4289
  %v4291 = vsel %vm2654, %v4255, -inf
  %v4292 = vmax.f32 %v4284, %v4291
  %v4293 = vsel %vm2654, %v4256, -inf
  %v4294 = vmax.f32 %v4286, %v4293
  %v4295 = vsel %vm2654, %v4257, -inf
  %v4296 = vmax.f32 %v4288, %v4295
  %v4297 = vsel %vm2654, %v4258, -inf
  %v4298 = vmax.f32 %v4290, %v4297
  %v4299 = vsel %vm2654, %v4259, -inf
  %v4300 = vmax.f32 %v4292, %v4299
  %v4301 = vsel %vm2654, %v4260, -inf
  %v4302 = vmax.f32 %v4294, %v4301
  %v4303 = vsel %vm2654, %v4261, -inf
  %v4304 = vmax.f32 %v4296, %v4303
  %v4305 = vsel %vm2654, %v4262, -inf
  %v4306 = vmax.f32 %v4298, %v4305
  %v4307 = vsel %vm2654, %v4263, -inf
  %v4308 = vmax.f32 %v4300, %v4307
  %v4309 = vsel %vm2654, %v4264, -inf
  %v4310 = vmax.f32 %v4302, %v4309
  %v4311 = vsel %vm2654, %v4265, -inf
  %v4312 = vmax.f32 %v4304, %v4311
  %v4313 = vsel %vm2654, %v4266, -inf
  %v4314 = vmax.f32 %v4306, %v4313
  %v4315 = vsel %vm2654, %v4267, -inf
  %v4316 = vmax.f32 %v4308, %v4315
  %v4317 = vsel %vm2654, %v4268, -inf
  %v4318 = vmax.f32 %v4310, %v4317
  %v4319 = vsel %vm2654, %v4269, -inf
  %v4320 = vmax.f32 %v4312, %v4319
  %v4321 = vsel %vm2654, %v4270, -inf
  %v4322 = vmax.f32 %v4314, %v4321
  %v4323 = vsel %vm2654, %v4271, -inf
  %v4324 = vmax.f32 %v4316, %v4323
  %v4325 = vsel %vm2654, %v4272, -inf
  %v4326 = vmax.f32 %v4318, %v4325
  %v4327 = vsel %vm2654, %v4273, -inf
  %v4328 = vmax.f32 %v4320, %v4327
  %v4329 = vsel %vm2654, %v4274, -inf
  %v4330 = vmax.f32 %v4322, %v4329
  %v4331 = vsel %vm2654, %v4275, -inf
  %v4332 = vmax.f32 %v4324, %v4331
  %v4333 = vsel %vm2654, %v4276, -inf
  %v4334 = vmax.f32 %v4326, %v4333
  %v4335 = vsel %vm2654, %v4277, -inf
  %v4336 = vmax.f32 %v4328, %v4335
  %v4337 = vsel %vm2654, %v4278, -inf
  %v4338 = vmax.f32 %v4330, %v4337
  %v4339 = vmax.f32 %v4332, %v4334
  %v4340 = vmax.f32 %v4336, %v4338
  %v4341 = vmax.f32 %v4339, %v4340
  %v4342 = vsub.f32 %v4247, %v4341
  %v4343 = vsub.f32 %v4248, %v4341
  %v4344 = vsub.f32 %v4249, %v4341
  %v4345 = vsub.f32 %v4250, %v4341
  %v4346 = vsub.f32 %v4251, %v4341
  %v4347 = vsub.f32 %v4252, %v4341
  %v4348 = vsub.f32 %v4253, %v4341
  %v4349 = vsub.f32 %v4254, %v4341
  %v4350 = vsub.f32 %v4255, %v4341
  %v4351 = vsub.f32 %v4256, %v4341
  %v4352 = vsub.f32 %v4257, %v4341
  %v4353 = vsub.f32 %v4258, %v4341
  %v4354 = vsub.f32 %v4259, %v4341
  %v4355 = vsub.f32 %v4260, %v4341
  %v4356 = vsub.f32 %v4261, %v4341
  %v4357 = vsub.f32 %v4262, %v4341
  %v4358 = vsub.f32 %v4263, %v4341
  %v4359 = vsub.f32 %v4264, %v4341
  %v4360 = vsub.f32 %v4265, %v4341
  %v4361 = vsub.f32 %v4266, %v4341
  %v4362 = vsub.f32 %v4267, %v4341
  %v4363 = vsub.f32 %v4268, %v4341
  %v4364 = vsub.f32 %v4269, %v4341
  %v4365 = vsub.f32 %v4270, %v4341
  %v4366 = vsub.f32 %v4271, %v4341
  %v4367 = vsub.f32 %v4272, %v4341
  %v4368 = vsub.f32 %v4273, %v4341
  %v4369 = vsub.f32 %v4274, %v4341
  %v4370 = vsub.f32 %v4275, %v4341
  %v4371 = vsub.f32 %v4276, %v4341
  %v4372 = vsub.f32 %v4277, %v4341
  %v4373 = vsub.f32 %v4278, %v4341
  %v4374 = vmul.f32 %v4342, 1.442695
  %v4375 = vpow.pop %v4374
  %v4376 = vmul.f32 %v4343, 1.442695
  %v4377 = vpow.pop %v4376
  %v4378 = vmul.f32 %v4344, 1.442695
  %v4379 = vpow.pop %v4378
  %v4380 = vmul.f32 %v4345, 1.442695
  %v4381 = vpow.pop %v4380
  %v4382 = vmul.f32 %v4346, 1.442695
  %v4383 = vpow.pop %v4382
  %v4384 = vmul.f32 %v4347, 1.442695
  %v4385 = vpow.pop %v4384
  %v4386 = vmul.f32 %v4348, 1.442695
  %v4387 = vpow.pop %v4386
  %v4388 = vmul.f32 %v4349, 1.442695
  %v4389 = vpow.pop %v4388
  %v4390 = vmul.f32 %v4350, 1.442695
  %v4391 = vpow.pop %v4390
  %v4392 = vmul.f32 %v4351, 1.442695
  %v4393 = vpow.pop %v4392
  %v4394 = vmul.f32 %v4352, 1.442695
  %v4395 = vpow.pop %v4394
  %v4396 = vmul.f32 %v4353, 1.442695
  %v4397 = vpow.pop %v4396
  %v4398 = vmul.f32 %v4354, 1.442695
  %v4399 = vpow.pop %v4398
  %v4400 = vmul.f32 %v4355, 1.442695
  %v4401 = vpow.pop %v4400
  %v4402 = vmul.f32 %v4356, 1.442695
  %v4403 = vpow.pop %v4402
  %v4404 = vmul.f32 %v4357, 1.442695
  %v4405 = vpow.pop %v4404
  %v4406 = vmul.f32 %v4358, 1.442695
  %v4407 = vpow.pop %v4406
  %v4408 = vmul.f32 %v4359, 1.442695
  %v4409 = vpow.pop %v4408
  %v4410 = vmul.f32 %v4360, 1.442695
  %v4411 = vpow.pop %v4410
  %v4412 = vmul.f32 %v4361, 1.442695
  %v4413 = vpow.pop %v4412
  %v4414 = vmul.f32 %v4362, 1.442695
  %v4415 = vpow.pop %v4414
  %v4416 = vmul.f32 %v4363, 1.442695
  %v4417 = vpow.pop %v4416
  %v4418 = vmul.f32 %v4364, 1.442695
  %v4419 = vpow.pop %v4418
  %v4420 = vmul.f32 %v4365, 1.442695
  %v4421 = vpow.pop %v4420
  %v4422 = vmul.f32 %v4366, 1.442695
  %v4423 = vpow.pop %v4422
  %v4424 = vmul.f32 %v4367, 1.442695
  %v4425 = vpow.pop %v4424
  %v4426 = vmul.f32 %v4368, 1.442695
  %v4427 = vpow.pop %v4426
  %v4428 = vmul.f32 %v4369, 1.442695
  %v4429 = vpow.pop %v4428
  %v4430 = vmul.f32 %v4370, 1.442695
  %v4431 = vpow.pop %v4430
  %v4432 = vmul.f32 %v4371, 1.442695
  %v4433 = vpow.pop %v4432
  %v4434 = vmul.f32 %v4372, 1.442695
  %v4435 = vpow.pop %v4434
  %v4436 = vmul.f32 %v4373, 1.442695
  %v4437 = vpow.pop %v4436
  %v4438 = vsel %vm2654, %v4375, 0.0
  %v4439 = vsel %vm2654, %v4377, 0.0
  %v4440 = vadd.f32 %v4438, %v4439
  %v4441 = vsel %vm2654, %v4379, 0.0
  %v4442 = vadd.f32 %v4440, %v4441
  %v4443 = vsel %vm2654, %v4381, 0.0
  %v4444 = vadd.f32 %v4442, %v4443
  %v4445 = vsel %vm2654, %v4383, 0.0
  %v4446 = vadd.f32 %v4444, %v4445
  %v4447 = vsel %vm2654, %v4385, 0.0
  %v4448 = vadd.f32 %v4446, %v4447
  %v4449 = vsel %vm2654, %v4387, 0.0
  %v4450 = vadd.f32 %v4448, %v4449
  %v4451 = vsel %vm2654, %v4389, 0.0
  %v4452 = vadd.f32 %v4450, %v4451
  %v4453 = vsel %vm2654, %v4391, 0.0
  %v4454 = vadd.f32 %v4452, %v4453
  %v4455 = vsel %vm2654, %v4393, 0.0
  %v4456 = vadd.f32 %v4454, %v4455
  %v4457 = vsel %vm2654, %v4395, 0.0
  %v4458 = vadd.f32 %v4456, %v4457
  %v4459 = vsel %vm2654, %v4397, 0.0
  %v4460 = vadd.f32 %v4458, %v4459
  %v4461 = vsel %vm2654, %v4399, 0.0
  %v4462 = vadd.f32 %v4460, %v4461
  %v4463 = vsel %vm2654, %v4401, 0.0
  %v4464 = vadd.f32 %v4462, %v4463
  %v4465 = vsel %vm2654, %v4403, 0.0
  %v4466 = vadd.f32 %v4464, %v4465
  %v4467 = vsel %vm2654, %v4405, 0.0
  %v4468 = vadd.f32 %v4466, %v4467
  %v4469 = vsel %vm2654, %v4407, 0.0
  %v4470 = vadd.f32 %v4468, %v4469
  %v4471 = vsel %vm2654, %v4409, 0.0
  %v4472 = vadd.f32 %v4470, %v4471
  %v4473 = vsel %vm2654, %v4411, 0.0
  %v4474 = vadd.f32 %v4472, %v4473
  %v4475 = vsel %vm2654, %v4413, 0.0
  %v4476 = vadd.f32 %v4474, %v4475
  %v4477 = vsel %vm2654, %v4415, 0.0
  %v4478 = vadd.f32 %v4476, %v4477
  %v4479 = vsel %vm2654, %v4417, 0.0
  %v4480 = vadd.f32 %v4478, %v4479
  %v4481 = vsel %vm2654, %v4419, 0.0
  %v4482 = vadd.f32 %v4480, %v4481
  %v4483 = vsel %vm2654, %v4421, 0.0
  %v4484 = vadd.f32 %v4482, %v4483
  %v4485 = vsel %vm2654, %v4423, 0.0
  %v4486 = vadd.f32 %v4484, %v4485
  %v4487 = vsel %vm2654, %v4425, 0.0
  %v4488 = vadd.f32 %v4486, %v4487
  %v4489 = vsel %vm2654, %v4427, 0.0
  %v4490 = vadd.f32 %v4488, %v4489
  %v4491 = vsel %vm2654, %v4429, 0.0
  %v4492 = vadd.f32 %v4490, %v4491
  %v4493 = vsel %vm2654, %v4431, 0.0
  %v4494 = vadd.f32 %v4492, %v4493
  %v4495 = vsel %vm2654, %v4433, 0.0
  %v4496 = vadd.f32 %v4494, %v4495
  %v4497 = vsel %vm2654, %v4435, 0.0
  %v4498 = vadd.f32 %v4496, %v4497
  %v4499 = vsel %vm2654, %v4437, 0.0
  %v4500 = vadd.f32 %v4498, %v4499
  %v4501 = vrcp.pop %v4500
  %v4502 = vmul.f32 %v4375, %v4501
  %v4503 = vmul.f32 %v4377, %v4501
  %v4504 = vmul.f32 %v4379, %v4501
  %v4505 = vmul.f32 %v4381, %v4501
  %v4506 = vmul.f32 %v4383, %v4501
  %v4507 = vmul.f32 %v4385, %v4501
  %v4508 = vmul.f32 %v4387, %v4501
  %v4509 = vmul.f32 %v4389, %v4501
  %v4510 = vmul.f32 %v4391, %v4501
  %v4511 = vmul.f32 %v4393, %v4501
  %v4512 = vmul.f32 %v4395, %v4501
  %v4513 = vmul.f32 %v4397, %v4501
  %v4514 = vmul.f32 %v4399, %v4501
  %v4515 = vmul.f32 %v4401, %v4501
  %v4516 = vmul.f32 %v4403, %v4501
  %v4517 = vmul.f32 %v4405, %v4501
  %v4518 = vmul.f32 %v4407, %v4501
  %v4519 = vmul.f32 %v4409, %v4501
  %v4520 = vmul.f32 %v4411, %v4501
  %v4521 = vmul.f32 %v4413, %v4501
  %v4522 = vmul.f32 %v4415, %v4501
  %v4523 = vmul.f32 %v4417, %v4501
  %v4524 = vmul.f32 %v4419, %v4501
  %v4525 = vmul.f32 %v4421, %v4501
  %v4526 = vmul.f32 %v4423, %v4501
  %v4527 = vmul.f32 %v4425, %v4501
  %v4528 = vmul.f32 %v4427, %v4501
  %v4529 = vmul.f32 %v4429, %v4501
  %v4530 = vmul.f32 %v4431, %v4501
  %v4531 = vmul.f32 %v4433, %v4501
  %v4532 = vmul.f32 %v4435, %v4501
  %v4533 = vmul.f32 %v4437, %v4501
  %v4535 = vsel %vm2654, %v4502, 0
  %v4538 = vsel %vm2654, %v4503, 0
  %v4541 = vsel %vm2654, %v4504, 0
  %v4544 = vsel %vm2654, %v4505, 0
  %v4547 = vsel %vm2654, %v4506, 0
  %v4550 = vsel %vm2654, %v4507, 0
  %v4553 = vsel %vm2654, %v4508, 0
  %v4556 = vsel %vm2654, %v4509, 0
  %v4559 = vsel %vm2654, %v4510, 0
  %v4562 = vsel %vm2654, %v4511, 0
  %v4565 = vsel %vm2654, %v4512, 0
  %v4568 = vsel %vm2654, %v4513, 0
  %v4571 = vsel %vm2654, %v4514, 0
  %v4574 = vsel %vm2654, %v4515, 0
  %v4577 = vsel %vm2654, %v4516, 0
  %v4580 = vsel %vm2654, %v4517, 0
  %v4583 = vsel %vm2654, %v4518, 0
  %v4586 = vsel %vm2654, %v4519, 0
  %v4589 = vsel %vm2654, %v4520, 0
  %v4592 = vsel %vm2654, %v4521, 0
  %v4595 = vsel %vm2654, %v4522, 0
  %v4598 = vsel %vm2654, %v4523, 0
  %v4601 = vsel %vm2654, %v4524, 0
  %v4604 = vsel %vm2654, %v4525, 0
  %v4607 = vsel %vm2654, %v4526, 0
  %v4610 = vsel %vm2654, %v4527, 0
  %v4613 = vsel %vm2654, %v4528, 0
  %v4616 = vsel %vm2654, %v4529, 0
  %v4619 = vsel %vm2654, %v4530, 0
  %v4622 = vsel %vm2654, %v4531, 0
  %v4625 = vsel %vm2654, %v4532, 0
  %v4628 = vsel %vm2654, %v4533, 0
  %4630 = vmatprep.subr.mxu0 %v146
  %4631 = vmatpush1.msra.mxu0 %v145
  %4632 = vmatprep.subr.mxu0 %v148
  %4633 = vmatpush1.msra.mxu0 %v147
  %4634 = vmatprep.subr.mxu0 0.0
  %4635 = vmatpush1.msra.mxu0 0.0
  %4636 = vmatprep.subr.mxu0 0.0
  %4637 = vmatpush1.msra.mxu0 0.0
  %4638 = vmatprep.subr.mxu0 0.0
  %4639 = vmatpush1.msra.mxu0 0.0
  %4640 = vmatprep.subr.mxu0 0.0
  %4641 = vmatpush1.msra.mxu0 0.0
  %4642 = vmatprep.subr.mxu0 0.0
  %4643 = vmatpush1.msra.mxu0 0.0
  %4644 = vmatprep.subr.mxu0 0.0
  %4645 = vmatpush1.msra.mxu0 0.0
  %4646 = vmatprep.subr.mxu0 0.0
  %4647 = vmatpush1.msra.mxu0 0.0
  %4648 = vmatprep.subr.mxu0 0.0
  %4649 = vmatpush1.msra.mxu0 0.0
  %4650 = vmatprep.subr.mxu0 0.0
  %4651 = vmatpush1.msra.mxu0 0.0
  %4652 = vmatprep.subr.mxu0 0.0
  %4653 = vmatpush1.msra.mxu0 0.0
  %4654 = vmatprep.subr.mxu0 0.0
  %4655 = vmatpush1.msra.mxu0 0.0
  %4656 = vmatprep.subr.mxu0 0.0
  %4657 = vmatpush1.msra.mxu0 0.0
  %4658 = vmatprep.subr.mxu0 0.0
  %4659 = vmatpush1.msra.mxu0 0.0
  %4660 = vmatprep.subr.mxu0 0.0
  %4661 = vmatpush1.msra.mxu0 0.0
  %4662 = vmatprep.subr.mxu0 0.0
  %4663 = vmatpush1.msra.mxu0 0.0
  %4664 = vmatprep.subr.mxu0 0.0
  %4665 = vmatpush1.msra.mxu0 0.0
  %4666 = vmatprep.subr.mxu0 0.0
  %4667 = vmatpush1.msra.mxu0 0.0
  %4668 = vmatprep.subr.mxu0 0.0
  %4669 = vmatpush1.msra.mxu0 0.0
  %4670 = vmatprep.subr.mxu0 0.0
  %4671 = vmatpush1.msra.mxu0 0.0
  %4672 = vmatprep.subr.mxu0 0.0
  %4673 = vmatpush1.msra.mxu0 0.0
  %4674 = vmatprep.subr.mxu0 0.0
  %4675 = vmatpush1.msra.mxu0 0.0
  %4676 = vmatprep.subr.mxu0 0.0
  %4677 = vmatpush1.msra.mxu0 0.0
  %4678 = vmatprep.subr.mxu0 0.0
  %4679 = vmatpush1.msra.mxu0 0.0
  %4680 = vmatprep.subr.mxu0 0.0
  %4681 = vmatpush1.msra.mxu0 0.0
  %4682 = vmatprep.subr.mxu0 0.0
  %4683 = vmatpush1.msra.mxu0 0.0
  %4684 = vmatprep.subr.mxu0 0.0
  %4685 = vmatpush1.msra.mxu0 0.0
  %4686 = vmatprep.subr.mxu0 0.0
  %4687 = vmatpush1.msra.mxu0 0.0
  %4688 = vmatprep.subr.mxu0 0.0
  %4689 = vmatpush1.msra.mxu0 0.0
  %4690 = vmatprep.subr.mxu0 0.0
  %4691 = vmatpush1.msra.mxu0 0.0
  %4692 = vmatprep.subr.mxu0 0.0
  %4693 = vmatpush1.msra.mxu0 0.0
  %4694 = vmatprep.mubr.f32.mxu0 0.0
  %4695 = vmatmul.mubr.f32.gmra.mrb[0].mxu0 %v4535
  %v4696 = vpop.f32.mrb[0].mxu0
  %v4697 = vadd.f32 0.0, %v4696
  %v4698 = vpop.f32.mrb[0].mxu0
  %v4699 = vadd.f32 0.0, %v4698
  %4700 = vmatprep.mubr.f32.mxu0 0.0
  %4701 = vmatmul.mubr.f32.gmra.mrb[0].mxu0 %v4538
  %v4702 = vpop.f32.mrb[0].mxu0
  %v4703 = vadd.f32 0.0, %v4702
  %v4704 = vpop.f32.mrb[0].mxu0
  %v4705 = vadd.f32 0.0, %v4704
  %4706 = vmatprep.mubr.f32.mxu0 0.0
  %4707 = vmatmul.mubr.f32.gmra.mrb[0].mxu0 %v4541
  %v4708 = vpop.f32.mrb[0].mxu0
  %v4709 = vadd.f32 0.0, %v4708
  %v4710 = vpop.f32.mrb[0].mxu0
  %v4711 = vadd.f32 0.0, %v4710
  %4712 = vmatprep.mubr.f32.mxu0 0.0
  %4713 = vmatmul.mubr.f32.gmra.mrb[0].mxu0 %v4544
  %v4714 = vpop.f32.mrb[0].mxu0
  %v4715 = vadd.f32 0.0, %v4714
  %v4716 = vpop.f32.mrb[0].mxu0
  %v4717 = vadd.f32 0.0, %v4716
  %4718 = vmatprep.mubr.f32.mxu0 0.0
  %4719 = vmatmul.mubr.f32.gmra.mrb[0].mxu0 %v4547
  %v4720 = vpop.f32.mrb[0].mxu0
  %v4721 = vadd.f32 0.0, %v4720
  %v4722 = vpop.f32.mrb[0].mxu0
  %v4723 = vadd.f32 0.0, %v4722
  %4724 = vmatprep.mubr.f32.mxu0 0.0
  %4725 = vmatmul.mubr.f32.gmra.mrb[0].mxu0 %v4550
  %v4726 = vpop.f32.mrb[0].mxu0
  %v4727 = vadd.f32 0.0, %v4726
  %v4728 = vpop.f32.mrb[0].mxu0
  %v4729 = vadd.f32 0.0, %v4728
  %4730 = vmatprep.mubr.f32.mxu0 0.0
  %4731 = vmatmul.mubr.f32.gmra.mrb[0].mxu0 %v4553
  %v4732 = vpop.f32.mrb[0].mxu0
  %v4733 = vadd.f32 0.0, %v4732
  %v4734 = vpop.f32.mrb[0].mxu0
  %v4735 = vadd.f32 0.0, %v4734
  %4736 = vmatprep.mubr.f32.mxu0 0.0
  %4737 = vmatmul.mubr.f32.gmra.mrb[0].mxu0 %v4556
  %v4738 = vpop.f32.mrb[0].mxu0
  %v4739 = vadd.f32 0.0, %v4738
  %v4740 = vpop.f32.mrb[0].mxu0
  %v4741 = vadd.f32 0.0, %v4740
  %4742 = vmatprep.mubr.f32.mxu0 0.0
  %4743 = vmatmul.mubr.f32.gmra.mrb[0].mxu0 %v4559
  %v4744 = vpop.f32.mrb[0].mxu0
  %v4745 = vadd.f32 0.0, %v4744
  %v4746 = vpop.f32.mrb[0].mxu0
  %v4747 = vadd.f32 0.0, %v4746
  %4748 = vmatprep.mubr.f32.mxu0 0.0
  %4749 = vmatmul.mubr.f32.gmra.mrb[0].mxu0 %v4562
  %v4750 = vpop.f32.mrb[0].mxu0
  %v4751 = vadd.f32 0.0, %v4750
  %v4752 = vpop.f32.mrb[0].mxu0
  %v4753 = vadd.f32 0.0, %v4752
  %4754 = vmatprep.mubr.f32.mxu0 0.0
  %4755 = vmatmul.mubr.f32.gmra.mrb[0].mxu0 %v4565
  %v4756 = vpop.f32.mrb[0].mxu0
  %v4757 = vadd.f32 0.0, %v4756
  %v4758 = vpop.f32.mrb[0].mxu0
  %v4759 = vadd.f32 0.0, %v4758
  %4760 = vmatprep.mubr.f32.mxu0 0.0
  %4761 = vmatmul.mubr.f32.gmra.mrb[0].mxu0 %v4568
  %v4762 = vpop.f32.mrb[0].mxu0
  %v4763 = vadd.f32 0.0, %v4762
  %v4764 = vpop.f32.mrb[0].mxu0
  %v4765 = vadd.f32 0.0, %v4764
  %4766 = vmatprep.mubr.f32.mxu0 0.0
  %4767 = vmatmul.mubr.f32.gmra.mrb[0].mxu0 %v4571
  %v4768 = vpop.f32.mrb[0].mxu0
  %v4769 = vadd.f32 0.0, %v4768
  %v4770 = vpop.f32.mrb[0].mxu0
  %v4771 = vadd.f32 0.0, %v4770
  %4772 = vmatprep.mubr.f32.mxu0 0.0
  %4773 = vmatmul.mubr.f32.gmra.mrb[0].mxu0 %v4574
  %v4774 = vpop.f32.mrb[0].mxu0
  %v4775 = vadd.f32 0.0, %v4774
  %v4776 = vpop.f32.mrb[0].mxu0
  %v4777 = vadd.f32 0.0, %v4776
  %4778 = vmatprep.mubr.f32.mxu0 0.0
  %4779 = vmatmul.mubr.f32.gmra.mrb[0].mxu0 %v4577
  %v4780 = vpop.f32.mrb[0].mxu0
  %v4781 = vadd.f32 0.0, %v4780
  %v4782 = vpop.f32.mrb[0].mxu0
  %v4783 = vadd.f32 0.0, %v4782
  %4784 = vmatprep.mubr.f32.mxu0 0.0
  %4785 = vmatmul.mubr.f32.gmra.mrb[0].mxu0 %v4580
  %v4786 = vpop.f32.mrb[0].mxu0
  %v4787 = vadd.f32 0.0, %v4786
  %v4788 = vpop.f32.mrb[0].mxu0
  %v4789 = vadd.f32 0.0, %v4788
  %4790 = vmatprep.mubr.f32.mxu0 0.0
  %4791 = vmatmul.mubr.f32.gmra.mrb[0].mxu0 %v4583
  %v4792 = vpop.f32.mrb[0].mxu0
  %v4793 = vadd.f32 0.0, %v4792
  %v4794 = vpop.f32.mrb[0].mxu0
  %v4795 = vadd.f32 0.0, %v4794
  %4796 = vmatprep.mubr.f32.mxu0 0.0
  %4797 = vmatmul.mubr.f32.gmra.mrb[0].mxu0 %v4586
  %v4798 = vpop.f32.mrb[0].mxu0
  %v4799 = vadd.f32 0.0, %v4798
  %v4800 = vpop.f32.mrb[0].mxu0
  %v4801 = vadd.f32 0.0, %v4800
  %4802 = vmatprep.mubr.f32.mxu0 0.0
  %4803 = vmatmul.mubr.f32.gmra.mrb[0].mxu0 %v4589
  %v4804 = vpop.f32.mrb[0].mxu0
  %v4805 = vadd.f32 0.0, %v4804
  %v4806 = vpop.f32.mrb[0].mxu0
  %v4807 = vadd.f32 0.0, %v4806
  %4808 = vmatprep.mubr.f32.mxu0 0.0
  %4809 = vmatmul.mubr.f32.gmra.mrb[0].mxu0 %v4592
  %v4810 = vpop.f32.mrb[0].mxu0
  %v4811 = vadd.f32 0.0, %v4810
  %v4812 = vpop.f32.mrb[0].mxu0
  %v4813 = vadd.f32 0.0, %v4812
  %4814 = vmatprep.mubr.f32.mxu0 0.0
  %4815 = vmatmul.mubr.f32.gmra.mrb[0].mxu0 %v4595
  %v4816 = vpop.f32.mrb[0].mxu0
  %v4817 = vadd.f32 0.0, %v4816
  %v4818 = vpop.f32.mrb[0].mxu0
  %v4819 = vadd.f32 0.0, %v4818
  %4820 = vmatprep.mubr.f32.mxu0 0.0
  %4821 = vmatmul.mubr.f32.gmra.mrb[0].mxu0 %v4598
  %v4822 = vpop.f32.mrb[0].mxu0
  %v4823 = vadd.f32 0.0, %v4822
  %v4824 = vpop.f32.mrb[0].mxu0
  %v4825 = vadd.f32 0.0, %v4824
  %4826 = vmatprep.mubr.f32.mxu0 0.0
  %4827 = vmatmul.mubr.f32.gmra.mrb[0].mxu0 %v4601
  %v4828 = vpop.f32.mrb[0].mxu0
  %v4829 = vadd.f32 0.0, %v4828
  %v4830 = vpop.f32.mrb[0].mxu0
  %v4831 = vadd.f32 0.0, %v4830
  %4832 = vmatprep.mubr.f32.mxu0 0.0
  %4833 = vmatmul.mubr.f32.gmra.mrb[0].mxu0 %v4604
  %v4834 = vpop.f32.mrb[0].mxu0
  %v4835 = vadd.f32 0.0, %v4834
  %v4836 = vpop.f32.mrb[0].mxu0
  %v4837 = vadd.f32 0.0, %v4836
  %4838 = vmatprep.mubr.f32.mxu0 0.0
  %4839 = vmatmul.mubr.f32.gmra.mrb[0].mxu0 %v4607
  %v4840 = vpop.f32.mrb[0].mxu0
  %v4841 = vadd.f32 0.0, %v4840
  %v4842 = vpop.f32.mrb[0].mxu0
  %v4843 = vadd.f32 0.0, %v4842
  %4844 = vmatprep.mubr.f32.mxu0 0.0
  %4845 = vmatmul.mubr.f32.gmra.mrb[0].mxu0 %v4610
  %v4846 = vpop.f32.mrb[0].mxu0
  %v4847 = vadd.f32 0.0, %v4846
  %v4848 = vpop.f32.mrb[0].mxu0
  %v4849 = vadd.f32 0.0, %v4848
  %4850 = vmatprep.mubr.f32.mxu0 0.0
  %4851 = vmatmul.mubr.f32.gmra.mrb[0].mxu0 %v4613
  %v4852 = vpop.f32.mrb[0].mxu0
  %v4853 = vadd.f32 0.0, %v4852
  %v4854 = vpop.f32.mrb[0].mxu0
  %v4855 = vadd.f32 0.0, %v4854
  %4856 = vmatprep.mubr.f32.mxu0 0.0
  %4857 = vmatmul.mubr.f32.gmra.mrb[0].mxu0 %v4616
  %v4858 = vpop.f32.mrb[0].mxu0
  %v4859 = vadd.f32 0.0, %v4858
  %v4860 = vpop.f32.mrb[0].mxu0
  %v4861 = vadd.f32 0.0, %v4860
  %4862 = vmatprep.mubr.f32.mxu0 0.0
  %4863 = vmatmul.mubr.f32.gmra.mrb[0].mxu0 %v4619
  %v4864 = vpop.f32.mrb[0].mxu0
  %v4865 = vadd.f32 0.0, %v4864
  %v4866 = vpop.f32.mrb[0].mxu0
  %v4867 = vadd.f32 0.0, %v4866
  %4868 = vmatprep.mubr.f32.mxu0 0.0
  %4869 = vmatmul.mubr.f32.gmra.mrb[0].mxu0 %v4622
  %v4870 = vpop.f32.mrb[0].mxu0
  %v4871 = vadd.f32 0.0, %v4870
  %v4872 = vpop.f32.mrb[0].mxu0
  %v4873 = vadd.f32 0.0, %v4872
  %4874 = vmatprep.mubr.f32.mxu0 0.0
  %4875 = vmatmul.mubr.f32.gmra.mrb[0].mxu0 %v4625
  %v4876 = vpop.f32.mrb[0].mxu0
  %v4877 = vadd.f32 0.0, %v4876
  %v4878 = vpop.f32.mrb[0].mxu0
  %v4879 = vadd.f32 0.0, %v4878
  %4880 = vmatprep.mubr.f32.mxu0 0.0
  %4881 = vmatmul.mubr.f32.gmra.mrb[0].mxu0 %v4628
  %v4882 = vpop.f32.mrb[0].mxu0
  %v4883 = vadd.f32 0.0, %v4882
  %v4884 = vpop.f32.mrb[0].mxu0
  %v4885 = vadd.f32 0.0, %v4884
  %4886 = vdwg.mxu0
  %v4887 = vmul.f32 %v4697, %v220
  %v4888 = vmul.f32 %v4699, %v222
  %v4889 = vmul.f32 %v4703, %v294
  %v4890 = vmul.f32 %v4705, %v296
  %v4891 = vmul.f32 %v4709, %v368
  %v4892 = vmul.f32 %v4711, %v370
  %v4893 = vmul.f32 %v4715, %v442
  %v4894 = vmul.f32 %v4717, %v444
  %v4895 = vmul.f32 %v4721, %v516
  %v4896 = vmul.f32 %v4723, %v518
  %v4897 = vmul.f32 %v4727, %v590
  %v4898 = vmul.f32 %v4729, %v592
  %v4899 = vmul.f32 %v4733, %v664
  %v4900 = vmul.f32 %v4735, %v666
  %v4901 = vmul.f32 %v4739, %v738
  %v4902 = vmul.f32 %v4741, %v740
  %v4903 = vmul.f32 %v4745, %v812
  %v4904 = vmul.f32 %v4747, %v814
  %v4905 = vmul.f32 %v4751, %v886
  %v4906 = vmul.f32 %v4753, %v888
  %v4907 = vmul.f32 %v4757, %v960
  %v4908 = vmul.f32 %v4759, %v962
  %v4909 = vmul.f32 %v4763, %v1034
  %v4910 = vmul.f32 %v4765, %v1036
  %v4911 = vmul.f32 %v4769, %v1108
  %v4912 = vmul.f32 %v4771, %v1110
  %v4913 = vmul.f32 %v4775, %v1182
  %v4914 = vmul.f32 %v4777, %v1184
  %v4915 = vmul.f32 %v4781, %v1256
  %v4916 = vmul.f32 %v4783, %v1258
  %v4917 = vmul.f32 %v4787, %v1330
  %v4918 = vmul.f32 %v4789, %v1332
  %v4919 = vmul.f32 %v4793, %v1404
  %v4920 = vmul.f32 %v4795, %v1406
  %v4921 = vmul.f32 %v4799, %v1478
  %v4922 = vmul.f32 %v4801, %v1480
  %v4923 = vmul.f32 %v4805, %v1552
  %v4924 = vmul.f32 %v4807, %v1554
  %v4925 = vmul.f32 %v4811, %v1626
  %v4926 = vmul.f32 %v4813, %v1628
  %v4927 = vmul.f32 %v4817, %v1700
  %v4928 = vmul.f32 %v4819, %v1702
  %v4929 = vmul.f32 %v4823, %v1774
  %v4930 = vmul.f32 %v4825, %v1776
  %v4931 = vmul.f32 %v4829, %v1848
  %v4932 = vmul.f32 %v4831, %v1850
  %v4933 = vmul.f32 %v4835, %v1922
  %v4934 = vmul.f32 %v4837, %v1924
  %v4935 = vmul.f32 %v4841, %v1996
  %v4936 = vmul.f32 %v4843, %v1998
  %v4937 = vmul.f32 %v4847, %v2070
  %v4938 = vmul.f32 %v4849, %v2072
  %v4939 = vmul.f32 %v4853, %v2144
  %v4940 = vmul.f32 %v4855, %v2146
  %v4941 = vmul.f32 %v4859, %v2218
  %v4942 = vmul.f32 %v4861, %v2220
  %v4943 = vmul.f32 %v4865, %v2292
  %v4944 = vmul.f32 %v4867, %v2294
  %v4945 = vmul.f32 %v4871, %v2366
  %v4946 = vmul.f32 %v4873, %v2368
  %v4947 = vmul.f32 %v4877, %v2440
  %v4948 = vmul.f32 %v4879, %v2442
  %v4949 = vmul.f32 %v4883, %v2514
  %v4950 = vmul.f32 %v4885, %v2516
  %v4951 = vadd.f32 %v4887, %v4889
  %v4952 = vadd.f32 %v4951, %v4891
  %v4953 = vadd.f32 %v4952, %v4893
  %v4954 = vadd.f32 %v4953, %v4895
  %v4955 = vadd.f32 %v4954, %v4897
  %v4956 = vadd.f32 %v4955, %v4899
  %v4957 = vadd.f32 %v4956, %v4901
  %v4958 = vadd.f32 %v4957, %v4903
  %v4959 = vadd.f32 %v4958, %v4905
  %v4960 = vadd.f32 %v4959, %v4907
  %v4961 = vadd.f32 %v4960, %v4909
  %v4962 = vadd.f32 %v4961, %v4911
  %v4963 = vadd.f32 %v4962, %v4913
  %v4964 = vadd.f32 %v4963, %v4915
  %v4965 = vadd.f32 %v4964, %v4917
  %v4966 = vadd.f32 %v4965, %v4919
  %v4967 = vadd.f32 %v4966, %v4921
  %v4968 = vadd.f32 %v4967, %v4923
  %v4969 = vadd.f32 %v4968, %v4925
  %v4970 = vadd.f32 %v4969, %v4927
  %v4971 = vadd.f32 %v4970, %v4929
  %v4972 = vadd.f32 %v4971, %v4931
  %v4973 = vadd.f32 %v4972, %v4933
  %v4974 = vadd.f32 %v4973, %v4935
  %v4975 = vadd.f32 %v4974, %v4937
  %v4976 = vadd.f32 %v4975, %v4939
  %v4977 = vadd.f32 %v4976, %v4941
  %v4978 = vadd.f32 %v4977, %v4943
  %v4979 = vadd.f32 %v4978, %v4945
  %v4980 = vadd.f32 %v4979, %v4947
  %v4981 = vadd.f32 %v4980, %v4949
  %v4982 = vadd.f32 %v4888, %v4890
  %v4983 = vadd.f32 %v4982, %v4892
  %v4984 = vadd.f32 %v4983, %v4894
  %v4985 = vadd.f32 %v4984, %v4896
  %v4986 = vadd.f32 %v4985, %v4898
  %v4987 = vadd.f32 %v4986, %v4900
  %v4988 = vadd.f32 %v4987, %v4902
  %v4989 = vadd.f32 %v4988, %v4904
  %v4990 = vadd.f32 %v4989, %v4906
  %v4991 = vadd.f32 %v4990, %v4908
  %v4992 = vadd.f32 %v4991, %v4910
  %v4993 = vadd.f32 %v4992, %v4912
  %v4994 = vadd.f32 %v4993, %v4914
  %v4995 = vadd.f32 %v4994, %v4916
  %v4996 = vadd.f32 %v4995, %v4918
  %v4997 = vadd.f32 %v4996, %v4920
  %v4998 = vadd.f32 %v4997, %v4922
  %v4999 = vadd.f32 %v4998, %v4924
  %v5000 = vadd.f32 %v4999, %v4926
  %v5001 = vadd.f32 %v5000, %v4928
  %v5002 = vadd.f32 %v5001, %v4930
  %v5003 = vadd.f32 %v5002, %v4932
  %v5004 = vadd.f32 %v5003, %v4934
  %v5005 = vadd.f32 %v5004, %v4936
  %v5006 = vadd.f32 %v5005, %v4938
  %v5007 = vadd.f32 %v5006, %v4940
  %v5008 = vadd.f32 %v5007, %v4942
  %v5009 = vadd.f32 %v5008, %v4944
  %v5010 = vadd.f32 %v5009, %v4946
  %v5011 = vadd.f32 %v5010, %v4948
  %v5012 = vadd.f32 %v5011, %v4950
  %v5013 = vmul.f32 %v4981, %v4981
  %v5014 = vmul.f32 %v5012, %v5012
  %5015 = vmatprep.subr.mxu0 0.0
  %5016 = vmatpush1.msra.mxu0 %v113
  %5017 = vmatprep.subr.mxu0 0.0
  %5018 = vmatpush1.msra.mxu0 %v114
  %5019 = vmatprep.subr.mxu0 0.0
  %5020 = vmatpush1.msra.mxu0 %v115
  %5021 = vmatprep.subr.mxu0 0.0
  %5022 = vmatpush1.msra.mxu0 %v116
  %5023 = vmatprep.subr.mxu0 0.0
  %5024 = vmatpush1.msra.mxu0 %v117
  %5025 = vmatprep.subr.mxu0 0.0
  %5026 = vmatpush1.msra.mxu0 %v118
  %5027 = vmatprep.subr.mxu0 0.0
  %5028 = vmatpush1.msra.mxu0 %v119
  %5029 = vmatprep.subr.mxu0 0.0
  %5030 = vmatpush1.msra.mxu0 %v120
  %5031 = vmatprep.subr.mxu0 0.0
  %5032 = vmatpush1.msra.mxu0 %v121
  %5033 = vmatprep.subr.mxu0 0.0
  %5034 = vmatpush1.msra.mxu0 %v122
  %5035 = vmatprep.subr.mxu0 0.0
  %5036 = vmatpush1.msra.mxu0 %v123
  %5037 = vmatprep.subr.mxu0 0.0
  %5038 = vmatpush1.msra.mxu0 %v124
  %5039 = vmatprep.subr.mxu0 0.0
  %5040 = vmatpush1.msra.mxu0 %v125
  %5041 = vmatprep.subr.mxu0 0.0
  %5042 = vmatpush1.msra.mxu0 %v126
  %5043 = vmatprep.subr.mxu0 0.0
  %5044 = vmatpush1.msra.mxu0 %v127
  %5045 = vmatprep.subr.mxu0 0.0
  %5046 = vmatpush1.msra.mxu0 %v128
  %5047 = vmatprep.subr.mxu0 0.0
  %5048 = vmatpush1.msra.mxu0 %v129
  %5049 = vmatprep.subr.mxu0 0.0
  %5050 = vmatpush1.msra.mxu0 %v130
  %5051 = vmatprep.subr.mxu0 0.0
  %5052 = vmatpush1.msra.mxu0 %v131
  %5053 = vmatprep.subr.mxu0 0.0
  %5054 = vmatpush1.msra.mxu0 %v132
  %5055 = vmatprep.subr.mxu0 0.0
  %5056 = vmatpush1.msra.mxu0 %v133
  %5057 = vmatprep.subr.mxu0 0.0
  %5058 = vmatpush1.msra.mxu0 %v134
  %5059 = vmatprep.subr.mxu0 0.0
  %5060 = vmatpush1.msra.mxu0 %v135
  %5061 = vmatprep.subr.mxu0 0.0
  %5062 = vmatpush1.msra.mxu0 %v136
  %5063 = vmatprep.subr.mxu0 0.0
  %5064 = vmatpush1.msra.mxu0 %v137
  %5065 = vmatprep.subr.mxu0 0.0
  %5066 = vmatpush1.msra.mxu0 %v138
  %5067 = vmatprep.subr.mxu0 0.0
  %5068 = vmatpush1.msra.mxu0 %v139
  %5069 = vmatprep.subr.mxu0 0.0
  %5070 = vmatpush1.msra.mxu0 %v140
  %5071 = vmatprep.subr.mxu0 0.0
  %5072 = vmatpush1.msra.mxu0 %v141
  %5073 = vmatprep.subr.mxu0 0.0
  %5074 = vmatpush1.msra.mxu0 %v142
  %5075 = vmatprep.subr.mxu0 0.0
  %5076 = vmatpush1.msra.mxu0 %v143
  %5077 = vmatprep.subr.mxu0 0.0
  %5078 = vmatpush1.msra.mxu0 %v144
  %5079 = vmatprep.mubr.f32.mxu0 %v5014
  %5080 = vmatmul.mubr.f32.gmra.mrb[0].mxu0 %v5013
  %v5081 = vpop.f32.mrb[0].mxu0
  %v5082 = vadd.f32 0.0, %v5081
  %v5083 = vpop.f32.mrb[0].mxu0
  %5084 = vdwg.mxu0
  %v5086 = vsel %vm2654, %v5082, 0
  %5088 = vmatprep.subr.mxu0 %v146
  %5089 = vmatpush1.msra.mxu0 %v145
  %5090 = vmatprep.subr.mxu0 %v148
  %5091 = vmatpush1.msra.mxu0 %v147
  %5092 = vmatprep.subr.mxu0 0.0
  %5093 = vmatpush1.msra.mxu0 0.0
  %5094 = vmatprep.subr.mxu0 0.0
  %5095 = vmatpush1.msra.mxu0 0.0
  %5096 = vmatprep.subr.mxu0 0.0
  %5097 = vmatpush1.msra.mxu0 0.0
  %5098 = vmatprep.subr.mxu0 0.0
  %5099 = vmatpush1.msra.mxu0 0.0
  %5100 = vmatprep.subr.mxu0 0.0
  %5101 = vmatpush1.msra.mxu0 0.0
  %5102 = vmatprep.subr.mxu0 0.0
  %5103 = vmatpush1.msra.mxu0 0.0
  %5104 = vmatprep.subr.mxu0 0.0
  %5105 = vmatpush1.msra.mxu0 0.0
  %5106 = vmatprep.subr.mxu0 0.0
  %5107 = vmatpush1.msra.mxu0 0.0
  %5108 = vmatprep.subr.mxu0 0.0
  %5109 = vmatpush1.msra.mxu0 0.0
  %5110 = vmatprep.subr.mxu0 0.0
  %5111 = vmatpush1.msra.mxu0 0.0
  %5112 = vmatprep.subr.mxu0 0.0
  %5113 = vmatpush1.msra.mxu0 0.0
  %5114 = vmatprep.subr.mxu0 0.0
  %5115 = vmatpush1.msra.mxu0 0.0
  %5116 = vmatprep.subr.mxu0 0.0
  %5117 = vmatpush1.msra.mxu0 0.0
  %5118 = vmatprep.subr.mxu0 0.0
  %5119 = vmatpush1.msra.mxu0 0.0
  %5120 = vmatprep.subr.mxu0 0.0
  %5121 = vmatpush1.msra.mxu0 0.0
  %5122 = vmatprep.subr.mxu0 0.0
  %5123 = vmatpush1.msra.mxu0 0.0
  %5124 = vmatprep.subr.mxu0 0.0
  %5125 = vmatpush1.msra.mxu0 0.0
  %5126 = vmatprep.subr.mxu0 0.0
  %5127 = vmatpush1.msra.mxu0 0.0
  %5128 = vmatprep.subr.mxu0 0.0
  %5129 = vmatpush1.msra.mxu0 0.0
  %5130 = vmatprep.subr.mxu0 0.0
  %5131 = vmatpush1.msra.mxu0 0.0
  %5132 = vmatprep.subr.mxu0 0.0
  %5133 = vmatpush1.msra.mxu0 0.0
  %5134 = vmatprep.subr.mxu0 0.0
  %5135 = vmatpush1.msra.mxu0 0.0
  %5136 = vmatprep.subr.mxu0 0.0
  %5137 = vmatpush1.msra.mxu0 0.0
  %5138 = vmatprep.subr.mxu0 0.0
  %5139 = vmatpush1.msra.mxu0 0.0
  %5140 = vmatprep.subr.mxu0 0.0
  %5141 = vmatpush1.msra.mxu0 0.0
  %5142 = vmatprep.subr.mxu0 0.0
  %5143 = vmatpush1.msra.mxu0 0.0
  %5144 = vmatprep.subr.mxu0 0.0
  %5145 = vmatpush1.msra.mxu0 0.0
  %5146 = vmatprep.subr.mxu0 0.0
  %5147 = vmatpush1.msra.mxu0 0.0
  %5148 = vmatprep.subr.mxu0 0.0
  %5149 = vmatpush1.msra.mxu0 0.0
  %5150 = vmatprep.subr.mxu0 0.0
  %5151 = vmatpush1.msra.mxu0 0.0
  %5152 = vmatprep.mubr.f32.mxu0 0.0
  %5153 = vmatmul.mubr.f32.gmra.mrb[0].mxu0 %v5086
  %v5154 = vpop.f32.mrb[0].mxu0
  %v5155 = vadd.f32 0.0, %v5154
  %v5156 = vpop.f32.mrb[0].mxu0
  %v5157 = vadd.f32 0.0, %v5156
  %5158 = vdwg.mxu0
  %v5159 = vadd.f32 %v5155, 1.0
  %v5160 = vadd.f32 %v5157, 1.0
  %v5161 = vrcp.pop %v5159
  %v5162 = vrcp.pop %v5160
  %v5163 = vmul.f32 %v5155, %v5161
  %v5164 = vmul.f32 %v5157, %v5162
  %v5165 = vmul.f32 %v4981, %v5163
  %v5166 = vmul.f32 %v5012, %v5164
  %v5167 = vadd.f32 %v5155, 1e-12
  %v5168 = vadd.f32 %v5157, 1e-12
  %v5169 = vrsqrt.pop %v5167
  %v5170 = vrsqrt.pop %v5168
  %v5171 = vmul.f32 %v5165, %v5169
  %v5172 = vmul.f32 %v5166, %v5170
  %5173 = vst [vmem:[%s4] sm:$0xff] %v5171
  %5174 = vst [vmem:[%s4 + $0x8] sm:$0xff] %v5172
  // Predicated region
  $region18: #{digit_capsules_forward.1} parent=0 // pred_check
    _
  $region19: #{digit_capsules_forward.1} parent=0 // pred_check_branch
    %5176 = sbr.rel (0) target = $region21
  $region20: #{digit_capsules_forward.1} parent=0 // pred_region
    _
  $region21: #{digit_capsules_forward.1} parent=0 // pred_fallthru
    _
  // Predicated region
  $region22: #{digit_capsules_forward.1} parent=0 // pred_check
    _
  $region23: #{digit_capsules_forward.1} parent=0 // pred_check_branch
    %5178 = sbr.rel (0) target = $region25
  $region24: #{digit_capsules_forward.1} parent=0 // pred_region
    _
  $region25: #{digit_capsules_forward.1} parent=0 // pred_fallthru
    _

</llo_original>
